<compile_context>
chip_gen: v6e
topology: v6e:2x2x1
jax: 0.10.0
libtpu: 0.0.40
codegen_flags: <defaults>
</compile_context>

<pallas_src>
import functools

import jax
import jax.numpy as jnp
from jax import lax
from jax.experimental import pallas as pl
from jax.experimental.pallas import tpu as pltpu


def _pixel_shuffle3d_kernel(x_ref, o_ref, *, r0, r1, r2, Cb, Db, H, W):
    # x_ref: (1, Cb*R, Db, H, W)            -- R = r0*r1*r2 input channels per out channel
    # o_ref: (1, Cb, Db*r0, H, r1*W*r2)     -- lane-dense free view of the NCDHW output
    R = r0 * r1 * r2
    L = r1 * W * r2

    def per_channel(ci, carry):
        ch0 = ci * R
        planes = []
        for a in range(r0):                       # r0 is small: static loop
            segs = []
            for bb in range(r1):                  # r1 is small: static loop
                base = ch0 + a * (r1 * r2) + bb * r2
                if r2 == 1:
                    seg = x_ref[0, base]          # (Db, H, W)
                else:
                    # The only genuine lane interleave: ow = w*r2 + cc.
                    chunks = [x_ref[0, base + cc] for cc in range(r2)]  # (Db, H, W) each
                    seg = jnp.stack(chunks, axis=-1).reshape(Db, H, W * r2)
                segs.append(seg)
            # r1 placement is just a lane-offset concat (coarse W*r2 blocks).
            row = segs[0] if r1 == 1 else jnp.concatenate(segs, axis=-1)  # (Db, H, L)
            planes.append(row)
        # r0 placement is pure major-axis indexing: (Db, r0, H, L) -> (Db*r0, H, L)
        # is a free leading-dim merge (od = d*r0 + a), no relayout.
        if r0 == 1:
            out_c = planes[0]
        else:
            out_c = jnp.stack(planes, axis=1).reshape(Db * r0, H, L)
        o_ref[0, ci] = out_c
        return carry

    if Cb == 1:
        per_channel(0, 0)
    else:
        # Chunk over output channels so only one channel's interleave
        # intermediates are live at a time.
        lax.fori_loop(0, Cb, per_channel, 0, unroll=(Cb <= 8))


def _vmem_capacity_bytes():
    try:
        cap = int(pltpu.get_tpu_info().vmem_capacity_bytes)
        if cap > 0:
            return cap
    except Exception:
        pass
    return 128 * 1024 * 1024  # v5e/v6e default


def _choose_blocks(B, C, D, H, W, r0, r1, r2, itemsize, capacity):
    """Pick (Cb, Db, vmem_limit_bytes) from a padding-aware footprint model."""
    R = r0 * r1 * r2
    L = r1 * W * r2
    sub = max(8, 32 // itemsize)                      # 8 (f32) / 16 (bf16) / 32 (int8)

    def rup(x, m):
        return -(-x // m) * m

    def pad2(rows, cols):                             # padded elems of one (rows, cols) slab
        return rup(max(rows, 1), sub) * rup(max(cols, 1), 128)

    in_slab = pad2(H, W)                              # per (input channel, d)
    out_slab = pad2(H, L)                             # per (output channel, od)
    seg_slab = pad2(H, W * r2)                        # one bb-segment
    stack_slab = pad2(W, r2) * H                      # worst-case (H, W, r2) stack intermediate

    def footprint(cb, db):
        in_blk = cb * R * db * in_slab
        out_blk = cb * db * r0 * out_slab
        interm = db * (r1 * seg_slab + stack_slab + 2 * r0 * out_slab)  # one channel live
        return (2 * (in_blk + out_blk) + interm) * itemsize             # 2x: double buffering

    budget = int(0.45 * capacity)                     # ~29 MiB on v7x, ~57 MiB on v5e/v6e
    target_steps = min(8, B * C * D)

    def divisors(n):
        return [k for k in range(1, n + 1) if n % k == 0]

    best = None
    for cb in divisors(C):
        for db in divisors(D):
            fp = footprint(cb, db)
            if fp > budget:
                continue
            steps = B * (C // cb) * (D // db)
            key = (
                steps >= target_steps,                        # enough steps to pipeline
                steps % 2 == 0 or steps == B * C * D,         # even split for 2-TC megacore
                cb * db,                                      # then: biggest block
                db,                                           # then: longest contiguous HBM runs
            )
            if best is None or key > best[0]:
                best = (key, cb, db, fp)

    if best is None:          # nothing fits the budget: fall back to minimal blocks
        cb, db = 1, 1
        fp = footprint(1, 1)
    else:
        _, cb, db, fp = best

    limit = int(min(0.8 * capacity, max(32 << 20, 1.5 * fp + (2 << 20))))
    limit = max(limit, int(fp) + (1 << 20))           # never below the modeled footprint
    return cb, db, limit


def pixel_upsampler_3d(x, upscale_factor):
    """3D pixel shuffle: (B, C*r0*r1*r2, D, H, W) -> (B, C, D*r0, H*r1, W*r2)."""
    r0, r1, r2 = (int(v) for v in upscale_factor)
    B, C_in, D, H, W = x.shape
    R = r0 * r1 * r2
    assert C_in % R == 0, "channels must be divisible by prod(upscale_factor)"
    C = C_in // R
    oD, oH, oW = D * r0, H * r1, W * r2
    if R == 1:
        return x

    itemsize = jnp.dtype(x.dtype).itemsize
    capacity = _vmem_capacity_bytes()
    Cb, Db, vmem_limit = _choose_blocks(B, C, D, H, W, r0, r1, r2, itemsize, capacity)
    L = r1 * W * r2

    kernel = functools.partial(
        _pixel_shuffle3d_kernel, r0=r0, r1=r1, r2=r2, Cb=Cb, Db=Db, H=H, W=W
    )

    # Output is produced in the free view (B, C, oD, H, r1*W*r2); reshaping it
    # back to NCDHW below is metadata-only (contiguous, same element order).
    out5 = pl.pallas_call(
        kernel,
        out_shape=jax.ShapeDtypeStruct((B, C, oD, H, L), x.dtype),
        grid_spec=pltpu.PrefetchScalarGridSpec(
            num_scalar_prefetch=0,
            grid=(B, C // Cb, D // Db),
            in_specs=[
                pl.BlockSpec((1, Cb * R, Db, H, W), lambda b, c, d: (b, c, d, 0, 0)),
            ],
            out_specs=pl.BlockSpec((1, Cb, Db * r0, H, L), lambda b, c, d: (b, c, d, 0, 0)),
        ),
        compiler_params=pltpu.CompilerParams(
            dimension_semantics=("parallel", "parallel", "parallel"),
            vmem_limit_bytes=vmem_limit,
        ),
        cost_estimate=pl.CostEstimate(
            flops=0,
            transcendentals=0,
            bytes_accessed=2 * x.size * itemsize,
        ),
    )(x)

    return out5.reshape(B, C, oD, oH, oW)


def _reference_pixel_shuffle3d(x, upscale_factor):
    # Pure-JAX reference mirroring the PyTorch view/permute/view.
    r0, r1, r2 = upscale_factor
    B, C_in, D, H, W = x.shape
    C = C_in // (r0 * r1 * r2)
    v = x.reshape(B, C, r0, r1, r2, D, H, W)
    v = jnp.transpose(v, (0, 1, 5, 2, 6, 3, 7, 4))
    return v.reshape(B, C, D * r0, H * r1, W * r2)


if __name__ == "__main__":
    upscale = (2, 2, 2)
    B, C = 2, 4
    D, H, W = 4, 8, 8
    C_in = C * upscale[0] * upscale[1] * upscale[2]  # 32

    key = jax.random.PRNGKey(0)
    x = jax.random.normal(key, (B, C_in, D, H, W), dtype=jnp.float32)

    out = pixel_upsampler_3d(x, upscale)
    out = jax.block_until_ready(out)

    ref = _reference_pixel_shuffle3d(x, upscale)
    assert out.shape == (B, C, D * 2, H * 2, W * 2)
    assert bool(jnp.allclose(out, ref)), "mismatch vs reference pixel shuffle"

    print("KERNEL_OK")
</pallas_src>

<mosaic_0001>
module attributes {stable_mosaic.version = 11 : i64} {
  func.func @_pixel_shuffle3d_kernel(%arg0: i32, %arg1: i32, %arg2: i32, %arg3: memref<1x8x4x8x8xf32, #tpu.memory_space<vmem>>, %arg4: memref<1x1x8x8x32xf32, #tpu.memory_space<vmem>>) attributes {dimension_semantics = [#tpu.dimension_semantics<parallel>, #tpu.dimension_semantics<parallel>, #tpu.dimension_semantics<parallel>], iteration_bounds = array<i64: 2, 4, 1>, scalar_prefetch = 0 : i64, scratch_operands = 0 : i64, tpu.core_type = #tpu.core_type<tc>, window_params = [{transform_indices = @transform_0, window_bounds = array<i64: 1, 8, 4, 8, 8>}, {transform_indices = @transform_1, window_bounds = array<i64: 1, 1, 8, 8, 32>}]} {
    %c0 = arith.constant 0 : index
    %c0_0 = arith.constant 0 : index
    %c0_1 = arith.constant 0 : index
    %c0_2 = arith.constant 0 : index
    %c0_3 = arith.constant 0 : index
    %0 = vector.load %arg3[%c0, %c0_0, %c0_1, %c0_2, %c0_3] : memref<1x8x4x8x8xf32, #tpu.memory_space<vmem>>, vector<1x1x4x8x8xf32>
    %1 = vector.shape_cast %0 : vector<1x1x4x8x8xf32> to vector<4x8x8xf32>
    %c0_4 = arith.constant 0 : index
    %c1 = arith.constant 1 : index
    %c0_5 = arith.constant 0 : index
    %c0_6 = arith.constant 0 : index
    %c0_7 = arith.constant 0 : index
    %2 = vector.load %arg3[%c0_4, %c1, %c0_5, %c0_6, %c0_7] : memref<1x8x4x8x8xf32, #tpu.memory_space<vmem>>, vector<1x1x4x8x8xf32>
    %3 = vector.shape_cast %2 : vector<1x1x4x8x8xf32> to vector<4x8x8xf32>
    %4 = vector.shape_cast %1 : vector<4x8x8xf32> to vector<4x8x8x1xf32>
    %5 = vector.shape_cast %3 : vector<4x8x8xf32> to vector<4x8x8x1xf32>
    %6 = tpu.concatenate %4, %5 in 3 : vector<4x8x8x1xf32>, vector<4x8x8x1xf32> -> vector<4x8x8x2xf32>
    %7 = vector.shape_cast %6 : vector<4x8x8x2xf32> to vector<4x8x16xf32>
    %c0_8 = arith.constant 0 : index
    %c2 = arith.constant 2 : index
    %c0_9 = arith.constant 0 : index
    %c0_10 = arith.constant 0 : index
    %c0_11 = arith.constant 0 : index
    %8 = vector.load %arg3[%c0_8, %c2, %c0_9, %c0_10, %c0_11] : memref<1x8x4x8x8xf32, #tpu.memory_space<vmem>>, vector<1x1x4x8x8xf32>
    %9 = vector.shape_cast %8 : vector<1x1x4x8x8xf32> to vector<4x8x8xf32>
    %c0_12 = arith.constant 0 : index
    %c3 = arith.constant 3 : index
    %c0_13 = arith.constant 0 : index
    %c0_14 = arith.constant 0 : index
    %c0_15 = arith.constant 0 : index
    %10 = vector.load %arg3[%c0_12, %c3, %c0_13, %c0_14, %c0_15] : memref<1x8x4x8x8xf32, #tpu.memory_space<vmem>>, vector<1x1x4x8x8xf32>
    %11 = vector.shape_cast %10 : vector<1x1x4x8x8xf32> to vector<4x8x8xf32>
    %12 = vector.shape_cast %9 : vector<4x8x8xf32> to vector<4x8x8x1xf32>
    %13 = vector.shape_cast %11 : vector<4x8x8xf32> to vector<4x8x8x1xf32>
    %14 = tpu.concatenate %12, %13 in 3 : vector<4x8x8x1xf32>, vector<4x8x8x1xf32> -> vector<4x8x8x2xf32>
    %15 = vector.shape_cast %14 : vector<4x8x8x2xf32> to vector<4x8x16xf32>
    %16 = tpu.concatenate %7, %15 in 2 : vector<4x8x16xf32>, vector<4x8x16xf32> -> vector<4x8x32xf32>
    %c0_16 = arith.constant 0 : index
    %c4 = arith.constant 4 : index
    %c0_17 = arith.constant 0 : index
    %c0_18 = arith.constant 0 : index
    %c0_19 = arith.constant 0 : index
    %17 = vector.load %arg3[%c0_16, %c4, %c0_17, %c0_18, %c0_19] : memref<1x8x4x8x8xf32, #tpu.memory_space<vmem>>, vector<1x1x4x8x8xf32>
    %18 = vector.shape_cast %17 : vector<1x1x4x8x8xf32> to vector<4x8x8xf32>
    %c0_20 = arith.constant 0 : index
    %c5 = arith.constant 5 : index
    %c0_21 = arith.constant 0 : index
    %c0_22 = arith.constant 0 : index
    %c0_23 = arith.constant 0 : index
    %19 = vector.load %arg3[%c0_20, %c5, %c0_21, %c0_22, %c0_23] : memref<1x8x4x8x8xf32, #tpu.memory_space<vmem>>, vector<1x1x4x8x8xf32>
    %20 = vector.shape_cast %19 : vector<1x1x4x8x8xf32> to vector<4x8x8xf32>
    %21 = vector.shape_cast %18 : vector<4x8x8xf32> to vector<4x8x8x1xf32>
    %22 = vector.shape_cast %20 : vector<4x8x8xf32> to vector<4x8x8x1xf32>
    %23 = tpu.concatenate %21, %22 in 3 : vector<4x8x8x1xf32>, vector<4x8x8x1xf32> -> vector<4x8x8x2xf32>
    %24 = vector.shape_cast %23 : vector<4x8x8x2xf32> to vector<4x8x16xf32>
    %c0_24 = arith.constant 0 : index
    %c6 = arith.constant 6 : index
    %c0_25 = arith.constant 0 : index
    %c0_26 = arith.constant 0 : index
    %c0_27 = arith.constant 0 : index
    %25 = vector.load %arg3[%c0_24, %c6, %c0_25, %c0_26, %c0_27] : memref<1x8x4x8x8xf32, #tpu.memory_space<vmem>>, vector<1x1x4x8x8xf32>
    %26 = vector.shape_cast %25 : vector<1x1x4x8x8xf32> to vector<4x8x8xf32>
    %c0_28 = arith.constant 0 : index
    %c7 = arith.constant 7 : index
    %c0_29 = arith.constant 0 : index
    %c0_30 = arith.constant 0 : index
    %c0_31 = arith.constant 0 : index
    %27 = vector.load %arg3[%c0_28, %c7, %c0_29, %c0_30, %c0_31] : memref<1x8x4x8x8xf32, #tpu.memory_space<vmem>>, vector<1x1x4x8x8xf32>
    %28 = vector.shape_cast %27 : vector<1x1x4x8x8xf32> to vector<4x8x8xf32>
    %29 = vector.shape_cast %26 : vector<4x8x8xf32> to vector<4x8x8x1xf32>
    %30 = vector.shape_cast %28 : vector<4x8x8xf32> to vector<4x8x8x1xf32>
    %31 = tpu.concatenate %29, %30 in 3 : vector<4x8x8x1xf32>, vector<4x8x8x1xf32> -> vector<4x8x8x2xf32>
    %32 = vector.shape_cast %31 : vector<4x8x8x2xf32> to vector<4x8x16xf32>
    %33 = tpu.concatenate %24, %32 in 2 : vector<4x8x16xf32>, vector<4x8x16xf32> -> vector<4x8x32xf32>
    %34 = vector.shape_cast %16 : vector<4x8x32xf32> to vector<4x1x8x32xf32>
    %35 = vector.shape_cast %33 : vector<4x8x32xf32> to vector<4x1x8x32xf32>
    %36 = tpu.concatenate %34, %35 in 1 : vector<4x1x8x32xf32>, vector<4x1x8x32xf32> -> vector<4x2x8x32xf32>
    %37 = vector.shape_cast %36 : vector<4x2x8x32xf32> to vector<8x8x32xf32>
    %c0_32 = arith.constant 0 : index
    %c0_33 = arith.constant 0 : index
    %c0_34 = arith.constant 0 : index
    %c0_35 = arith.constant 0 : index
    %c0_36 = arith.constant 0 : index
    %38 = vector.load %arg4[%c0_32, %c0_33, %c0_34, %c0_35, %c0_36] : memref<1x1x8x8x32xf32, #tpu.memory_space<vmem>>, vector<1x1x8x8x32xf32>
    %39 = vector.shape_cast %38 : vector<1x1x8x8x32xf32> to vector<8x8x32xf32>
    %40 = vector.shape_cast %37 : vector<8x8x32xf32> to vector<1x1x8x8x32xf32>
    tpu.vector_store %arg4[%c0_32, %c0_33, %c0_34, %c0_35, %c0_36], %40 {strides = array<i32>} : memref<1x1x8x8x32xf32, #tpu.memory_space<vmem>>, vector<1x1x8x8x32xf32>,
    return
  }
  func.func @transform_0(%arg0: i32, %arg1: i32, %arg2: i32) -> (i32, i32, i32, i32, i32) {
    %c0_i32 = arith.constant 0 : i32
    %c0_i32_0 = arith.constant 0 : i32
    %c0_i32_1 = arith.constant 0 : i32
    return %arg0, %arg1, %arg2, %c0_i32, %c0_i32_0 : i32, i32, i32, i32, i32
  }
  func.func @transform_1(%arg0: i32, %arg1: i32, %arg2: i32) -> (i32, i32, i32, i32, i32) {
    %c0_i32 = arith.constant 0 : i32
    %c0_i32_0 = arith.constant 0 : i32
    %c0_i32_1 = arith.constant 0 : i32
    return %arg0, %arg1, %arg2, %c0_i32, %c0_i32_0 : i32, i32, i32, i32, i32
  }
}

</mosaic_0001>

<llo_original>
// kernel: tpu_custom_call.1
$region0: #{tpu_custom_call.1}
  #allocation0 [shape = 'u32[]', space=smem, size = 0x4, offset = 0x4, fixed_abs, tag = 'smem constant byte address 0x4 - core index']
  #allocation1 [shape = 'u32[144,128]{1,0:T(1,128)}', space=vmem, size = 0x12000, scoped, tag = 'internal scratch']
  %s0 = inlined_call_operand.vmem [shape: f32[2,32,4,8,8], index: 0, kind: input, shape index: {}]
  %s1 = inlined_call_operand.hbm [shape: f32[2,4,8,8,32], index: 1, kind: output, shape index: {}]
  %s2 = sld [smem:[#allocation0]]
  $region37: #{tpu_custom_call.1} parent=0
    _
  %s4 = ssub.s32 1, %s2
  %s5 = scalar_select 0, %s4, %s2
  $region1: #{tpu_custom_call.1} parent=0
    #allocation2 [shape = 'u8[65536]{0}', space=vmem, size = 0x10000, scoped, tag = 'output window, operand 0']
    #allocation3 [shape = 's32[2]{0}', space=sflag, size = 0x8, scoped, tag = 'scoped memory for tpu_custom_call.1']
    %6 = vsyncpa [#allocation3], 0
    %s7 = scalar_lea.sflag [#allocation3], 1
    %8 = vsyncpa %s7, 0
    loop: start=0, step=1, limit=10
    $region2: #{tpu_custom_call.1} parent=1 // loop_pre_header
      _
    $region3: #{tpu_custom_call.1} parent=1 // loop_header
      %s10 = sphi 0, %s14
      %p11 = scmp.ge.s32.totalorder %s10, 10
      %s17 = sphi 0, %s36
      %s18 = sphi 0, %s32
      %s19 = sphi 0, %s28
      %s20 = sphi 0, %s17
      %s21 = sphi 0, %s18
      %s22 = sphi 0, %s19
      %s23 = sphi 0, %s20
      %s24 = sphi 0, %s21
      %s25 = sphi 0, %s22
      %s43 = sphi 0, %s45
      %s46 = sphi 0, %s43
      %s47 = sphi 0, %s46
      %s63 = sphi 0, %s47
      %s73 = sphi 0, %s75
      %s76 = sphi 0, %s73
      %s77 = sphi 0, %s76
      %s93 = sphi 0, %s77
    $region4: #{tpu_custom_call.1} parent=1 // loop_header_branch
      %13 = sbr.rel (%p11) target = $region8
    $region5: #{tpu_custom_call.1} parent=1 // loop_body
      %s15 = ssub.s32 %s10, 1
      %s16 = ssub.s32 %s10, 2
      %s26 = sadd.s32 1, %s19
      %p27 = scmp.ge.s32.totalorder %s26, 1
      %s28 = scalar_select %p27, 0, %s26
      %s29 = sadd.s32 1, %s18
      %s30 = scalar_select %p27, %s29, %s18
      %p31 = scmp.ge.s32.totalorder %s30, 4
      %s32 = scalar_select %p31, 0, %s30
      %s33 = sadd.s32 1, %s17
      %s34 = scalar_select %p31, %s33, %s17
      %p35 = scmp.ge.s32.totalorder %s34, 2
      %s36 = scalar_select %p35, 0, %s34
      %s37 = ssub.s32 %s17, %s36
      %s38 = ssub.s32 %s18, %s32
      %s39 = sor.u32 %s37, %s38
      %s40 = ssub.s32 %s19, %s28
      %s41 = sor.u32 %s39, %s40
      %p42 = scmp.eq.s32.totalorder %s41, 0
      %s44 = sadd.s32 %s43, 1
      %s45 = scalar_select %p42, %s43, %s44
      %p48 = pneg %p42
      %p49 = scmp.eq.s32.totalorder %s10, 7
      %p50 = por %p48, %p49
      %p51 = scmp.ne.s32.totalorder %s43, %s46
      %p52 = scmp.eq.s32.totalorder %s10, 0
      %p53 = por %p51, %p52
      %p54 = scmp.ne.s32.totalorder %s43, %s46
      %p55 = scmp.eq.s32.totalorder %s15, 7
      %p56 = por %p54, %p55
      %p57 = scmp.ne.s32.totalorder %s46, %s47
      %p58 = scmp.eq.s32.totalorder %s15, 0
      %p59 = por %p57, %p58
      %p60 = scmp.ne.s32.totalorder %s46, %s47
      %p61 = scmp.eq.s32.totalorder %s16, 7
      %p62 = por %p60, %p61
      %p64 = scmp.ne.s32.totalorder %s47, %s63
      %p65 = scmp.eq.s32.totalorder %s16, 0
      %p66 = por %p64, %p65
      %s67 = ssub.s32 %s17, %s36
      %s68 = ssub.s32 %s18, %s32
      %s69 = sor.u32 %s67, %s68
      %s70 = ssub.s32 %s19, %s28
      %s71 = sor.u32 %s69, %s70
      %p72 = scmp.eq.s32.totalorder %s71, 0
      %s74 = sadd.s32 %s73, 1
      %s75 = scalar_select %p72, %s73, %s74
      %p78 = pneg %p72
      %p79 = scmp.eq.s32.totalorder %s10, 7
      %p80 = por %p78, %p79
      %p81 = scmp.ne.s32.totalorder %s73, %s76
      %p82 = scmp.eq.s32.totalorder %s10, 0
      %p83 = por %p81, %p82
      %p84 = scmp.ne.s32.totalorder %s73, %s76
      %p85 = scmp.eq.s32.totalorder %s15, 7
      %p86 = por %p84, %p85
      %p87 = scmp.ne.s32.totalorder %s76, %s77
      %p88 = scmp.eq.s32.totalorder %s15, 0
      %p89 = por %p87, %p88
      %p90 = scmp.ne.s32.totalorder %s76, %s77
      %p91 = scmp.eq.s32.totalorder %s16, 7
      %p92 = por %p90, %p91
      %p94 = scmp.ne.s32.totalorder %s77, %s93
      %p95 = scmp.eq.s32.totalorder %s16, 0
      %p96 = por %p94, %p95
      %p97 = scmp.le.s32.totalorder 1, %s10
      %p98 = scmp.lt.s32.totalorder %s10, 9
      %p99 = pnand %p97, %p98
      %p100 = pneg %p99
      // Predicated region
      $region9: #{tpu_custom_call.1} parent=5 // pred_check
        _
      $region10: #{tpu_custom_call.1} parent=5 // pred_check_branch
        %102 = sbr.rel (%p99) target = $region12
      $region11: #{tpu_custom_call.1} parent=5 // pred_region
        %s103 = ssub.s32 %s10, 1
      $region12: #{tpu_custom_call.1} parent=5 // pred_fallthru
        _
      %p104 = scmp.lt.s32.totalorder %s10, 8
      // Predicated region
      $region13: #{tpu_custom_call.1} parent=5 // pred_check
        %p105 = pneg %p104
      $region14: #{tpu_custom_call.1} parent=5 // pred_check_branch
        %107 = sbr.rel (%p105) target = $region16
      $region15: #{tpu_custom_call.1} parent=5 // pred_region
        // Predicated region
        $region17: #{tpu_custom_call.1} parent=15 // pred_check
          %p108 = pneg %p53
        $region18: #{tpu_custom_call.1} parent=15 // pred_check_branch
          %110 = sbr.rel (%p108) target = $region20
        $region19: #{tpu_custom_call.1} parent=15 // pred_region
          %s111 = smul.u32 8, %s18
          %s112 = smul.u32 4, %s19
          %p113 = scmp.lt.s32.totalorder %s17, 1
          %s114 = scalar_select %p113, %s17, 1
          %p115 = scmp.lt.s32.totalorder %s111, 31
          %s116 = scalar_select %p115, %s111, 31
          %p117 = scmp.lt.s32.totalorder %s112, 3
          %s118 = scalar_select %p117, %s112, 3
          %s119 = smul.addr %s116, 4
          %s120 = sadd.s32 %s118, %s119
          %s121 = smul.addr %s114, 128
          %s122 = sadd.s32 %s120, %s121
          %s123 = smul.addr %s122, 8
          %s124 = scalar_lea.vmem %s0, %s123
          %s125 = smul.u32 8, %s18
          %s126 = smul.u32 4, %s19
        $region20: #{tpu_custom_call.1} parent=15 // pred_fallthru
          _
      $region16: #{tpu_custom_call.1} parent=5 // pred_fallthru
        _
      %p127 = scmp.le.s32.totalorder 1, %s10
      %p128 = scmp.lt.s32.totalorder %s10, 9
      %p129 = pnand %p127, %p128
      %p130 = pneg %p129
      // Predicated region
      $region21: #{tpu_custom_call.1} parent=5 // pred_check
        _
      $region22: #{tpu_custom_call.1} parent=5 // pred_check_branch
        %132 = sbr.rel (%p129) target = $region24
      $region23: #{tpu_custom_call.1} parent=5 // pred_region
        %s133 = ssub.s32 %s10, 1
        %s134 = smul.u32 8, %s21
        %s135 = smul.u32 4, %s22
        %p136 = scmp.lt.s32.totalorder %s20, 1
        %s137 = scalar_select %p136, %s20, 1
        %p138 = scmp.lt.s32.totalorder %s134, 31
        %s139 = scalar_select %p138, %s134, 31
        %p140 = scmp.lt.s32.totalorder %s135, 3
        %s141 = scalar_select %p140, %s135, 3
        %s142 = smul.addr %s139, 4
        %s143 = sadd.s32 %s141, %s142
        %s144 = smul.addr %s137, 128
        %s145 = sadd.s32 %s143, %s144
        %s146 = smul.addr %s145, 8
        %s147 = scalar_lea.vmem %s0, %s146
        %p148 = pneg %p59
        %p149 = pneg %p56
        %p150 = pneg %p89
        %p151 = pneg %p86
        %s152 = sand.u32 %s76, 1
        %s153 = scalar_lea.sflag [#allocation3], %s152
        %s154 = sand.u32 %s76, 1
        %s155 = smul.addr %s154, 64
        %s156 = scalar_lea.vmem [#allocation2], %s155
        %s157 = smul.u32 8, %s21
        %s158 = smul.u32 4, %s22
        %p159 = scmp.lt.s32.totalorder %s20, 1
        %s160 = scalar_select %p159, %s20, 1
        %p161 = scmp.lt.s32.totalorder %s157, 31
        %s162 = scalar_select %p161, %s157, 31
        %p163 = scmp.lt.s32.totalorder %s158, 3
        %s164 = scalar_select %p163, %s158, 3
        %s165 = smul.addr %s162, 4
        %s166 = sadd.s32 %s164, %s165
        %s167 = smul.addr %s160, 128
        %s168 = sadd.s32 %s166, %s167
        %s169 = smul.addr %s168, 8
        %s170 = scalar_lea.vmem %s0, %s169
        %s171 = smul.u32 8, %s21
        %s172 = smul.u32 4, %s22
        %s173 = smul.u32 8, %s22
        %v174 = vld [vmem:[%s170] sm:$0xff]
        %v175 = vld [vmem:[%s170 + $0x8] sm:$0xff]
        %v176 = vld [vmem:[%s170 + $0x10] sm:$0xff]
        %v177 = vld [vmem:[%s170 + $0x18] sm:$0xff]
        %s178 = scalar_lea.vmem %s170, 32
        %v179 = vld [vmem:[%s178] sm:$0xff]
        %v180 = vld [vmem:[%s178 + $0x8] sm:$0xff]
        %v181 = vld [vmem:[%s178 + $0x10] sm:$0xff]
        %v182 = vld [vmem:[%s178 + $0x18] sm:$0xff]
        %v183 = vlaneseq
        %v184 = vshrl.u32 %v183, 7
        %v185 = vsub.s32 0, %v184
        %v186 = vrot.slane %v174, %v185
        %188 = vbcast.lane.b32.xlu0 %v186, 256
        %v189 = vpop.permute.xlu0 %188
        %v190 = vlaneseq
        %v191 = vshrl.u32 %v190, 7
        %v192 = vsub.s32 1, %v191
        %v193 = vrot.slane %v174, %v192
        %195 = vbcast.lane.b32.xlu0 %v193, 256
        %v196 = vpop.permute.xlu0 %195
        %v197 = vlaneseq
        %v198 = vshrl.u32 %v197, 7
        %v199 = vsub.s32 2, %v198
        %v200 = vrot.slane %v174, %v199
        %202 = vbcast.lane.b32.xlu0 %v200, 256
        %v203 = vpop.permute.xlu0 %202
        %v204 = vlaneseq
        %v205 = vshrl.u32 %v204, 7
        %v206 = vsub.s32 3, %v205
        %v207 = vrot.slane %v174, %v206
        %209 = vbcast.lane.b32.xlu0 %v207, 256
        %v210 = vpop.permute.xlu0 %209
        %v211 = vlaneseq
        %v212 = vshrl.u32 %v211, 7
        %v213 = vsub.s32 4, %v212
        %v214 = vrot.slane %v174, %v213
        %216 = vbcast.lane.b32.xlu0 %v214, 256
        %v217 = vpop.permute.xlu0 %216
        %v218 = vlaneseq
        %v219 = vshrl.u32 %v218, 7
        %v220 = vsub.s32 5, %v219
        %v221 = vrot.slane %v174, %v220
        %223 = vbcast.lane.b32.xlu0 %v221, 256
        %v224 = vpop.permute.xlu0 %223
        %v225 = vlaneseq
        %v226 = vshrl.u32 %v225, 7
        %v227 = vsub.s32 6, %v226
        %v228 = vrot.slane %v174, %v227
        %230 = vbcast.lane.b32.xlu0 %v228, 256
        %v231 = vpop.permute.xlu0 %230
        %v232 = vlaneseq
        %v233 = vshrl.u32 %v232, 7
        %v234 = vsub.s32 7, %v233
        %v235 = vrot.slane %v174, %v234
        %237 = vbcast.lane.b32.xlu0 %v235, 256
        %v238 = vpop.permute.xlu0 %237
        %v239 = vlaneseq
        %v240 = vshrl.u32 %v239, 7
        %v241 = vsub.s32 0, %v240
        %v242 = vrot.slane %v175, %v241
        %244 = vbcast.lane.b32.xlu0 %v242, 256
        %v245 = vpop.permute.xlu0 %244
        %v246 = vlaneseq
        %v247 = vshrl.u32 %v246, 7
        %v248 = vsub.s32 1, %v247
        %v249 = vrot.slane %v175, %v248
        %251 = vbcast.lane.b32.xlu0 %v249, 256
        %v252 = vpop.permute.xlu0 %251
        %v253 = vlaneseq
        %v254 = vshrl.u32 %v253, 7
        %v255 = vsub.s32 2, %v254
        %v256 = vrot.slane %v175, %v255
        %258 = vbcast.lane.b32.xlu0 %v256, 256
        %v259 = vpop.permute.xlu0 %258
        %v260 = vlaneseq
        %v261 = vshrl.u32 %v260, 7
        %v262 = vsub.s32 3, %v261
        %v263 = vrot.slane %v175, %v262
        %265 = vbcast.lane.b32.xlu0 %v263, 256
        %v266 = vpop.permute.xlu0 %265
        %v267 = vlaneseq
        %v268 = vshrl.u32 %v267, 7
        %v269 = vsub.s32 4, %v268
        %v270 = vrot.slane %v175, %v269
        %272 = vbcast.lane.b32.xlu0 %v270, 256
        %v273 = vpop.permute.xlu0 %272
        %v274 = vlaneseq
        %v275 = vshrl.u32 %v274, 7
        %v276 = vsub.s32 5, %v275
        %v277 = vrot.slane %v175, %v276
        %279 = vbcast.lane.b32.xlu0 %v277, 256
        %v280 = vpop.permute.xlu0 %279
        %v281 = vlaneseq
        %v282 = vshrl.u32 %v281, 7
        %v283 = vsub.s32 6, %v282
        %v284 = vrot.slane %v175, %v283
        %286 = vbcast.lane.b32.xlu0 %v284, 256
        %v287 = vpop.permute.xlu0 %286
        %v288 = vlaneseq
        %v289 = vshrl.u32 %v288, 7
        %v290 = vsub.s32 7, %v289
        %v291 = vrot.slane %v175, %v290
        %293 = vbcast.lane.b32.xlu0 %v291, 256
        %v294 = vpop.permute.xlu0 %293
        %v295 = vlaneseq
        %v296 = vshrl.u32 %v295, 7
        %v297 = vsub.s32 0, %v296
        %v298 = vrot.slane %v176, %v297
        %300 = vbcast.lane.b32.xlu0 %v298, 256
        %v301 = vpop.permute.xlu0 %300
        %v302 = vlaneseq
        %v303 = vshrl.u32 %v302, 7
        %v304 = vsub.s32 1, %v303
        %v305 = vrot.slane %v176, %v304
        %307 = vbcast.lane.b32.xlu0 %v305, 256
        %v308 = vpop.permute.xlu0 %307
        %v309 = vlaneseq
        %v310 = vshrl.u32 %v309, 7
        %v311 = vsub.s32 2, %v310
        %v312 = vrot.slane %v176, %v311
        %314 = vbcast.lane.b32.xlu0 %v312, 256
        %v315 = vpop.permute.xlu0 %314
        %v316 = vlaneseq
        %v317 = vshrl.u32 %v316, 7
        %v318 = vsub.s32 3, %v317
        %v319 = vrot.slane %v176, %v318
        %321 = vbcast.lane.b32.xlu0 %v319, 256
        %v322 = vpop.permute.xlu0 %321
        %v323 = vlaneseq
        %v324 = vshrl.u32 %v323, 7
        %v325 = vsub.s32 4, %v324
        %v326 = vrot.slane %v176, %v325
        %328 = vbcast.lane.b32.xlu0 %v326, 256
        %v329 = vpop.permute.xlu0 %328
        %v330 = vlaneseq
        %v331 = vshrl.u32 %v330, 7
        %v332 = vsub.s32 5, %v331
        %v333 = vrot.slane %v176, %v332
        %335 = vbcast.lane.b32.xlu0 %v333, 256
        %v336 = vpop.permute.xlu0 %335
        %v337 = vlaneseq
        %v338 = vshrl.u32 %v337, 7
        %v339 = vsub.s32 6, %v338
        %v340 = vrot.slane %v176, %v339
        %342 = vbcast.lane.b32.xlu0 %v340, 256
        %v343 = vpop.permute.xlu0 %342
        %v344 = vlaneseq
        %v345 = vshrl.u32 %v344, 7
        %v346 = vsub.s32 7, %v345
        %v347 = vrot.slane %v176, %v346
        %349 = vbcast.lane.b32.xlu0 %v347, 256
        %v350 = vpop.permute.xlu0 %349
        %v351 = vlaneseq
        %v352 = vshrl.u32 %v351, 7
        %v353 = vsub.s32 0, %v352
        %v354 = vrot.slane %v177, %v353
        %356 = vbcast.lane.b32.xlu0 %v354, 256
        %v357 = vpop.permute.xlu0 %356
        %v358 = vlaneseq
        %v359 = vshrl.u32 %v358, 7
        %v360 = vsub.s32 1, %v359
        %v361 = vrot.slane %v177, %v360
        %363 = vbcast.lane.b32.xlu0 %v361, 256
        %v364 = vpop.permute.xlu0 %363
        %v365 = vlaneseq
        %v366 = vshrl.u32 %v365, 7
        %v367 = vsub.s32 2, %v366
        %v368 = vrot.slane %v177, %v367
        %370 = vbcast.lane.b32.xlu0 %v368, 256
        %v371 = vpop.permute.xlu0 %370
        %v372 = vlaneseq
        %v373 = vshrl.u32 %v372, 7
        %v374 = vsub.s32 3, %v373
        %v375 = vrot.slane %v177, %v374
        %377 = vbcast.lane.b32.xlu0 %v375, 256
        %v378 = vpop.permute.xlu0 %377
        %v379 = vlaneseq
        %v380 = vshrl.u32 %v379, 7
        %v381 = vsub.s32 4, %v380
        %v382 = vrot.slane %v177, %v381
        %384 = vbcast.lane.b32.xlu0 %v382, 256
        %v385 = vpop.permute.xlu0 %384
        %v386 = vlaneseq
        %v387 = vshrl.u32 %v386, 7
        %v388 = vsub.s32 5, %v387
        %v389 = vrot.slane %v177, %v388
        %391 = vbcast.lane.b32.xlu0 %v389, 256
        %v392 = vpop.permute.xlu0 %391
        %v393 = vlaneseq
        %v394 = vshrl.u32 %v393, 7
        %v395 = vsub.s32 6, %v394
        %v396 = vrot.slane %v177, %v395
        %398 = vbcast.lane.b32.xlu0 %v396, 256
        %v399 = vpop.permute.xlu0 %398
        %v400 = vlaneseq
        %v401 = vshrl.u32 %v400, 7
        %v402 = vsub.s32 7, %v401
        %v403 = vrot.slane %v177, %v402
        %405 = vbcast.lane.b32.xlu0 %v403, 256
        %v406 = vpop.permute.xlu0 %405
        %v407 = vlaneseq
        %v408 = vshrl.u32 %v407, 7
        %v409 = vsub.s32 0, %v408
        %v410 = vrot.slane %v179, %v409
        %412 = vbcast.lane.b32.xlu0 %v410, 256
        %v413 = vpop.permute.xlu0 %412
        %v414 = vlaneseq
        %v415 = vshrl.u32 %v414, 7
        %v416 = vsub.s32 1, %v415
        %v417 = vrot.slane %v179, %v416
        %419 = vbcast.lane.b32.xlu0 %v417, 256
        %v420 = vpop.permute.xlu0 %419
        %v421 = vlaneseq
        %v422 = vshrl.u32 %v421, 7
        %v423 = vsub.s32 2, %v422
        %v424 = vrot.slane %v179, %v423
        %426 = vbcast.lane.b32.xlu0 %v424, 256
        %v427 = vpop.permute.xlu0 %426
        %v428 = vlaneseq
        %v429 = vshrl.u32 %v428, 7
        %v430 = vsub.s32 3, %v429
        %v431 = vrot.slane %v179, %v430
        %433 = vbcast.lane.b32.xlu0 %v431, 256
        %v434 = vpop.permute.xlu0 %433
        %v435 = vlaneseq
        %v436 = vshrl.u32 %v435, 7
        %v437 = vsub.s32 4, %v436
        %v438 = vrot.slane %v179, %v437
        %440 = vbcast.lane.b32.xlu0 %v438, 256
        %v441 = vpop.permute.xlu0 %440
        %v442 = vlaneseq
        %v443 = vshrl.u32 %v442, 7
        %v444 = vsub.s32 5, %v443
        %v445 = vrot.slane %v179, %v444
        %447 = vbcast.lane.b32.xlu0 %v445, 256
        %v448 = vpop.permute.xlu0 %447
        %v449 = vlaneseq
        %v450 = vshrl.u32 %v449, 7
        %v451 = vsub.s32 6, %v450
        %v452 = vrot.slane %v179, %v451
        %454 = vbcast.lane.b32.xlu0 %v452, 256
        %v455 = vpop.permute.xlu0 %454
        %v456 = vlaneseq
        %v457 = vshrl.u32 %v456, 7
        %v458 = vsub.s32 7, %v457
        %v459 = vrot.slane %v179, %v458
        %461 = vbcast.lane.b32.xlu0 %v459, 256
        %v462 = vpop.permute.xlu0 %461
        %v463 = vlaneseq
        %v464 = vshrl.u32 %v463, 7
        %v465 = vsub.s32 0, %v464
        %v466 = vrot.slane %v180, %v465
        %468 = vbcast.lane.b32.xlu0 %v466, 256
        %v469 = vpop.permute.xlu0 %468
        %v470 = vlaneseq
        %v471 = vshrl.u32 %v470, 7
        %v472 = vsub.s32 1, %v471
        %v473 = vrot.slane %v180, %v472
        %475 = vbcast.lane.b32.xlu0 %v473, 256
        %v476 = vpop.permute.xlu0 %475
        %v477 = vlaneseq
        %v478 = vshrl.u32 %v477, 7
        %v479 = vsub.s32 2, %v478
        %v480 = vrot.slane %v180, %v479
        %482 = vbcast.lane.b32.xlu0 %v480, 256
        %v483 = vpop.permute.xlu0 %482
        %v484 = vlaneseq
        %v485 = vshrl.u32 %v484, 7
        %v486 = vsub.s32 3, %v485
        %v487 = vrot.slane %v180, %v486
        %489 = vbcast.lane.b32.xlu0 %v487, 256
        %v490 = vpop.permute.xlu0 %489
        %v491 = vlaneseq
        %v492 = vshrl.u32 %v491, 7
        %v493 = vsub.s32 4, %v492
        %v494 = vrot.slane %v180, %v493
        %496 = vbcast.lane.b32.xlu0 %v494, 256
        %v497 = vpop.permute.xlu0 %496
        %v498 = vlaneseq
        %v499 = vshrl.u32 %v498, 7
        %v500 = vsub.s32 5, %v499
        %v501 = vrot.slane %v180, %v500
        %503 = vbcast.lane.b32.xlu0 %v501, 256
        %v504 = vpop.permute.xlu0 %503
        %v505 = vlaneseq
        %v506 = vshrl.u32 %v505, 7
        %v507 = vsub.s32 6, %v506
        %v508 = vrot.slane %v180, %v507
        %510 = vbcast.lane.b32.xlu0 %v508, 256
        %v511 = vpop.permute.xlu0 %510
        %v512 = vlaneseq
        %v513 = vshrl.u32 %v512, 7
        %v514 = vsub.s32 7, %v513
        %v515 = vrot.slane %v180, %v514
        %517 = vbcast.lane.b32.xlu0 %v515, 256
        %v518 = vpop.permute.xlu0 %517
        %v519 = vlaneseq
        %v520 = vshrl.u32 %v519, 7
        %v521 = vsub.s32 0, %v520
        %v522 = vrot.slane %v181, %v521
        %524 = vbcast.lane.b32.xlu0 %v522, 256
        %v525 = vpop.permute.xlu0 %524
        %v526 = vlaneseq
        %v527 = vshrl.u32 %v526, 7
        %v528 = vsub.s32 1, %v527
        %v529 = vrot.slane %v181, %v528
        %531 = vbcast.lane.b32.xlu0 %v529, 256
        %v532 = vpop.permute.xlu0 %531
        %v533 = vlaneseq
        %v534 = vshrl.u32 %v533, 7
        %v535 = vsub.s32 2, %v534
        %v536 = vrot.slane %v181, %v535
        %538 = vbcast.lane.b32.xlu0 %v536, 256
        %v539 = vpop.permute.xlu0 %538
        %v540 = vlaneseq
        %v541 = vshrl.u32 %v540, 7
        %v542 = vsub.s32 3, %v541
        %v543 = vrot.slane %v181, %v542
        %545 = vbcast.lane.b32.xlu0 %v543, 256
        %v546 = vpop.permute.xlu0 %545
        %v547 = vlaneseq
        %v548 = vshrl.u32 %v547, 7
        %v549 = vsub.s32 4, %v548
        %v550 = vrot.slane %v181, %v549
        %552 = vbcast.lane.b32.xlu0 %v550, 256
        %v553 = vpop.permute.xlu0 %552
        %v554 = vlaneseq
        %v555 = vshrl.u32 %v554, 7
        %v556 = vsub.s32 5, %v555
        %v557 = vrot.slane %v181, %v556
        %559 = vbcast.lane.b32.xlu0 %v557, 256
        %v560 = vpop.permute.xlu0 %559
        %v561 = vlaneseq
        %v562 = vshrl.u32 %v561, 7
        %v563 = vsub.s32 6, %v562
        %v564 = vrot.slane %v181, %v563
        %566 = vbcast.lane.b32.xlu0 %v564, 256
        %v567 = vpop.permute.xlu0 %566
        %v568 = vlaneseq
        %v569 = vshrl.u32 %v568, 7
        %v570 = vsub.s32 7, %v569
        %v571 = vrot.slane %v181, %v570
        %573 = vbcast.lane.b32.xlu0 %v571, 256
        %v574 = vpop.permute.xlu0 %573
        %v575 = vlaneseq
        %v576 = vshrl.u32 %v575, 7
        %v577 = vsub.s32 0, %v576
        %v578 = vrot.slane %v182, %v577
        %580 = vbcast.lane.b32.xlu0 %v578, 256
        %v581 = vpop.permute.xlu0 %580
        %v582 = vlaneseq
        %v583 = vshrl.u32 %v582, 7
        %v584 = vsub.s32 1, %v583
        %v585 = vrot.slane %v182, %v584
        %587 = vbcast.lane.b32.xlu0 %v585, 256
        %v588 = vpop.permute.xlu0 %587
        %v589 = vlaneseq
        %v590 = vshrl.u32 %v589, 7
        %v591 = vsub.s32 2, %v590
        %v592 = vrot.slane %v182, %v591
        %594 = vbcast.lane.b32.xlu0 %v592, 256
        %v595 = vpop.permute.xlu0 %594
        %v596 = vlaneseq
        %v597 = vshrl.u32 %v596, 7
        %v598 = vsub.s32 3, %v597
        %v599 = vrot.slane %v182, %v598
        %601 = vbcast.lane.b32.xlu0 %v599, 256
        %v602 = vpop.permute.xlu0 %601
        %v603 = vlaneseq
        %v604 = vshrl.u32 %v603, 7
        %v605 = vsub.s32 4, %v604
        %v606 = vrot.slane %v182, %v605
        %608 = vbcast.lane.b32.xlu0 %v606, 256
        %v609 = vpop.permute.xlu0 %608
        %v610 = vlaneseq
        %v611 = vshrl.u32 %v610, 7
        %v612 = vsub.s32 5, %v611
        %v613 = vrot.slane %v182, %v612
        %615 = vbcast.lane.b32.xlu0 %v613, 256
        %v616 = vpop.permute.xlu0 %615
        %v617 = vlaneseq
        %v618 = vshrl.u32 %v617, 7
        %v619 = vsub.s32 6, %v618
        %v620 = vrot.slane %v182, %v619
        %622 = vbcast.lane.b32.xlu0 %v620, 256
        %v623 = vpop.permute.xlu0 %622
        %v624 = vlaneseq
        %v625 = vshrl.u32 %v624, 7
        %v626 = vsub.s32 7, %v625
        %v627 = vrot.slane %v182, %v626
        %629 = vbcast.lane.b32.xlu0 %v627, 256
        %v630 = vpop.permute.xlu0 %629
        %vm631 = vcmask 7168
        %v632 = vsel %vm631, %v189, %v413
        %v633 = vsel %vm631, %v196, %v420
        %v634 = vsel %vm631, %v203, %v427
        %v635 = vsel %vm631, %v210, %v434
        %v636 = vsel %vm631, %v217, %v441
        %v637 = vsel %vm631, %v224, %v448
        %v638 = vsel %vm631, %v231, %v455
        %v639 = vsel %vm631, %v238, %v462
        %v640 = vsel %vm631, %v245, %v469
        %v641 = vsel %vm631, %v252, %v476
        %v642 = vsel %vm631, %v259, %v483
        %v643 = vsel %vm631, %v266, %v490
        %v644 = vsel %vm631, %v273, %v497
        %v645 = vsel %vm631, %v280, %v504
        %v646 = vsel %vm631, %v287, %v511
        %v647 = vsel %vm631, %v294, %v518
        %v648 = vsel %vm631, %v301, %v525
        %v649 = vsel %vm631, %v308, %v532
        %v650 = vsel %vm631, %v315, %v539
        %v651 = vsel %vm631, %v322, %v546
        %v652 = vsel %vm631, %v329, %v553
        %v653 = vsel %vm631, %v336, %v560
        %v654 = vsel %vm631, %v343, %v567
        %v655 = vsel %vm631, %v350, %v574
        %v656 = vsel %vm631, %v357, %v581
        %v657 = vsel %vm631, %v364, %v588
        %v658 = vsel %vm631, %v371, %v595
        %v659 = vsel %vm631, %v378, %v602
        %v660 = vsel %vm631, %v385, %v609
        %v661 = vsel %vm631, %v392, %v616
        %v662 = vsel %vm631, %v399, %v623
        %v663 = vsel %vm631, %v406, %v630
        %v664 = vcombine.low %v632, %v634
        %v665 = vcombine.high %v632, %v634
        %v667 = vunpack.c.l.s4 1983009808
        %v668 = vunpack.c.0.s8 %v667
        %v669 = vlaneseq
        %v670 = vshrl.u32 %v669, 7
        %v671 = vsub.s32 %v668, %v670
        %v672 = vrot.slane %v664, %v671
        %v674 = vunpack.c.l.s4 1983009808
        %v675 = vunpack.c.0.s8 %v674
        %v676 = vlaneseq
        %v677 = vshrl.u32 %v676, 7
        %v678 = vsub.s32 %v675, %v677
        %v679 = vrot.slane %v665, %v678
        %v680 = vcombine.low %v633, %v635
        %v681 = vcombine.high %v633, %v635
        %v683 = vunpack.c.l.s4 1983009808
        %v684 = vunpack.c.0.s8 %v683
        %v685 = vlaneseq
        %v686 = vshrl.u32 %v685, 7
        %v687 = vsub.s32 %v684, %v686
        %v688 = vrot.slane %v680, %v687
        %v690 = vunpack.c.l.s4 1983009808
        %v691 = vunpack.c.0.s8 %v690
        %v692 = vlaneseq
        %v693 = vshrl.u32 %v692, 7
        %v694 = vsub.s32 %v691, %v693
        %v695 = vrot.slane %v681, %v694
        %v696 = vcombine.low %v636, %v638
        %v697 = vcombine.high %v636, %v638
        %v699 = vunpack.c.l.s4 1983009808
        %v700 = vunpack.c.0.s8 %v699
        %v701 = vlaneseq
        %v702 = vshrl.u32 %v701, 7
        %v703 = vsub.s32 %v700, %v702
        %v704 = vrot.slane %v696, %v703
        %v706 = vunpack.c.l.s4 1983009808
        %v707 = vunpack.c.0.s8 %v706
        %v708 = vlaneseq
        %v709 = vshrl.u32 %v708, 7
        %v710 = vsub.s32 %v707, %v709
        %v711 = vrot.slane %v697, %v710
        %v712 = vcombine.low %v637, %v639
        %v713 = vcombine.high %v637, %v639
        %v715 = vunpack.c.l.s4 1983009808
        %v716 = vunpack.c.0.s8 %v715
        %v717 = vlaneseq
        %v718 = vshrl.u32 %v717, 7
        %v719 = vsub.s32 %v716, %v718
        %v720 = vrot.slane %v712, %v719
        %v722 = vunpack.c.l.s4 1983009808
        %v723 = vunpack.c.0.s8 %v722
        %v724 = vlaneseq
        %v725 = vshrl.u32 %v724, 7
        %v726 = vsub.s32 %v723, %v725
        %v727 = vrot.slane %v713, %v726
        %v728 = vcombine.low %v672, %v688
        %v729 = vcombine.high %v672, %v688
        %v731 = vunpack.c.l.s4 1934713408
        %v732 = vunpack.c.0.s8 %v731
        %v733 = vlaneseq
        %v734 = vshrl.u32 %v733, 7
        %v735 = vsub.s32 %v732, %v734
        %v736 = vrot.slane %v728, %v735
        %v738 = vunpack.c.l.s4 1934713408
        %v739 = vunpack.c.0.s8 %v738
        %v740 = vlaneseq
        %v741 = vshrl.u32 %v740, 7
        %v742 = vsub.s32 %v739, %v741
        %v743 = vrot.slane %v729, %v742
        %v744 = vcombine.low %v679, %v695
        %v745 = vcombine.high %v679, %v695
        %v747 = vunpack.c.l.s4 1934713408
        %v748 = vunpack.c.0.s8 %v747
        %v749 = vlaneseq
        %v750 = vshrl.u32 %v749, 7
        %v751 = vsub.s32 %v748, %v750
        %v752 = vrot.slane %v744, %v751
        %v754 = vunpack.c.l.s4 1934713408
        %v755 = vunpack.c.0.s8 %v754
        %v756 = vlaneseq
        %v757 = vshrl.u32 %v756, 7
        %v758 = vsub.s32 %v755, %v757
        %v759 = vrot.slane %v745, %v758
        %v760 = vcombine.low %v704, %v720
        %v761 = vcombine.high %v704, %v720
        %v763 = vunpack.c.l.s4 1934713408
        %v764 = vunpack.c.0.s8 %v763
        %v765 = vlaneseq
        %v766 = vshrl.u32 %v765, 7
        %v767 = vsub.s32 %v764, %v766
        %v768 = vrot.slane %v760, %v767
        %v770 = vunpack.c.l.s4 1934713408
        %v771 = vunpack.c.0.s8 %v770
        %v772 = vlaneseq
        %v773 = vshrl.u32 %v772, 7
        %v774 = vsub.s32 %v771, %v773
        %v775 = vrot.slane %v761, %v774
        %v776 = vcombine.low %v711, %v727
        %v777 = vcombine.high %v711, %v727
        %v779 = vunpack.c.l.s4 1934713408
        %v780 = vunpack.c.0.s8 %v779
        %v781 = vlaneseq
        %v782 = vshrl.u32 %v781, 7
        %v783 = vsub.s32 %v780, %v782
        %v784 = vrot.slane %v776, %v783
        %v786 = vunpack.c.l.s4 1934713408
        %v787 = vunpack.c.0.s8 %v786
        %v788 = vlaneseq
        %v789 = vshrl.u32 %v788, 7
        %v790 = vsub.s32 %v787, %v789
        %v791 = vrot.slane %v777, %v790
        %v792 = vcombine.low %v736, %v768
        %v793 = vcombine.high %v736, %v768
        %v794 = vcombine.low %v743, %v775
        %v795 = vcombine.high %v743, %v775
        %v796 = vcombine.low %v752, %v784
        %v797 = vcombine.high %v752, %v784
        %v798 = vcombine.low %v759, %v791
        %v799 = vcombine.high %v759, %v791
        %v800 = vcombine.low %v640, %v642
        %v801 = vcombine.high %v640, %v642
        %v803 = vunpack.c.l.s4 1983009808
        %v804 = vunpack.c.0.s8 %v803
        %v805 = vlaneseq
        %v806 = vshrl.u32 %v805, 7
        %v807 = vsub.s32 %v804, %v806
        %v808 = vrot.slane %v800, %v807
        %v810 = vunpack.c.l.s4 1983009808
        %v811 = vunpack.c.0.s8 %v810
        %v812 = vlaneseq
        %v813 = vshrl.u32 %v812, 7
        %v814 = vsub.s32 %v811, %v813
        %v815 = vrot.slane %v801, %v814
        %v816 = vcombine.low %v641, %v643
        %v817 = vcombine.high %v641, %v643
        %v819 = vunpack.c.l.s4 1983009808
        %v820 = vunpack.c.0.s8 %v819
        %v821 = vlaneseq
        %v822 = vshrl.u32 %v821, 7
        %v823 = vsub.s32 %v820, %v822
        %v824 = vrot.slane %v816, %v823
        %v826 = vunpack.c.l.s4 1983009808
        %v827 = vunpack.c.0.s8 %v826
        %v828 = vlaneseq
        %v829 = vshrl.u32 %v828, 7
        %v830 = vsub.s32 %v827, %v829
        %v831 = vrot.slane %v817, %v830
        %v832 = vcombine.low %v644, %v646
        %v833 = vcombine.high %v644, %v646
        %v835 = vunpack.c.l.s4 1983009808
        %v836 = vunpack.c.0.s8 %v835
        %v837 = vlaneseq
        %v838 = vshrl.u32 %v837, 7
        %v839 = vsub.s32 %v836, %v838
        %v840 = vrot.slane %v832, %v839
        %v842 = vunpack.c.l.s4 1983009808
        %v843 = vunpack.c.0.s8 %v842
        %v844 = vlaneseq
        %v845 = vshrl.u32 %v844, 7
        %v846 = vsub.s32 %v843, %v845
        %v847 = vrot.slane %v833, %v846
        %v848 = vcombine.low %v645, %v647
        %v849 = vcombine.high %v645, %v647
        %v851 = vunpack.c.l.s4 1983009808
        %v852 = vunpack.c.0.s8 %v851
        %v853 = vlaneseq
        %v854 = vshrl.u32 %v853, 7
        %v855 = vsub.s32 %v852, %v854
        %v856 = vrot.slane %v848, %v855
        %v858 = vunpack.c.l.s4 1983009808
        %v859 = vunpack.c.0.s8 %v858
        %v860 = vlaneseq
        %v861 = vshrl.u32 %v860, 7
        %v862 = vsub.s32 %v859, %v861
        %v863 = vrot.slane %v849, %v862
        %v864 = vcombine.low %v808, %v824
        %v865 = vcombine.high %v808, %v824
        %v867 = vunpack.c.l.s4 1934713408
        %v868 = vunpack.c.0.s8 %v867
        %v869 = vlaneseq
        %v870 = vshrl.u32 %v869, 7
        %v871 = vsub.s32 %v868, %v870
        %v872 = vrot.slane %v864, %v871
        %v874 = vunpack.c.l.s4 1934713408
        %v875 = vunpack.c.0.s8 %v874
        %v876 = vlaneseq
        %v877 = vshrl.u32 %v876, 7
        %v878 = vsub.s32 %v875, %v877
        %v879 = vrot.slane %v865, %v878
        %v880 = vcombine.low %v815, %v831
        %v881 = vcombine.high %v815, %v831
        %v883 = vunpack.c.l.s4 1934713408
        %v884 = vunpack.c.0.s8 %v883
        %v885 = vlaneseq
        %v886 = vshrl.u32 %v885, 7
        %v887 = vsub.s32 %v884, %v886
        %v888 = vrot.slane %v880, %v887
        %v890 = vunpack.c.l.s4 1934713408
        %v891 = vunpack.c.0.s8 %v890
        %v892 = vlaneseq
        %v893 = vshrl.u32 %v892, 7
        %v894 = vsub.s32 %v891, %v893
        %v895 = vrot.slane %v881, %v894
        %v896 = vcombine.low %v840, %v856
        %v897 = vcombine.high %v840, %v856
        %v899 = vunpack.c.l.s4 1934713408
        %v900 = vunpack.c.0.s8 %v899
        %v901 = vlaneseq
        %v902 = vshrl.u32 %v901, 7
        %v903 = vsub.s32 %v900, %v902
        %v904 = vrot.slane %v896, %v903
        %v906 = vunpack.c.l.s4 1934713408
        %v907 = vunpack.c.0.s8 %v906
        %v908 = vlaneseq
        %v909 = vshrl.u32 %v908, 7
        %v910 = vsub.s32 %v907, %v909
        %v911 = vrot.slane %v897, %v910
        %v912 = vcombine.low %v847, %v863
        %v913 = vcombine.high %v847, %v863
        %v915 = vunpack.c.l.s4 1934713408
        %v916 = vunpack.c.0.s8 %v915
        %v917 = vlaneseq
        %v918 = vshrl.u32 %v917, 7
        %v919 = vsub.s32 %v916, %v918
        %v920 = vrot.slane %v912, %v919
        %v922 = vunpack.c.l.s4 1934713408
        %v923 = vunpack.c.0.s8 %v922
        %v924 = vlaneseq
        %v925 = vshrl.u32 %v924, 7
        %v926 = vsub.s32 %v923, %v925
        %v927 = vrot.slane %v913, %v926
        %v928 = vcombine.low %v872, %v904
        %v929 = vcombine.high %v872, %v904
        %v930 = vcombine.low %v879, %v911
        %v931 = vcombine.high %v879, %v911
        %v932 = vcombine.low %v888, %v920
        %v933 = vcombine.high %v888, %v920
        %v934 = vcombine.low %v895, %v927
        %v935 = vcombine.high %v895, %v927
        %v936 = vcombine.low %v648, %v650
        %v937 = vcombine.high %v648, %v650
        %v939 = vunpack.c.l.s4 1983009808
        %v940 = vunpack.c.0.s8 %v939
        %v941 = vlaneseq
        %v942 = vshrl.u32 %v941, 7
        %v943 = vsub.s32 %v940, %v942
        %v944 = vrot.slane %v936, %v943
        %v946 = vunpack.c.l.s4 1983009808
        %v947 = vunpack.c.0.s8 %v946
        %v948 = vlaneseq
        %v949 = vshrl.u32 %v948, 7
        %v950 = vsub.s32 %v947, %v949
        %v951 = vrot.slane %v937, %v950
        %v952 = vcombine.low %v649, %v651
        %v953 = vcombine.high %v649, %v651
        %v955 = vunpack.c.l.s4 1983009808
        %v956 = vunpack.c.0.s8 %v955
        %v957 = vlaneseq
        %v958 = vshrl.u32 %v957, 7
        %v959 = vsub.s32 %v956, %v958
        %v960 = vrot.slane %v952, %v959
        %v962 = vunpack.c.l.s4 1983009808
        %v963 = vunpack.c.0.s8 %v962
        %v964 = vlaneseq
        %v965 = vshrl.u32 %v964, 7
        %v966 = vsub.s32 %v963, %v965
        %v967 = vrot.slane %v953, %v966
        %v968 = vcombine.low %v652, %v654
        %v969 = vcombine.high %v652, %v654
        %v971 = vunpack.c.l.s4 1983009808
        %v972 = vunpack.c.0.s8 %v971
        %v973 = vlaneseq
        %v974 = vshrl.u32 %v973, 7
        %v975 = vsub.s32 %v972, %v974
        %v976 = vrot.slane %v968, %v975
        %v978 = vunpack.c.l.s4 1983009808
        %v979 = vunpack.c.0.s8 %v978
        %v980 = vlaneseq
        %v981 = vshrl.u32 %v980, 7
        %v982 = vsub.s32 %v979, %v981
        %v983 = vrot.slane %v969, %v982
        %v984 = vcombine.low %v653, %v655
        %v985 = vcombine.high %v653, %v655
        %v987 = vunpack.c.l.s4 1983009808
        %v988 = vunpack.c.0.s8 %v987
        %v989 = vlaneseq
        %v990 = vshrl.u32 %v989, 7
        %v991 = vsub.s32 %v988, %v990
        %v992 = vrot.slane %v984, %v991
        %v994 = vunpack.c.l.s4 1983009808
        %v995 = vunpack.c.0.s8 %v994
        %v996 = vlaneseq
        %v997 = vshrl.u32 %v996, 7
        %v998 = vsub.s32 %v995, %v997
        %v999 = vrot.slane %v985, %v998
        %v1000 = vcombine.low %v944, %v960
        %v1001 = vcombine.high %v944, %v960
        %v1003 = vunpack.c.l.s4 1934713408
        %v1004 = vunpack.c.0.s8 %v1003
        %v1005 = vlaneseq
        %v1006 = vshrl.u32 %v1005, 7
        %v1007 = vsub.s32 %v1004, %v1006
        %v1008 = vrot.slane %v1000, %v1007
        %v1010 = vunpack.c.l.s4 1934713408
        %v1011 = vunpack.c.0.s8 %v1010
        %v1012 = vlaneseq
        %v1013 = vshrl.u32 %v1012, 7
        %v1014 = vsub.s32 %v1011, %v1013
        %v1015 = vrot.slane %v1001, %v1014
        %v1016 = vcombine.low %v951, %v967
        %v1017 = vcombine.high %v951, %v967
        %v1019 = vunpack.c.l.s4 1934713408
        %v1020 = vunpack.c.0.s8 %v1019
        %v1021 = vlaneseq
        %v1022 = vshrl.u32 %v1021, 7
        %v1023 = vsub.s32 %v1020, %v1022
        %v1024 = vrot.slane %v1016, %v1023
        %v1026 = vunpack.c.l.s4 1934713408
        %v1027 = vunpack.c.0.s8 %v1026
        %v1028 = vlaneseq
        %v1029 = vshrl.u32 %v1028, 7
        %v1030 = vsub.s32 %v1027, %v1029
        %v1031 = vrot.slane %v1017, %v1030
        %v1032 = vcombine.low %v976, %v992
        %v1033 = vcombine.high %v976, %v992
        %v1035 = vunpack.c.l.s4 1934713408
        %v1036 = vunpack.c.0.s8 %v1035
        %v1037 = vlaneseq
        %v1038 = vshrl.u32 %v1037, 7
        %v1039 = vsub.s32 %v1036, %v1038
        %v1040 = vrot.slane %v1032, %v1039
        %v1042 = vunpack.c.l.s4 1934713408
        %v1043 = vunpack.c.0.s8 %v1042
        %v1044 = vlaneseq
        %v1045 = vshrl.u32 %v1044, 7
        %v1046 = vsub.s32 %v1043, %v1045
        %v1047 = vrot.slane %v1033, %v1046
        %v1048 = vcombine.low %v983, %v999
        %v1049 = vcombine.high %v983, %v999
        %v1051 = vunpack.c.l.s4 1934713408
        %v1052 = vunpack.c.0.s8 %v1051
        %v1053 = vlaneseq
        %v1054 = vshrl.u32 %v1053, 7
        %v1055 = vsub.s32 %v1052, %v1054
        %v1056 = vrot.slane %v1048, %v1055
        %v1058 = vunpack.c.l.s4 1934713408
        %v1059 = vunpack.c.0.s8 %v1058
        %v1060 = vlaneseq
        %v1061 = vshrl.u32 %v1060, 7
        %v1062 = vsub.s32 %v1059, %v1061
        %v1063 = vrot.slane %v1049, %v1062
        %v1064 = vcombine.low %v1008, %v1040
        %v1065 = vcombine.high %v1008, %v1040
        %v1066 = vcombine.low %v1015, %v1047
        %v1067 = vcombine.high %v1015, %v1047
        %v1068 = vcombine.low %v1024, %v1056
        %v1069 = vcombine.high %v1024, %v1056
        %v1070 = vcombine.low %v1031, %v1063
        %v1071 = vcombine.high %v1031, %v1063
        %v1072 = vcombine.low %v656, %v658
        %v1073 = vcombine.high %v656, %v658
        %v1075 = vunpack.c.l.s4 1983009808
        %v1076 = vunpack.c.0.s8 %v1075
        %v1077 = vlaneseq
        %v1078 = vshrl.u32 %v1077, 7
        %v1079 = vsub.s32 %v1076, %v1078
        %v1080 = vrot.slane %v1072, %v1079
        %v1082 = vunpack.c.l.s4 1983009808
        %v1083 = vunpack.c.0.s8 %v1082
        %v1084 = vlaneseq
        %v1085 = vshrl.u32 %v1084, 7
        %v1086 = vsub.s32 %v1083, %v1085
        %v1087 = vrot.slane %v1073, %v1086
        %v1088 = vcombine.low %v657, %v659
        %v1089 = vcombine.high %v657, %v659
        %v1091 = vunpack.c.l.s4 1983009808
        %v1092 = vunpack.c.0.s8 %v1091
        %v1093 = vlaneseq
        %v1094 = vshrl.u32 %v1093, 7
        %v1095 = vsub.s32 %v1092, %v1094
        %v1096 = vrot.slane %v1088, %v1095
        %v1098 = vunpack.c.l.s4 1983009808
        %v1099 = vunpack.c.0.s8 %v1098
        %v1100 = vlaneseq
        %v1101 = vshrl.u32 %v1100, 7
        %v1102 = vsub.s32 %v1099, %v1101
        %v1103 = vrot.slane %v1089, %v1102
        %v1104 = vcombine.low %v660, %v662
        %v1105 = vcombine.high %v660, %v662
        %v1107 = vunpack.c.l.s4 1983009808
        %v1108 = vunpack.c.0.s8 %v1107
        %v1109 = vlaneseq
        %v1110 = vshrl.u32 %v1109, 7
        %v1111 = vsub.s32 %v1108, %v1110
        %v1112 = vrot.slane %v1104, %v1111
        %v1114 = vunpack.c.l.s4 1983009808
        %v1115 = vunpack.c.0.s8 %v1114
        %v1116 = vlaneseq
        %v1117 = vshrl.u32 %v1116, 7
        %v1118 = vsub.s32 %v1115, %v1117
        %v1119 = vrot.slane %v1105, %v1118
        %v1120 = vcombine.low %v661, %v663
        %v1121 = vcombine.high %v661, %v663
        %v1123 = vunpack.c.l.s4 1983009808
        %v1124 = vunpack.c.0.s8 %v1123
        %v1125 = vlaneseq
        %v1126 = vshrl.u32 %v1125, 7
        %v1127 = vsub.s32 %v1124, %v1126
        %v1128 = vrot.slane %v1120, %v1127
        %v1130 = vunpack.c.l.s4 1983009808
        %v1131 = vunpack.c.0.s8 %v1130
        %v1132 = vlaneseq
        %v1133 = vshrl.u32 %v1132, 7
        %v1134 = vsub.s32 %v1131, %v1133
        %v1135 = vrot.slane %v1121, %v1134
        %v1136 = vcombine.low %v1080, %v1096
        %v1137 = vcombine.high %v1080, %v1096
        %v1139 = vunpack.c.l.s4 1934713408
        %v1140 = vunpack.c.0.s8 %v1139
        %v1141 = vlaneseq
        %v1142 = vshrl.u32 %v1141, 7
        %v1143 = vsub.s32 %v1140, %v1142
        %v1144 = vrot.slane %v1136, %v1143
        %v1146 = vunpack.c.l.s4 1934713408
        %v1147 = vunpack.c.0.s8 %v1146
        %v1148 = vlaneseq
        %v1149 = vshrl.u32 %v1148, 7
        %v1150 = vsub.s32 %v1147, %v1149
        %v1151 = vrot.slane %v1137, %v1150
        %v1152 = vcombine.low %v1087, %v1103
        %v1153 = vcombine.high %v1087, %v1103
        %v1155 = vunpack.c.l.s4 1934713408
        %v1156 = vunpack.c.0.s8 %v1155
        %v1157 = vlaneseq
        %v1158 = vshrl.u32 %v1157, 7
        %v1159 = vsub.s32 %v1156, %v1158
        %v1160 = vrot.slane %v1152, %v1159
        %v1162 = vunpack.c.l.s4 1934713408
        %v1163 = vunpack.c.0.s8 %v1162
        %v1164 = vlaneseq
        %v1165 = vshrl.u32 %v1164, 7
        %v1166 = vsub.s32 %v1163, %v1165
        %v1167 = vrot.slane %v1153, %v1166
        %v1168 = vcombine.low %v1112, %v1128
        %v1169 = vcombine.high %v1112, %v1128
        %v1171 = vunpack.c.l.s4 1934713408
        %v1172 = vunpack.c.0.s8 %v1171
        %v1173 = vlaneseq
        %v1174 = vshrl.u32 %v1173, 7
        %v1175 = vsub.s32 %v1172, %v1174
        %v1176 = vrot.slane %v1168, %v1175
        %v1178 = vunpack.c.l.s4 1934713408
        %v1179 = vunpack.c.0.s8 %v1178
        %v1180 = vlaneseq
        %v1181 = vshrl.u32 %v1180, 7
        %v1182 = vsub.s32 %v1179, %v1181
        %v1183 = vrot.slane %v1169, %v1182
        %v1184 = vcombine.low %v1119, %v1135
        %v1185 = vcombine.high %v1119, %v1135
        %v1187 = vunpack.c.l.s4 1934713408
        %v1188 = vunpack.c.0.s8 %v1187
        %v1189 = vlaneseq
        %v1190 = vshrl.u32 %v1189, 7
        %v1191 = vsub.s32 %v1188, %v1190
        %v1192 = vrot.slane %v1184, %v1191
        %v1194 = vunpack.c.l.s4 1934713408
        %v1195 = vunpack.c.0.s8 %v1194
        %v1196 = vlaneseq
        %v1197 = vshrl.u32 %v1196, 7
        %v1198 = vsub.s32 %v1195, %v1197
        %v1199 = vrot.slane %v1185, %v1198
        %v1200 = vcombine.low %v1144, %v1176
        %v1201 = vcombine.high %v1144, %v1176
        %v1202 = vcombine.low %v1151, %v1183
        %v1203 = vcombine.high %v1151, %v1183
        %v1204 = vcombine.low %v1160, %v1192
        %v1205 = vcombine.high %v1160, %v1192
        %v1206 = vcombine.low %v1167, %v1199
        %v1207 = vcombine.high %v1167, %v1199
        %1212 = vrot.lane.b32.xlu0 %v793, 2
        %v1213 = vpop.permute.xlu0 %1212
        %1214 = vrot.lane.b32.xlu0 %v929, 2
        %v1215 = vpop.permute.xlu0 %1214
        %1216 = vrot.lane.b32.xlu0 %v1065, 2
        %v1217 = vpop.permute.xlu0 %1216
        %1218 = vrot.lane.b32.xlu0 %v1201, 2
        %v1219 = vpop.permute.xlu0 %1218
        %1228 = vrot.lane.b32.xlu0 %v794, 4
        %v1229 = vpop.permute.xlu0 %1228
        %1230 = vrot.lane.b32.xlu0 %v930, 4
        %v1231 = vpop.permute.xlu0 %1230
        %1232 = vrot.lane.b32.xlu0 %v1066, 4
        %v1233 = vpop.permute.xlu0 %1232
        %1234 = vrot.lane.b32.xlu0 %v1202, 4
        %v1235 = vpop.permute.xlu0 %1234
        %1244 = vrot.lane.b32.xlu0 %v795, 6
        %v1245 = vpop.permute.xlu0 %1244
        %1246 = vrot.lane.b32.xlu0 %v931, 6
        %v1247 = vpop.permute.xlu0 %1246
        %1248 = vrot.lane.b32.xlu0 %v1067, 6
        %v1249 = vpop.permute.xlu0 %1248
        %1250 = vrot.lane.b32.xlu0 %v1203, 6
        %v1251 = vpop.permute.xlu0 %1250
        %1260 = vrot.lane.b32.xlu0 %v796, 8
        %v1261 = vpop.permute.xlu0 %1260
        %1262 = vrot.lane.b32.xlu0 %v932, 8
        %v1263 = vpop.permute.xlu0 %1262
        %1264 = vrot.lane.b32.xlu0 %v1068, 8
        %v1265 = vpop.permute.xlu0 %1264
        %1266 = vrot.lane.b32.xlu0 %v1204, 8
        %v1267 = vpop.permute.xlu0 %1266
        %1276 = vrot.lane.b32.xlu0 %v797, 10
        %v1277 = vpop.permute.xlu0 %1276
        %1278 = vrot.lane.b32.xlu0 %v933, 10
        %v1279 = vpop.permute.xlu0 %1278
        %1280 = vrot.lane.b32.xlu0 %v1069, 10
        %v1281 = vpop.permute.xlu0 %1280
        %1282 = vrot.lane.b32.xlu0 %v1205, 10
        %v1283 = vpop.permute.xlu0 %1282
        %1292 = vrot.lane.b32.xlu0 %v798, 12
        %v1293 = vpop.permute.xlu0 %1292
        %1294 = vrot.lane.b32.xlu0 %v934, 12
        %v1295 = vpop.permute.xlu0 %1294
        %1296 = vrot.lane.b32.xlu0 %v1070, 12
        %v1297 = vpop.permute.xlu0 %1296
        %1298 = vrot.lane.b32.xlu0 %v1206, 12
        %v1299 = vpop.permute.xlu0 %1298
        %1308 = vrot.lane.b32.xlu0 %v799, 14
        %v1309 = vpop.permute.xlu0 %1308
        %1310 = vrot.lane.b32.xlu0 %v935, 14
        %v1311 = vpop.permute.xlu0 %1310
        %1312 = vrot.lane.b32.xlu0 %v1071, 14
        %v1313 = vpop.permute.xlu0 %1312
        %1314 = vrot.lane.b32.xlu0 %v1207, 14
        %v1315 = vpop.permute.xlu0 %1314
        %vm1320 = vcmask 15360
        %v1321 = vsel %vm1320, %v792, %v1213
        %v1322 = vsel %vm1320, %v928, %v1215
        %v1323 = vsel %vm1320, %v1064, %v1217
        %v1324 = vsel %vm1320, %v1200, %v1219
        %vm1325 = vcmask 31744
        %v1326 = vsel %vm1325, %v1321, %v1229
        %v1327 = vsel %vm1325, %v1322, %v1231
        %v1328 = vsel %vm1325, %v1323, %v1233
        %v1329 = vsel %vm1325, %v1324, %v1235
        %vm1330 = vcmask 48128
        %v1331 = vsel %vm1330, %v1326, %v1245
        %v1332 = vsel %vm1330, %v1327, %v1247
        %v1333 = vsel %vm1330, %v1328, %v1249
        %v1334 = vsel %vm1330, %v1329, %v1251
        %vm1335 = vcmask 64512
        %v1336 = vsel %vm1335, %v1331, %v1261
        %v1337 = vsel %vm1335, %v1332, %v1263
        %v1338 = vsel %vm1335, %v1333, %v1265
        %v1339 = vsel %vm1335, %v1334, %v1267
        %vm1340 = vcmask 80896
        %v1341 = vsel %vm1340, %v1336, %v1277
        %v1342 = vsel %vm1340, %v1337, %v1279
        %v1343 = vsel %vm1340, %v1338, %v1281
        %v1344 = vsel %vm1340, %v1339, %v1283
        %vm1345 = vcmask 97280
        %v1346 = vsel %vm1345, %v1341, %v1293
        %v1347 = vsel %vm1345, %v1342, %v1295
        %v1348 = vsel %vm1345, %v1343, %v1297
        %v1349 = vsel %vm1345, %v1344, %v1299
        %vm1350 = vcmask 113664
        %v1351 = vsel %vm1350, %v1346, %v1309
        %v1352 = vsel %vm1350, %v1347, %v1311
        %v1353 = vsel %vm1350, %v1348, %v1313
        %v1354 = vsel %vm1350, %v1349, %v1315
        %s1355 = scalar_lea.vmem %s170, 64
        %v1356 = vld [vmem:[%s1355] sm:$0xff]
        %v1357 = vld [vmem:[%s1355 + $0x8] sm:$0xff]
        %v1358 = vld [vmem:[%s1355 + $0x10] sm:$0xff]
        %v1359 = vld [vmem:[%s1355 + $0x18] sm:$0xff]
        %s1360 = scalar_lea.vmem %s170, 96
        %v1361 = vld [vmem:[%s1360] sm:$0xff]
        %v1362 = vld [vmem:[%s1360 + $0x8] sm:$0xff]
        %v1363 = vld [vmem:[%s1360 + $0x10] sm:$0xff]
        %v1364 = vld [vmem:[%s1360 + $0x18] sm:$0xff]
        %v1365 = vlaneseq
        %v1366 = vshrl.u32 %v1365, 7
        %v1367 = vsub.s32 0, %v1366
        %v1368 = vrot.slane %v1356, %v1367
        %1370 = vbcast.lane.b32.xlu0 %v1368, 256
        %v1371 = vpop.permute.xlu0 %1370
        %v1372 = vlaneseq
        %v1373 = vshrl.u32 %v1372, 7
        %v1374 = vsub.s32 1, %v1373
        %v1375 = vrot.slane %v1356, %v1374
        %1377 = vbcast.lane.b32.xlu0 %v1375, 256
        %v1378 = vpop.permute.xlu0 %1377
        %v1379 = vlaneseq
        %v1380 = vshrl.u32 %v1379, 7
        %v1381 = vsub.s32 2, %v1380
        %v1382 = vrot.slane %v1356, %v1381
        %1384 = vbcast.lane.b32.xlu0 %v1382, 256
        %v1385 = vpop.permute.xlu0 %1384
        %v1386 = vlaneseq
        %v1387 = vshrl.u32 %v1386, 7
        %v1388 = vsub.s32 3, %v1387
        %v1389 = vrot.slane %v1356, %v1388
        %1391 = vbcast.lane.b32.xlu0 %v1389, 256
        %v1392 = vpop.permute.xlu0 %1391
        %v1393 = vlaneseq
        %v1394 = vshrl.u32 %v1393, 7
        %v1395 = vsub.s32 4, %v1394
        %v1396 = vrot.slane %v1356, %v1395
        %1398 = vbcast.lane.b32.xlu0 %v1396, 256
        %v1399 = vpop.permute.xlu0 %1398
        %v1400 = vlaneseq
        %v1401 = vshrl.u32 %v1400, 7
        %v1402 = vsub.s32 5, %v1401
        %v1403 = vrot.slane %v1356, %v1402
        %1405 = vbcast.lane.b32.xlu0 %v1403, 256
        %v1406 = vpop.permute.xlu0 %1405
        %v1407 = vlaneseq
        %v1408 = vshrl.u32 %v1407, 7
        %v1409 = vsub.s32 6, %v1408
        %v1410 = vrot.slane %v1356, %v1409
        %1412 = vbcast.lane.b32.xlu0 %v1410, 256
        %v1413 = vpop.permute.xlu0 %1412
        %v1414 = vlaneseq
        %v1415 = vshrl.u32 %v1414, 7
        %v1416 = vsub.s32 7, %v1415
        %v1417 = vrot.slane %v1356, %v1416
        %1419 = vbcast.lane.b32.xlu0 %v1417, 256
        %v1420 = vpop.permute.xlu0 %1419
        %v1421 = vlaneseq
        %v1422 = vshrl.u32 %v1421, 7
        %v1423 = vsub.s32 0, %v1422
        %v1424 = vrot.slane %v1357, %v1423
        %1426 = vbcast.lane.b32.xlu0 %v1424, 256
        %v1427 = vpop.permute.xlu0 %1426
        %v1428 = vlaneseq
        %v1429 = vshrl.u32 %v1428, 7
        %v1430 = vsub.s32 1, %v1429
        %v1431 = vrot.slane %v1357, %v1430
        %1433 = vbcast.lane.b32.xlu0 %v1431, 256
        %v1434 = vpop.permute.xlu0 %1433
        %v1435 = vlaneseq
        %v1436 = vshrl.u32 %v1435, 7
        %v1437 = vsub.s32 2, %v1436
        %v1438 = vrot.slane %v1357, %v1437
        %1440 = vbcast.lane.b32.xlu0 %v1438, 256
        %v1441 = vpop.permute.xlu0 %1440
        %v1442 = vlaneseq
        %v1443 = vshrl.u32 %v1442, 7
        %v1444 = vsub.s32 3, %v1443
        %v1445 = vrot.slane %v1357, %v1444
        %1447 = vbcast.lane.b32.xlu0 %v1445, 256
        %v1448 = vpop.permute.xlu0 %1447
        %v1449 = vlaneseq
        %v1450 = vshrl.u32 %v1449, 7
        %v1451 = vsub.s32 4, %v1450
        %v1452 = vrot.slane %v1357, %v1451
        %1454 = vbcast.lane.b32.xlu0 %v1452, 256
        %v1455 = vpop.permute.xlu0 %1454
        %v1456 = vlaneseq
        %v1457 = vshrl.u32 %v1456, 7
        %v1458 = vsub.s32 5, %v1457
        %v1459 = vrot.slane %v1357, %v1458
        %1461 = vbcast.lane.b32.xlu0 %v1459, 256
        %v1462 = vpop.permute.xlu0 %1461
        %v1463 = vlaneseq
        %v1464 = vshrl.u32 %v1463, 7
        %v1465 = vsub.s32 6, %v1464
        %v1466 = vrot.slane %v1357, %v1465
        %1468 = vbcast.lane.b32.xlu0 %v1466, 256
        %v1469 = vpop.permute.xlu0 %1468
        %v1470 = vlaneseq
        %v1471 = vshrl.u32 %v1470, 7
        %v1472 = vsub.s32 7, %v1471
        %v1473 = vrot.slane %v1357, %v1472
        %1475 = vbcast.lane.b32.xlu0 %v1473, 256
        %v1476 = vpop.permute.xlu0 %1475
        %v1477 = vlaneseq
        %v1478 = vshrl.u32 %v1477, 7
        %v1479 = vsub.s32 0, %v1478
        %v1480 = vrot.slane %v1358, %v1479
        %1482 = vbcast.lane.b32.xlu0 %v1480, 256
        %v1483 = vpop.permute.xlu0 %1482
        %v1484 = vlaneseq
        %v1485 = vshrl.u32 %v1484, 7
        %v1486 = vsub.s32 1, %v1485
        %v1487 = vrot.slane %v1358, %v1486
        %1489 = vbcast.lane.b32.xlu0 %v1487, 256
        %v1490 = vpop.permute.xlu0 %1489
        %v1491 = vlaneseq
        %v1492 = vshrl.u32 %v1491, 7
        %v1493 = vsub.s32 2, %v1492
        %v1494 = vrot.slane %v1358, %v1493
        %1496 = vbcast.lane.b32.xlu0 %v1494, 256
        %v1497 = vpop.permute.xlu0 %1496
        %v1498 = vlaneseq
        %v1499 = vshrl.u32 %v1498, 7
        %v1500 = vsub.s32 3, %v1499
        %v1501 = vrot.slane %v1358, %v1500
        %1503 = vbcast.lane.b32.xlu0 %v1501, 256
        %v1504 = vpop.permute.xlu0 %1503
        %v1505 = vlaneseq
        %v1506 = vshrl.u32 %v1505, 7
        %v1507 = vsub.s32 4, %v1506
        %v1508 = vrot.slane %v1358, %v1507
        %1510 = vbcast.lane.b32.xlu0 %v1508, 256
        %v1511 = vpop.permute.xlu0 %1510
        %v1512 = vlaneseq
        %v1513 = vshrl.u32 %v1512, 7
        %v1514 = vsub.s32 5, %v1513
        %v1515 = vrot.slane %v1358, %v1514
        %1517 = vbcast.lane.b32.xlu0 %v1515, 256
        %v1518 = vpop.permute.xlu0 %1517
        %v1519 = vlaneseq
        %v1520 = vshrl.u32 %v1519, 7
        %v1521 = vsub.s32 6, %v1520
        %v1522 = vrot.slane %v1358, %v1521
        %1524 = vbcast.lane.b32.xlu0 %v1522, 256
        %v1525 = vpop.permute.xlu0 %1524
        %v1526 = vlaneseq
        %v1527 = vshrl.u32 %v1526, 7
        %v1528 = vsub.s32 7, %v1527
        %v1529 = vrot.slane %v1358, %v1528
        %1531 = vbcast.lane.b32.xlu0 %v1529, 256
        %v1532 = vpop.permute.xlu0 %1531
        %v1533 = vlaneseq
        %v1534 = vshrl.u32 %v1533, 7
        %v1535 = vsub.s32 0, %v1534
        %v1536 = vrot.slane %v1359, %v1535
        %1538 = vbcast.lane.b32.xlu0 %v1536, 256
        %v1539 = vpop.permute.xlu0 %1538
        %v1540 = vlaneseq
        %v1541 = vshrl.u32 %v1540, 7
        %v1542 = vsub.s32 1, %v1541
        %v1543 = vrot.slane %v1359, %v1542
        %1545 = vbcast.lane.b32.xlu0 %v1543, 256
        %v1546 = vpop.permute.xlu0 %1545
        %v1547 = vlaneseq
        %v1548 = vshrl.u32 %v1547, 7
        %v1549 = vsub.s32 2, %v1548
        %v1550 = vrot.slane %v1359, %v1549
        %1552 = vbcast.lane.b32.xlu0 %v1550, 256
        %v1553 = vpop.permute.xlu0 %1552
        %v1554 = vlaneseq
        %v1555 = vshrl.u32 %v1554, 7
        %v1556 = vsub.s32 3, %v1555
        %v1557 = vrot.slane %v1359, %v1556
        %1559 = vbcast.lane.b32.xlu0 %v1557, 256
        %v1560 = vpop.permute.xlu0 %1559
        %v1561 = vlaneseq
        %v1562 = vshrl.u32 %v1561, 7
        %v1563 = vsub.s32 4, %v1562
        %v1564 = vrot.slane %v1359, %v1563
        %1566 = vbcast.lane.b32.xlu0 %v1564, 256
        %v1567 = vpop.permute.xlu0 %1566
        %v1568 = vlaneseq
        %v1569 = vshrl.u32 %v1568, 7
        %v1570 = vsub.s32 5, %v1569
        %v1571 = vrot.slane %v1359, %v1570
        %1573 = vbcast.lane.b32.xlu0 %v1571, 256
        %v1574 = vpop.permute.xlu0 %1573
        %v1575 = vlaneseq
        %v1576 = vshrl.u32 %v1575, 7
        %v1577 = vsub.s32 6, %v1576
        %v1578 = vrot.slane %v1359, %v1577
        %1580 = vbcast.lane.b32.xlu0 %v1578, 256
        %v1581 = vpop.permute.xlu0 %1580
        %v1582 = vlaneseq
        %v1583 = vshrl.u32 %v1582, 7
        %v1584 = vsub.s32 7, %v1583
        %v1585 = vrot.slane %v1359, %v1584
        %1587 = vbcast.lane.b32.xlu0 %v1585, 256
        %v1588 = vpop.permute.xlu0 %1587
        %v1589 = vlaneseq
        %v1590 = vshrl.u32 %v1589, 7
        %v1591 = vsub.s32 0, %v1590
        %v1592 = vrot.slane %v1361, %v1591
        %1594 = vbcast.lane.b32.xlu0 %v1592, 256
        %v1595 = vpop.permute.xlu0 %1594
        %v1596 = vlaneseq
        %v1597 = vshrl.u32 %v1596, 7
        %v1598 = vsub.s32 1, %v1597
        %v1599 = vrot.slane %v1361, %v1598
        %1601 = vbcast.lane.b32.xlu0 %v1599, 256
        %v1602 = vpop.permute.xlu0 %1601
        %v1603 = vlaneseq
        %v1604 = vshrl.u32 %v1603, 7
        %v1605 = vsub.s32 2, %v1604
        %v1606 = vrot.slane %v1361, %v1605
        %1608 = vbcast.lane.b32.xlu0 %v1606, 256
        %v1609 = vpop.permute.xlu0 %1608
        %v1610 = vlaneseq
        %v1611 = vshrl.u32 %v1610, 7
        %v1612 = vsub.s32 3, %v1611
        %v1613 = vrot.slane %v1361, %v1612
        %1615 = vbcast.lane.b32.xlu0 %v1613, 256
        %v1616 = vpop.permute.xlu0 %1615
        %v1617 = vlaneseq
        %v1618 = vshrl.u32 %v1617, 7
        %v1619 = vsub.s32 4, %v1618
        %v1620 = vrot.slane %v1361, %v1619
        %1622 = vbcast.lane.b32.xlu0 %v1620, 256
        %v1623 = vpop.permute.xlu0 %1622
        %v1624 = vlaneseq
        %v1625 = vshrl.u32 %v1624, 7
        %v1626 = vsub.s32 5, %v1625
        %v1627 = vrot.slane %v1361, %v1626
        %1629 = vbcast.lane.b32.xlu0 %v1627, 256
        %v1630 = vpop.permute.xlu0 %1629
        %v1631 = vlaneseq
        %v1632 = vshrl.u32 %v1631, 7
        %v1633 = vsub.s32 6, %v1632
        %v1634 = vrot.slane %v1361, %v1633
        %1636 = vbcast.lane.b32.xlu0 %v1634, 256
        %v1637 = vpop.permute.xlu0 %1636
        %v1638 = vlaneseq
        %v1639 = vshrl.u32 %v1638, 7
        %v1640 = vsub.s32 7, %v1639
        %v1641 = vrot.slane %v1361, %v1640
        %1643 = vbcast.lane.b32.xlu0 %v1641, 256
        %v1644 = vpop.permute.xlu0 %1643
        %v1645 = vlaneseq
        %v1646 = vshrl.u32 %v1645, 7
        %v1647 = vsub.s32 0, %v1646
        %v1648 = vrot.slane %v1362, %v1647
        %1650 = vbcast.lane.b32.xlu0 %v1648, 256
        %v1651 = vpop.permute.xlu0 %1650
        %v1652 = vlaneseq
        %v1653 = vshrl.u32 %v1652, 7
        %v1654 = vsub.s32 1, %v1653
        %v1655 = vrot.slane %v1362, %v1654
        %1657 = vbcast.lane.b32.xlu0 %v1655, 256
        %v1658 = vpop.permute.xlu0 %1657
        %v1659 = vlaneseq
        %v1660 = vshrl.u32 %v1659, 7
        %v1661 = vsub.s32 2, %v1660
        %v1662 = vrot.slane %v1362, %v1661
        %1664 = vbcast.lane.b32.xlu0 %v1662, 256
        %v1665 = vpop.permute.xlu0 %1664
        %v1666 = vlaneseq
        %v1667 = vshrl.u32 %v1666, 7
        %v1668 = vsub.s32 3, %v1667
        %v1669 = vrot.slane %v1362, %v1668
        %1671 = vbcast.lane.b32.xlu0 %v1669, 256
        %v1672 = vpop.permute.xlu0 %1671
        %v1673 = vlaneseq
        %v1674 = vshrl.u32 %v1673, 7
        %v1675 = vsub.s32 4, %v1674
        %v1676 = vrot.slane %v1362, %v1675
        %1678 = vbcast.lane.b32.xlu0 %v1676, 256
        %v1679 = vpop.permute.xlu0 %1678
        %v1680 = vlaneseq
        %v1681 = vshrl.u32 %v1680, 7
        %v1682 = vsub.s32 5, %v1681
        %v1683 = vrot.slane %v1362, %v1682
        %1685 = vbcast.lane.b32.xlu0 %v1683, 256
        %v1686 = vpop.permute.xlu0 %1685
        %v1687 = vlaneseq
        %v1688 = vshrl.u32 %v1687, 7
        %v1689 = vsub.s32 6, %v1688
        %v1690 = vrot.slane %v1362, %v1689
        %1692 = vbcast.lane.b32.xlu0 %v1690, 256
        %v1693 = vpop.permute.xlu0 %1692
        %v1694 = vlaneseq
        %v1695 = vshrl.u32 %v1694, 7
        %v1696 = vsub.s32 7, %v1695
        %v1697 = vrot.slane %v1362, %v1696
        %1699 = vbcast.lane.b32.xlu0 %v1697, 256
        %v1700 = vpop.permute.xlu0 %1699
        %v1701 = vlaneseq
        %v1702 = vshrl.u32 %v1701, 7
        %v1703 = vsub.s32 0, %v1702
        %v1704 = vrot.slane %v1363, %v1703
        %1706 = vbcast.lane.b32.xlu0 %v1704, 256
        %v1707 = vpop.permute.xlu0 %1706
        %v1708 = vlaneseq
        %v1709 = vshrl.u32 %v1708, 7
        %v1710 = vsub.s32 1, %v1709
        %v1711 = vrot.slane %v1363, %v1710
        %1713 = vbcast.lane.b32.xlu0 %v1711, 256
        %v1714 = vpop.permute.xlu0 %1713
        %v1715 = vlaneseq
        %v1716 = vshrl.u32 %v1715, 7
        %v1717 = vsub.s32 2, %v1716
        %v1718 = vrot.slane %v1363, %v1717
        %1720 = vbcast.lane.b32.xlu0 %v1718, 256
        %v1721 = vpop.permute.xlu0 %1720
        %v1722 = vlaneseq
        %v1723 = vshrl.u32 %v1722, 7
        %v1724 = vsub.s32 3, %v1723
        %v1725 = vrot.slane %v1363, %v1724
        %1727 = vbcast.lane.b32.xlu0 %v1725, 256
        %v1728 = vpop.permute.xlu0 %1727
        %v1729 = vlaneseq
        %v1730 = vshrl.u32 %v1729, 7
        %v1731 = vsub.s32 4, %v1730
        %v1732 = vrot.slane %v1363, %v1731
        %1734 = vbcast.lane.b32.xlu0 %v1732, 256
        %v1735 = vpop.permute.xlu0 %1734
        %v1736 = vlaneseq
        %v1737 = vshrl.u32 %v1736, 7
        %v1738 = vsub.s32 5, %v1737
        %v1739 = vrot.slane %v1363, %v1738
        %1741 = vbcast.lane.b32.xlu0 %v1739, 256
        %v1742 = vpop.permute.xlu0 %1741
        %v1743 = vlaneseq
        %v1744 = vshrl.u32 %v1743, 7
        %v1745 = vsub.s32 6, %v1744
        %v1746 = vrot.slane %v1363, %v1745
        %1748 = vbcast.lane.b32.xlu0 %v1746, 256
        %v1749 = vpop.permute.xlu0 %1748
        %v1750 = vlaneseq
        %v1751 = vshrl.u32 %v1750, 7
        %v1752 = vsub.s32 7, %v1751
        %v1753 = vrot.slane %v1363, %v1752
        %1755 = vbcast.lane.b32.xlu0 %v1753, 256
        %v1756 = vpop.permute.xlu0 %1755
        %v1757 = vlaneseq
        %v1758 = vshrl.u32 %v1757, 7
        %v1759 = vsub.s32 0, %v1758
        %v1760 = vrot.slane %v1364, %v1759
        %1762 = vbcast.lane.b32.xlu0 %v1760, 256
        %v1763 = vpop.permute.xlu0 %1762
        %v1764 = vlaneseq
        %v1765 = vshrl.u32 %v1764, 7
        %v1766 = vsub.s32 1, %v1765
        %v1767 = vrot.slane %v1364, %v1766
        %1769 = vbcast.lane.b32.xlu0 %v1767, 256
        %v1770 = vpop.permute.xlu0 %1769
        %v1771 = vlaneseq
        %v1772 = vshrl.u32 %v1771, 7
        %v1773 = vsub.s32 2, %v1772
        %v1774 = vrot.slane %v1364, %v1773
        %1776 = vbcast.lane.b32.xlu0 %v1774, 256
        %v1777 = vpop.permute.xlu0 %1776
        %v1778 = vlaneseq
        %v1779 = vshrl.u32 %v1778, 7
        %v1780 = vsub.s32 3, %v1779
        %v1781 = vrot.slane %v1364, %v1780
        %1783 = vbcast.lane.b32.xlu0 %v1781, 256
        %v1784 = vpop.permute.xlu0 %1783
        %v1785 = vlaneseq
        %v1786 = vshrl.u32 %v1785, 7
        %v1787 = vsub.s32 4, %v1786
        %v1788 = vrot.slane %v1364, %v1787
        %1790 = vbcast.lane.b32.xlu0 %v1788, 256
        %v1791 = vpop.permute.xlu0 %1790
        %v1792 = vlaneseq
        %v1793 = vshrl.u32 %v1792, 7
        %v1794 = vsub.s32 5, %v1793
        %v1795 = vrot.slane %v1364, %v1794
        %1797 = vbcast.lane.b32.xlu0 %v1795, 256
        %v1798 = vpop.permute.xlu0 %1797
        %v1799 = vlaneseq
        %v1800 = vshrl.u32 %v1799, 7
        %v1801 = vsub.s32 6, %v1800
        %v1802 = vrot.slane %v1364, %v1801
        %1804 = vbcast.lane.b32.xlu0 %v1802, 256
        %v1805 = vpop.permute.xlu0 %1804
        %v1806 = vlaneseq
        %v1807 = vshrl.u32 %v1806, 7
        %v1808 = vsub.s32 7, %v1807
        %v1809 = vrot.slane %v1364, %v1808
        %1811 = vbcast.lane.b32.xlu0 %v1809, 256
        %v1812 = vpop.permute.xlu0 %1811
        %v1813 = vsel %vm631, %v1371, %v1595
        %v1814 = vsel %vm631, %v1378, %v1602
        %v1815 = vsel %vm631, %v1385, %v1609
        %v1816 = vsel %vm631, %v1392, %v1616
        %v1817 = vsel %vm631, %v1399, %v1623
        %v1818 = vsel %vm631, %v1406, %v1630
        %v1819 = vsel %vm631, %v1413, %v1637
        %v1820 = vsel %vm631, %v1420, %v1644
        %v1821 = vsel %vm631, %v1427, %v1651
        %v1822 = vsel %vm631, %v1434, %v1658
        %v1823 = vsel %vm631, %v1441, %v1665
        %v1824 = vsel %vm631, %v1448, %v1672
        %v1825 = vsel %vm631, %v1455, %v1679
        %v1826 = vsel %vm631, %v1462, %v1686
        %v1827 = vsel %vm631, %v1469, %v1693
        %v1828 = vsel %vm631, %v1476, %v1700
        %v1829 = vsel %vm631, %v1483, %v1707
        %v1830 = vsel %vm631, %v1490, %v1714
        %v1831 = vsel %vm631, %v1497, %v1721
        %v1832 = vsel %vm631, %v1504, %v1728
        %v1833 = vsel %vm631, %v1511, %v1735
        %v1834 = vsel %vm631, %v1518, %v1742
        %v1835 = vsel %vm631, %v1525, %v1749
        %v1836 = vsel %vm631, %v1532, %v1756
        %v1837 = vsel %vm631, %v1539, %v1763
        %v1838 = vsel %vm631, %v1546, %v1770
        %v1839 = vsel %vm631, %v1553, %v1777
        %v1840 = vsel %vm631, %v1560, %v1784
        %v1841 = vsel %vm631, %v1567, %v1791
        %v1842 = vsel %vm631, %v1574, %v1798
        %v1843 = vsel %vm631, %v1581, %v1805
        %v1844 = vsel %vm631, %v1588, %v1812
        %v1845 = vcombine.low %v1813, %v1815
        %v1846 = vcombine.high %v1813, %v1815
        %v1848 = vunpack.c.l.s4 1983009808
        %v1849 = vunpack.c.0.s8 %v1848
        %v1850 = vlaneseq
        %v1851 = vshrl.u32 %v1850, 7
        %v1852 = vsub.s32 %v1849, %v1851
        %v1853 = vrot.slane %v1845, %v1852
        %v1855 = vunpack.c.l.s4 1983009808
        %v1856 = vunpack.c.0.s8 %v1855
        %v1857 = vlaneseq
        %v1858 = vshrl.u32 %v1857, 7
        %v1859 = vsub.s32 %v1856, %v1858
        %v1860 = vrot.slane %v1846, %v1859
        %v1861 = vcombine.low %v1814, %v1816
        %v1862 = vcombine.high %v1814, %v1816
        %v1864 = vunpack.c.l.s4 1983009808
        %v1865 = vunpack.c.0.s8 %v1864
        %v1866 = vlaneseq
        %v1867 = vshrl.u32 %v1866, 7
        %v1868 = vsub.s32 %v1865, %v1867
        %v1869 = vrot.slane %v1861, %v1868
        %v1871 = vunpack.c.l.s4 1983009808
        %v1872 = vunpack.c.0.s8 %v1871
        %v1873 = vlaneseq
        %v1874 = vshrl.u32 %v1873, 7
        %v1875 = vsub.s32 %v1872, %v1874
        %v1876 = vrot.slane %v1862, %v1875
        %v1877 = vcombine.low %v1817, %v1819
        %v1878 = vcombine.high %v1817, %v1819
        %v1880 = vunpack.c.l.s4 1983009808
        %v1881 = vunpack.c.0.s8 %v1880
        %v1882 = vlaneseq
        %v1883 = vshrl.u32 %v1882, 7
        %v1884 = vsub.s32 %v1881, %v1883
        %v1885 = vrot.slane %v1877, %v1884
        %v1887 = vunpack.c.l.s4 1983009808
        %v1888 = vunpack.c.0.s8 %v1887
        %v1889 = vlaneseq
        %v1890 = vshrl.u32 %v1889, 7
        %v1891 = vsub.s32 %v1888, %v1890
        %v1892 = vrot.slane %v1878, %v1891
        %v1893 = vcombine.low %v1818, %v1820
        %v1894 = vcombine.high %v1818, %v1820
        %v1896 = vunpack.c.l.s4 1983009808
        %v1897 = vunpack.c.0.s8 %v1896
        %v1898 = vlaneseq
        %v1899 = vshrl.u32 %v1898, 7
        %v1900 = vsub.s32 %v1897, %v1899
        %v1901 = vrot.slane %v1893, %v1900
        %v1903 = vunpack.c.l.s4 1983009808
        %v1904 = vunpack.c.0.s8 %v1903
        %v1905 = vlaneseq
        %v1906 = vshrl.u32 %v1905, 7
        %v1907 = vsub.s32 %v1904, %v1906
        %v1908 = vrot.slane %v1894, %v1907
        %v1909 = vcombine.low %v1853, %v1869
        %v1910 = vcombine.high %v1853, %v1869
        %v1912 = vunpack.c.l.s4 1934713408
        %v1913 = vunpack.c.0.s8 %v1912
        %v1914 = vlaneseq
        %v1915 = vshrl.u32 %v1914, 7
        %v1916 = vsub.s32 %v1913, %v1915
        %v1917 = vrot.slane %v1909, %v1916
        %v1919 = vunpack.c.l.s4 1934713408
        %v1920 = vunpack.c.0.s8 %v1919
        %v1921 = vlaneseq
        %v1922 = vshrl.u32 %v1921, 7
        %v1923 = vsub.s32 %v1920, %v1922
        %v1924 = vrot.slane %v1910, %v1923
        %v1925 = vcombine.low %v1860, %v1876
        %v1926 = vcombine.high %v1860, %v1876
        %v1928 = vunpack.c.l.s4 1934713408
        %v1929 = vunpack.c.0.s8 %v1928
        %v1930 = vlaneseq
        %v1931 = vshrl.u32 %v1930, 7
        %v1932 = vsub.s32 %v1929, %v1931
        %v1933 = vrot.slane %v1925, %v1932
        %v1935 = vunpack.c.l.s4 1934713408
        %v1936 = vunpack.c.0.s8 %v1935
        %v1937 = vlaneseq
        %v1938 = vshrl.u32 %v1937, 7
        %v1939 = vsub.s32 %v1936, %v1938
        %v1940 = vrot.slane %v1926, %v1939
        %v1941 = vcombine.low %v1885, %v1901
        %v1942 = vcombine.high %v1885, %v1901
        %v1944 = vunpack.c.l.s4 1934713408
        %v1945 = vunpack.c.0.s8 %v1944
        %v1946 = vlaneseq
        %v1947 = vshrl.u32 %v1946, 7
        %v1948 = vsub.s32 %v1945, %v1947
        %v1949 = vrot.slane %v1941, %v1948
        %v1951 = vunpack.c.l.s4 1934713408
        %v1952 = vunpack.c.0.s8 %v1951
        %v1953 = vlaneseq
        %v1954 = vshrl.u32 %v1953, 7
        %v1955 = vsub.s32 %v1952, %v1954
        %v1956 = vrot.slane %v1942, %v1955
        %v1957 = vcombine.low %v1892, %v1908
        %v1958 = vcombine.high %v1892, %v1908
        %v1960 = vunpack.c.l.s4 1934713408
        %v1961 = vunpack.c.0.s8 %v1960
        %v1962 = vlaneseq
        %v1963 = vshrl.u32 %v1962, 7
        %v1964 = vsub.s32 %v1961, %v1963
        %v1965 = vrot.slane %v1957, %v1964
        %v1967 = vunpack.c.l.s4 1934713408
        %v1968 = vunpack.c.0.s8 %v1967
        %v1969 = vlaneseq
        %v1970 = vshrl.u32 %v1969, 7
        %v1971 = vsub.s32 %v1968, %v1970
        %v1972 = vrot.slane %v1958, %v1971
        %v1973 = vcombine.low %v1917, %v1949
        %v1974 = vcombine.high %v1917, %v1949
        %v1975 = vcombine.low %v1924, %v1956
        %v1976 = vcombine.high %v1924, %v1956
        %v1977 = vcombine.low %v1933, %v1965
        %v1978 = vcombine.high %v1933, %v1965
        %v1979 = vcombine.low %v1940, %v1972
        %v1980 = vcombine.high %v1940, %v1972
        %v1981 = vcombine.low %v1821, %v1823
        %v1982 = vcombine.high %v1821, %v1823
        %v1984 = vunpack.c.l.s4 1983009808
        %v1985 = vunpack.c.0.s8 %v1984
        %v1986 = vlaneseq
        %v1987 = vshrl.u32 %v1986, 7
        %v1988 = vsub.s32 %v1985, %v1987
        %v1989 = vrot.slane %v1981, %v1988
        %v1991 = vunpack.c.l.s4 1983009808
        %v1992 = vunpack.c.0.s8 %v1991
        %v1993 = vlaneseq
        %v1994 = vshrl.u32 %v1993, 7
        %v1995 = vsub.s32 %v1992, %v1994
        %v1996 = vrot.slane %v1982, %v1995
        %v1997 = vcombine.low %v1822, %v1824
        %v1998 = vcombine.high %v1822, %v1824
        %v2000 = vunpack.c.l.s4 1983009808
        %v2001 = vunpack.c.0.s8 %v2000
        %v2002 = vlaneseq
        %v2003 = vshrl.u32 %v2002, 7
        %v2004 = vsub.s32 %v2001, %v2003
        %v2005 = vrot.slane %v1997, %v2004
        %v2007 = vunpack.c.l.s4 1983009808
        %v2008 = vunpack.c.0.s8 %v2007
        %v2009 = vlaneseq
        %v2010 = vshrl.u32 %v2009, 7
        %v2011 = vsub.s32 %v2008, %v2010
        %v2012 = vrot.slane %v1998, %v2011
        %v2013 = vcombine.low %v1825, %v1827
        %v2014 = vcombine.high %v1825, %v1827
        %v2016 = vunpack.c.l.s4 1983009808
        %v2017 = vunpack.c.0.s8 %v2016
        %v2018 = vlaneseq
        %v2019 = vshrl.u32 %v2018, 7
        %v2020 = vsub.s32 %v2017, %v2019
        %v2021 = vrot.slane %v2013, %v2020
        %v2023 = vunpack.c.l.s4 1983009808
        %v2024 = vunpack.c.0.s8 %v2023
        %v2025 = vlaneseq
        %v2026 = vshrl.u32 %v2025, 7
        %v2027 = vsub.s32 %v2024, %v2026
        %v2028 = vrot.slane %v2014, %v2027
        %v2029 = vcombine.low %v1826, %v1828
        %v2030 = vcombine.high %v1826, %v1828
        %v2032 = vunpack.c.l.s4 1983009808
        %v2033 = vunpack.c.0.s8 %v2032
        %v2034 = vlaneseq
        %v2035 = vshrl.u32 %v2034, 7
        %v2036 = vsub.s32 %v2033, %v2035
        %v2037 = vrot.slane %v2029, %v2036
        %v2039 = vunpack.c.l.s4 1983009808
        %v2040 = vunpack.c.0.s8 %v2039
        %v2041 = vlaneseq
        %v2042 = vshrl.u32 %v2041, 7
        %v2043 = vsub.s32 %v2040, %v2042
        %v2044 = vrot.slane %v2030, %v2043
        %v2045 = vcombine.low %v1989, %v2005
        %v2046 = vcombine.high %v1989, %v2005
        %v2048 = vunpack.c.l.s4 1934713408
        %v2049 = vunpack.c.0.s8 %v2048
        %v2050 = vlaneseq
        %v2051 = vshrl.u32 %v2050, 7
        %v2052 = vsub.s32 %v2049, %v2051
        %v2053 = vrot.slane %v2045, %v2052
        %v2055 = vunpack.c.l.s4 1934713408
        %v2056 = vunpack.c.0.s8 %v2055
        %v2057 = vlaneseq
        %v2058 = vshrl.u32 %v2057, 7
        %v2059 = vsub.s32 %v2056, %v2058
        %v2060 = vrot.slane %v2046, %v2059
        %v2061 = vcombine.low %v1996, %v2012
        %v2062 = vcombine.high %v1996, %v2012
        %v2064 = vunpack.c.l.s4 1934713408
        %v2065 = vunpack.c.0.s8 %v2064
        %v2066 = vlaneseq
        %v2067 = vshrl.u32 %v2066, 7
        %v2068 = vsub.s32 %v2065, %v2067
        %v2069 = vrot.slane %v2061, %v2068
        %v2071 = vunpack.c.l.s4 1934713408
        %v2072 = vunpack.c.0.s8 %v2071
        %v2073 = vlaneseq
        %v2074 = vshrl.u32 %v2073, 7
        %v2075 = vsub.s32 %v2072, %v2074
        %v2076 = vrot.slane %v2062, %v2075
        %v2077 = vcombine.low %v2021, %v2037
        %v2078 = vcombine.high %v2021, %v2037
        %v2080 = vunpack.c.l.s4 1934713408
        %v2081 = vunpack.c.0.s8 %v2080
        %v2082 = vlaneseq
        %v2083 = vshrl.u32 %v2082, 7
        %v2084 = vsub.s32 %v2081, %v2083
        %v2085 = vrot.slane %v2077, %v2084
        %v2087 = vunpack.c.l.s4 1934713408
        %v2088 = vunpack.c.0.s8 %v2087
        %v2089 = vlaneseq
        %v2090 = vshrl.u32 %v2089, 7
        %v2091 = vsub.s32 %v2088, %v2090
        %v2092 = vrot.slane %v2078, %v2091
        %v2093 = vcombine.low %v2028, %v2044
        %v2094 = vcombine.high %v2028, %v2044
        %v2096 = vunpack.c.l.s4 1934713408
        %v2097 = vunpack.c.0.s8 %v2096
        %v2098 = vlaneseq
        %v2099 = vshrl.u32 %v2098, 7
        %v2100 = vsub.s32 %v2097, %v2099
        %v2101 = vrot.slane %v2093, %v2100
        %v2103 = vunpack.c.l.s4 1934713408
        %v2104 = vunpack.c.0.s8 %v2103
        %v2105 = vlaneseq
        %v2106 = vshrl.u32 %v2105, 7
        %v2107 = vsub.s32 %v2104, %v2106
        %v2108 = vrot.slane %v2094, %v2107
        %v2109 = vcombine.low %v2053, %v2085
        %v2110 = vcombine.high %v2053, %v2085
        %v2111 = vcombine.low %v2060, %v2092
        %v2112 = vcombine.high %v2060, %v2092
        %v2113 = vcombine.low %v2069, %v2101
        %v2114 = vcombine.high %v2069, %v2101
        %v2115 = vcombine.low %v2076, %v2108
        %v2116 = vcombine.high %v2076, %v2108
        %v2117 = vcombine.low %v1829, %v1831
        %v2118 = vcombine.high %v1829, %v1831
        %v2120 = vunpack.c.l.s4 1983009808
        %v2121 = vunpack.c.0.s8 %v2120
        %v2122 = vlaneseq
        %v2123 = vshrl.u32 %v2122, 7
        %v2124 = vsub.s32 %v2121, %v2123
        %v2125 = vrot.slane %v2117, %v2124
        %v2127 = vunpack.c.l.s4 1983009808
        %v2128 = vunpack.c.0.s8 %v2127
        %v2129 = vlaneseq
        %v2130 = vshrl.u32 %v2129, 7
        %v2131 = vsub.s32 %v2128, %v2130
        %v2132 = vrot.slane %v2118, %v2131
        %v2133 = vcombine.low %v1830, %v1832
        %v2134 = vcombine.high %v1830, %v1832
        %v2136 = vunpack.c.l.s4 1983009808
        %v2137 = vunpack.c.0.s8 %v2136
        %v2138 = vlaneseq
        %v2139 = vshrl.u32 %v2138, 7
        %v2140 = vsub.s32 %v2137, %v2139
        %v2141 = vrot.slane %v2133, %v2140
        %v2143 = vunpack.c.l.s4 1983009808
        %v2144 = vunpack.c.0.s8 %v2143
        %v2145 = vlaneseq
        %v2146 = vshrl.u32 %v2145, 7
        %v2147 = vsub.s32 %v2144, %v2146
        %v2148 = vrot.slane %v2134, %v2147
        %v2149 = vcombine.low %v1833, %v1835
        %v2150 = vcombine.high %v1833, %v1835
        %v2152 = vunpack.c.l.s4 1983009808
        %v2153 = vunpack.c.0.s8 %v2152
        %v2154 = vlaneseq
        %v2155 = vshrl.u32 %v2154, 7
        %v2156 = vsub.s32 %v2153, %v2155
        %v2157 = vrot.slane %v2149, %v2156
        %v2159 = vunpack.c.l.s4 1983009808
        %v2160 = vunpack.c.0.s8 %v2159
        %v2161 = vlaneseq
        %v2162 = vshrl.u32 %v2161, 7
        %v2163 = vsub.s32 %v2160, %v2162
        %v2164 = vrot.slane %v2150, %v2163
        %v2165 = vcombine.low %v1834, %v1836
        %v2166 = vcombine.high %v1834, %v1836
        %v2168 = vunpack.c.l.s4 1983009808
        %v2169 = vunpack.c.0.s8 %v2168
        %v2170 = vlaneseq
        %v2171 = vshrl.u32 %v2170, 7
        %v2172 = vsub.s32 %v2169, %v2171
        %v2173 = vrot.slane %v2165, %v2172
        %v2175 = vunpack.c.l.s4 1983009808
        %v2176 = vunpack.c.0.s8 %v2175
        %v2177 = vlaneseq
        %v2178 = vshrl.u32 %v2177, 7
        %v2179 = vsub.s32 %v2176, %v2178
        %v2180 = vrot.slane %v2166, %v2179
        %v2181 = vcombine.low %v2125, %v2141
        %v2182 = vcombine.high %v2125, %v2141
        %v2184 = vunpack.c.l.s4 1934713408
        %v2185 = vunpack.c.0.s8 %v2184
        %v2186 = vlaneseq
        %v2187 = vshrl.u32 %v2186, 7
        %v2188 = vsub.s32 %v2185, %v2187
        %v2189 = vrot.slane %v2181, %v2188
        %v2191 = vunpack.c.l.s4 1934713408
        %v2192 = vunpack.c.0.s8 %v2191
        %v2193 = vlaneseq
        %v2194 = vshrl.u32 %v2193, 7
        %v2195 = vsub.s32 %v2192, %v2194
        %v2196 = vrot.slane %v2182, %v2195
        %v2197 = vcombine.low %v2132, %v2148
        %v2198 = vcombine.high %v2132, %v2148
        %v2200 = vunpack.c.l.s4 1934713408
        %v2201 = vunpack.c.0.s8 %v2200
        %v2202 = vlaneseq
        %v2203 = vshrl.u32 %v2202, 7
        %v2204 = vsub.s32 %v2201, %v2203
        %v2205 = vrot.slane %v2197, %v2204
        %v2207 = vunpack.c.l.s4 1934713408
        %v2208 = vunpack.c.0.s8 %v2207
        %v2209 = vlaneseq
        %v2210 = vshrl.u32 %v2209, 7
        %v2211 = vsub.s32 %v2208, %v2210
        %v2212 = vrot.slane %v2198, %v2211
        %v2213 = vcombine.low %v2157, %v2173
        %v2214 = vcombine.high %v2157, %v2173
        %v2216 = vunpack.c.l.s4 1934713408
        %v2217 = vunpack.c.0.s8 %v2216
        %v2218 = vlaneseq
        %v2219 = vshrl.u32 %v2218, 7
        %v2220 = vsub.s32 %v2217, %v2219
        %v2221 = vrot.slane %v2213, %v2220
        %v2223 = vunpack.c.l.s4 1934713408
        %v2224 = vunpack.c.0.s8 %v2223
        %v2225 = vlaneseq
        %v2226 = vshrl.u32 %v2225, 7
        %v2227 = vsub.s32 %v2224, %v2226
        %v2228 = vrot.slane %v2214, %v2227
        %v2229 = vcombine.low %v2164, %v2180
        %v2230 = vcombine.high %v2164, %v2180
        %v2232 = vunpack.c.l.s4 1934713408
        %v2233 = vunpack.c.0.s8 %v2232
        %v2234 = vlaneseq
        %v2235 = vshrl.u32 %v2234, 7
        %v2236 = vsub.s32 %v2233, %v2235
        %v2237 = vrot.slane %v2229, %v2236
        %v2239 = vunpack.c.l.s4 1934713408
        %v2240 = vunpack.c.0.s8 %v2239
        %v2241 = vlaneseq
        %v2242 = vshrl.u32 %v2241, 7
        %v2243 = vsub.s32 %v2240, %v2242
        %v2244 = vrot.slane %v2230, %v2243
        %v2245 = vcombine.low %v2189, %v2221
        %v2246 = vcombine.high %v2189, %v2221
        %v2247 = vcombine.low %v2196, %v2228
        %v2248 = vcombine.high %v2196, %v2228
        %v2249 = vcombine.low %v2205, %v2237
        %v2250 = vcombine.high %v2205, %v2237
        %v2251 = vcombine.low %v2212, %v2244
        %v2252 = vcombine.high %v2212, %v2244
        %v2253 = vcombine.low %v1837, %v1839
        %v2254 = vcombine.high %v1837, %v1839
        %v2256 = vunpack.c.l.s4 1983009808
        %v2257 = vunpack.c.0.s8 %v2256
        %v2258 = vlaneseq
        %v2259 = vshrl.u32 %v2258, 7
        %v2260 = vsub.s32 %v2257, %v2259
        %v2261 = vrot.slane %v2253, %v2260
        %v2263 = vunpack.c.l.s4 1983009808
        %v2264 = vunpack.c.0.s8 %v2263
        %v2265 = vlaneseq
        %v2266 = vshrl.u32 %v2265, 7
        %v2267 = vsub.s32 %v2264, %v2266
        %v2268 = vrot.slane %v2254, %v2267
        %v2269 = vcombine.low %v1838, %v1840
        %v2270 = vcombine.high %v1838, %v1840
        %v2272 = vunpack.c.l.s4 1983009808
        %v2273 = vunpack.c.0.s8 %v2272
        %v2274 = vlaneseq
        %v2275 = vshrl.u32 %v2274, 7
        %v2276 = vsub.s32 %v2273, %v2275
        %v2277 = vrot.slane %v2269, %v2276
        %v2279 = vunpack.c.l.s4 1983009808
        %v2280 = vunpack.c.0.s8 %v2279
        %v2281 = vlaneseq
        %v2282 = vshrl.u32 %v2281, 7
        %v2283 = vsub.s32 %v2280, %v2282
        %v2284 = vrot.slane %v2270, %v2283
        %v2285 = vcombine.low %v1841, %v1843
        %v2286 = vcombine.high %v1841, %v1843
        %v2288 = vunpack.c.l.s4 1983009808
        %v2289 = vunpack.c.0.s8 %v2288
        %v2290 = vlaneseq
        %v2291 = vshrl.u32 %v2290, 7
        %v2292 = vsub.s32 %v2289, %v2291
        %v2293 = vrot.slane %v2285, %v2292
        %v2295 = vunpack.c.l.s4 1983009808
        %v2296 = vunpack.c.0.s8 %v2295
        %v2297 = vlaneseq
        %v2298 = vshrl.u32 %v2297, 7
        %v2299 = vsub.s32 %v2296, %v2298
        %v2300 = vrot.slane %v2286, %v2299
        %v2301 = vcombine.low %v1842, %v1844
        %v2302 = vcombine.high %v1842, %v1844
        %v2304 = vunpack.c.l.s4 1983009808
        %v2305 = vunpack.c.0.s8 %v2304
        %v2306 = vlaneseq
        %v2307 = vshrl.u32 %v2306, 7
        %v2308 = vsub.s32 %v2305, %v2307
        %v2309 = vrot.slane %v2301, %v2308
        %v2311 = vunpack.c.l.s4 1983009808
        %v2312 = vunpack.c.0.s8 %v2311
        %v2313 = vlaneseq
        %v2314 = vshrl.u32 %v2313, 7
        %v2315 = vsub.s32 %v2312, %v2314
        %v2316 = vrot.slane %v2302, %v2315
        %v2317 = vcombine.low %v2261, %v2277
        %v2318 = vcombine.high %v2261, %v2277
        %v2320 = vunpack.c.l.s4 1934713408
        %v2321 = vunpack.c.0.s8 %v2320
        %v2322 = vlaneseq
        %v2323 = vshrl.u32 %v2322, 7
        %v2324 = vsub.s32 %v2321, %v2323
        %v2325 = vrot.slane %v2317, %v2324
        %v2327 = vunpack.c.l.s4 1934713408
        %v2328 = vunpack.c.0.s8 %v2327
        %v2329 = vlaneseq
        %v2330 = vshrl.u32 %v2329, 7
        %v2331 = vsub.s32 %v2328, %v2330
        %v2332 = vrot.slane %v2318, %v2331
        %v2333 = vcombine.low %v2268, %v2284
        %v2334 = vcombine.high %v2268, %v2284
        %v2336 = vunpack.c.l.s4 1934713408
        %v2337 = vunpack.c.0.s8 %v2336
        %v2338 = vlaneseq
        %v2339 = vshrl.u32 %v2338, 7
        %v2340 = vsub.s32 %v2337, %v2339
        %v2341 = vrot.slane %v2333, %v2340
        %v2343 = vunpack.c.l.s4 1934713408
        %v2344 = vunpack.c.0.s8 %v2343
        %v2345 = vlaneseq
        %v2346 = vshrl.u32 %v2345, 7
        %v2347 = vsub.s32 %v2344, %v2346
        %v2348 = vrot.slane %v2334, %v2347
        %v2349 = vcombine.low %v2293, %v2309
        %v2350 = vcombine.high %v2293, %v2309
        %v2352 = vunpack.c.l.s4 1934713408
        %v2353 = vunpack.c.0.s8 %v2352
        %v2354 = vlaneseq
        %v2355 = vshrl.u32 %v2354, 7
        %v2356 = vsub.s32 %v2353, %v2355
        %v2357 = vrot.slane %v2349, %v2356
        %v2359 = vunpack.c.l.s4 1934713408
        %v2360 = vunpack.c.0.s8 %v2359
        %v2361 = vlaneseq
        %v2362 = vshrl.u32 %v2361, 7
        %v2363 = vsub.s32 %v2360, %v2362
        %v2364 = vrot.slane %v2350, %v2363
        %v2365 = vcombine.low %v2300, %v2316
        %v2366 = vcombine.high %v2300, %v2316
        %v2368 = vunpack.c.l.s4 1934713408
        %v2369 = vunpack.c.0.s8 %v2368
        %v2370 = vlaneseq
        %v2371 = vshrl.u32 %v2370, 7
        %v2372 = vsub.s32 %v2369, %v2371
        %v2373 = vrot.slane %v2365, %v2372
        %v2375 = vunpack.c.l.s4 1934713408
        %v2376 = vunpack.c.0.s8 %v2375
        %v2377 = vlaneseq
        %v2378 = vshrl.u32 %v2377, 7
        %v2379 = vsub.s32 %v2376, %v2378
        %v2380 = vrot.slane %v2366, %v2379
        %v2381 = vcombine.low %v2325, %v2357
        %v2382 = vcombine.high %v2325, %v2357
        %v2383 = vcombine.low %v2332, %v2364
        %v2384 = vcombine.high %v2332, %v2364
        %v2385 = vcombine.low %v2341, %v2373
        %v2386 = vcombine.high %v2341, %v2373
        %v2387 = vcombine.low %v2348, %v2380
        %v2388 = vcombine.high %v2348, %v2380
        %2393 = vrot.lane.b32.xlu0 %v1974, 2
        %v2394 = vpop.permute.xlu0 %2393
        %2395 = vrot.lane.b32.xlu0 %v2110, 2
        %v2396 = vpop.permute.xlu0 %2395
        %2397 = vrot.lane.b32.xlu0 %v2246, 2
        %v2398 = vpop.permute.xlu0 %2397
        %2399 = vrot.lane.b32.xlu0 %v2382, 2
        %v2400 = vpop.permute.xlu0 %2399
        %2409 = vrot.lane.b32.xlu0 %v1975, 4
        %v2410 = vpop.permute.xlu0 %2409
        %2411 = vrot.lane.b32.xlu0 %v2111, 4
        %v2412 = vpop.permute.xlu0 %2411
        %2413 = vrot.lane.b32.xlu0 %v2247, 4
        %v2414 = vpop.permute.xlu0 %2413
        %2415 = vrot.lane.b32.xlu0 %v2383, 4
        %v2416 = vpop.permute.xlu0 %2415
        %2425 = vrot.lane.b32.xlu0 %v1976, 6
        %v2426 = vpop.permute.xlu0 %2425
        %2427 = vrot.lane.b32.xlu0 %v2112, 6
        %v2428 = vpop.permute.xlu0 %2427
        %2429 = vrot.lane.b32.xlu0 %v2248, 6
        %v2430 = vpop.permute.xlu0 %2429
        %2431 = vrot.lane.b32.xlu0 %v2384, 6
        %v2432 = vpop.permute.xlu0 %2431
        %2441 = vrot.lane.b32.xlu0 %v1977, 8
        %v2442 = vpop.permute.xlu0 %2441
        %2443 = vrot.lane.b32.xlu0 %v2113, 8
        %v2444 = vpop.permute.xlu0 %2443
        %2445 = vrot.lane.b32.xlu0 %v2249, 8
        %v2446 = vpop.permute.xlu0 %2445
        %2447 = vrot.lane.b32.xlu0 %v2385, 8
        %v2448 = vpop.permute.xlu0 %2447
        %2457 = vrot.lane.b32.xlu0 %v1978, 10
        %v2458 = vpop.permute.xlu0 %2457
        %2459 = vrot.lane.b32.xlu0 %v2114, 10
        %v2460 = vpop.permute.xlu0 %2459
        %2461 = vrot.lane.b32.xlu0 %v2250, 10
        %v2462 = vpop.permute.xlu0 %2461
        %2463 = vrot.lane.b32.xlu0 %v2386, 10
        %v2464 = vpop.permute.xlu0 %2463
        %2473 = vrot.lane.b32.xlu0 %v1979, 12
        %v2474 = vpop.permute.xlu0 %2473
        %2475 = vrot.lane.b32.xlu0 %v2115, 12
        %v2476 = vpop.permute.xlu0 %2475
        %2477 = vrot.lane.b32.xlu0 %v2251, 12
        %v2478 = vpop.permute.xlu0 %2477
        %2479 = vrot.lane.b32.xlu0 %v2387, 12
        %v2480 = vpop.permute.xlu0 %2479
        %2489 = vrot.lane.b32.xlu0 %v1980, 14
        %v2490 = vpop.permute.xlu0 %2489
        %2491 = vrot.lane.b32.xlu0 %v2116, 14
        %v2492 = vpop.permute.xlu0 %2491
        %2493 = vrot.lane.b32.xlu0 %v2252, 14
        %v2494 = vpop.permute.xlu0 %2493
        %2495 = vrot.lane.b32.xlu0 %v2388, 14
        %v2496 = vpop.permute.xlu0 %2495
        %v2501 = vsel %vm1320, %v1973, %v2394
        %v2502 = vsel %vm1320, %v2109, %v2396
        %v2503 = vsel %vm1320, %v2245, %v2398
        %v2504 = vsel %vm1320, %v2381, %v2400
        %v2505 = vsel %vm1325, %v2501, %v2410
        %v2506 = vsel %vm1325, %v2502, %v2412
        %v2507 = vsel %vm1325, %v2503, %v2414
        %v2508 = vsel %vm1325, %v2504, %v2416
        %v2509 = vsel %vm1330, %v2505, %v2426
        %v2510 = vsel %vm1330, %v2506, %v2428
        %v2511 = vsel %vm1330, %v2507, %v2430
        %v2512 = vsel %vm1330, %v2508, %v2432
        %v2513 = vsel %vm1335, %v2509, %v2442
        %v2514 = vsel %vm1335, %v2510, %v2444
        %v2515 = vsel %vm1335, %v2511, %v2446
        %v2516 = vsel %vm1335, %v2512, %v2448
        %v2517 = vsel %vm1340, %v2513, %v2458
        %v2518 = vsel %vm1340, %v2514, %v2460
        %v2519 = vsel %vm1340, %v2515, %v2462
        %v2520 = vsel %vm1340, %v2516, %v2464
        %v2521 = vsel %vm1345, %v2517, %v2474
        %v2522 = vsel %vm1345, %v2518, %v2476
        %v2523 = vsel %vm1345, %v2519, %v2478
        %v2524 = vsel %vm1345, %v2520, %v2480
        %v2525 = vsel %vm1350, %v2521, %v2490
        %v2526 = vsel %vm1350, %v2522, %v2492
        %v2527 = vsel %vm1350, %v2523, %v2494
        %v2528 = vsel %vm1350, %v2524, %v2496
        %2533 = vrot.lane.b32.xlu0 %v2525, 16
        %v2534 = vpop.permute.xlu0 %2533
        %2535 = vrot.lane.b32.xlu0 %v2526, 16
        %v2536 = vpop.permute.xlu0 %2535
        %2537 = vrot.lane.b32.xlu0 %v2527, 16
        %v2538 = vpop.permute.xlu0 %2537
        %2539 = vrot.lane.b32.xlu0 %v2528, 16
        %v2540 = vpop.permute.xlu0 %2539
        %vm2545 = vcmask 130048
        %v2546 = vsel %vm2545, %v1351, %v2534
        %v2547 = vsel %vm2545, %v1352, %v2536
        %v2548 = vsel %vm2545, %v1353, %v2538
        %v2549 = vsel %vm2545, %v1354, %v2540
        %s2550 = scalar_lea.vmem %s170, 128
        %v2551 = vld [vmem:[%s2550] sm:$0xff]
        %v2552 = vld [vmem:[%s2550 + $0x8] sm:$0xff]
        %v2553 = vld [vmem:[%s2550 + $0x10] sm:$0xff]
        %v2554 = vld [vmem:[%s2550 + $0x18] sm:$0xff]
        %s2555 = scalar_lea.vmem %s170, 160
        %v2556 = vld [vmem:[%s2555] sm:$0xff]
        %v2557 = vld [vmem:[%s2555 + $0x8] sm:$0xff]
        %v2558 = vld [vmem:[%s2555 + $0x10] sm:$0xff]
        %v2559 = vld [vmem:[%s2555 + $0x18] sm:$0xff]
        %v2560 = vlaneseq
        %v2561 = vshrl.u32 %v2560, 7
        %v2562 = vsub.s32 0, %v2561
        %v2563 = vrot.slane %v2551, %v2562
        %2565 = vbcast.lane.b32.xlu0 %v2563, 256
        %v2566 = vpop.permute.xlu0 %2565
        %v2567 = vlaneseq
        %v2568 = vshrl.u32 %v2567, 7
        %v2569 = vsub.s32 1, %v2568
        %v2570 = vrot.slane %v2551, %v2569
        %2572 = vbcast.lane.b32.xlu0 %v2570, 256
        %v2573 = vpop.permute.xlu0 %2572
        %v2574 = vlaneseq
        %v2575 = vshrl.u32 %v2574, 7
        %v2576 = vsub.s32 2, %v2575
        %v2577 = vrot.slane %v2551, %v2576
        %2579 = vbcast.lane.b32.xlu0 %v2577, 256
        %v2580 = vpop.permute.xlu0 %2579
        %v2581 = vlaneseq
        %v2582 = vshrl.u32 %v2581, 7
        %v2583 = vsub.s32 3, %v2582
        %v2584 = vrot.slane %v2551, %v2583
        %2586 = vbcast.lane.b32.xlu0 %v2584, 256
        %v2587 = vpop.permute.xlu0 %2586
        %v2588 = vlaneseq
        %v2589 = vshrl.u32 %v2588, 7
        %v2590 = vsub.s32 4, %v2589
        %v2591 = vrot.slane %v2551, %v2590
        %2593 = vbcast.lane.b32.xlu0 %v2591, 256
        %v2594 = vpop.permute.xlu0 %2593
        %v2595 = vlaneseq
        %v2596 = vshrl.u32 %v2595, 7
        %v2597 = vsub.s32 5, %v2596
        %v2598 = vrot.slane %v2551, %v2597
        %2600 = vbcast.lane.b32.xlu0 %v2598, 256
        %v2601 = vpop.permute.xlu0 %2600
        %v2602 = vlaneseq
        %v2603 = vshrl.u32 %v2602, 7
        %v2604 = vsub.s32 6, %v2603
        %v2605 = vrot.slane %v2551, %v2604
        %2607 = vbcast.lane.b32.xlu0 %v2605, 256
        %v2608 = vpop.permute.xlu0 %2607
        %v2609 = vlaneseq
        %v2610 = vshrl.u32 %v2609, 7
        %v2611 = vsub.s32 7, %v2610
        %v2612 = vrot.slane %v2551, %v2611
        %2614 = vbcast.lane.b32.xlu0 %v2612, 256
        %v2615 = vpop.permute.xlu0 %2614
        %v2616 = vlaneseq
        %v2617 = vshrl.u32 %v2616, 7
        %v2618 = vsub.s32 0, %v2617
        %v2619 = vrot.slane %v2552, %v2618
        %2621 = vbcast.lane.b32.xlu0 %v2619, 256
        %v2622 = vpop.permute.xlu0 %2621
        %v2623 = vlaneseq
        %v2624 = vshrl.u32 %v2623, 7
        %v2625 = vsub.s32 1, %v2624
        %v2626 = vrot.slane %v2552, %v2625
        %2628 = vbcast.lane.b32.xlu0 %v2626, 256
        %v2629 = vpop.permute.xlu0 %2628
        %v2630 = vlaneseq
        %v2631 = vshrl.u32 %v2630, 7
        %v2632 = vsub.s32 2, %v2631
        %v2633 = vrot.slane %v2552, %v2632
        %2635 = vbcast.lane.b32.xlu0 %v2633, 256
        %v2636 = vpop.permute.xlu0 %2635
        %v2637 = vlaneseq
        %v2638 = vshrl.u32 %v2637, 7
        %v2639 = vsub.s32 3, %v2638
        %v2640 = vrot.slane %v2552, %v2639
        %2642 = vbcast.lane.b32.xlu0 %v2640, 256
        %v2643 = vpop.permute.xlu0 %2642
        %v2644 = vlaneseq
        %v2645 = vshrl.u32 %v2644, 7
        %v2646 = vsub.s32 4, %v2645
        %v2647 = vrot.slane %v2552, %v2646
        %2649 = vbcast.lane.b32.xlu0 %v2647, 256
        %v2650 = vpop.permute.xlu0 %2649
        %v2651 = vlaneseq
        %v2652 = vshrl.u32 %v2651, 7
        %v2653 = vsub.s32 5, %v2652
        %v2654 = vrot.slane %v2552, %v2653
        %2656 = vbcast.lane.b32.xlu0 %v2654, 256
        %v2657 = vpop.permute.xlu0 %2656
        %v2658 = vlaneseq
        %v2659 = vshrl.u32 %v2658, 7
        %v2660 = vsub.s32 6, %v2659
        %v2661 = vrot.slane %v2552, %v2660
        %2663 = vbcast.lane.b32.xlu0 %v2661, 256
        %v2664 = vpop.permute.xlu0 %2663
        %v2665 = vlaneseq
        %v2666 = vshrl.u32 %v2665, 7
        %v2667 = vsub.s32 7, %v2666
        %v2668 = vrot.slane %v2552, %v2667
        %2670 = vbcast.lane.b32.xlu0 %v2668, 256
        %v2671 = vpop.permute.xlu0 %2670
        %v2672 = vlaneseq
        %v2673 = vshrl.u32 %v2672, 7
        %v2674 = vsub.s32 0, %v2673
        %v2675 = vrot.slane %v2553, %v2674
        %2677 = vbcast.lane.b32.xlu0 %v2675, 256
        %v2678 = vpop.permute.xlu0 %2677
        %v2679 = vlaneseq
        %v2680 = vshrl.u32 %v2679, 7
        %v2681 = vsub.s32 1, %v2680
        %v2682 = vrot.slane %v2553, %v2681
        %2684 = vbcast.lane.b32.xlu0 %v2682, 256
        %v2685 = vpop.permute.xlu0 %2684
        %v2686 = vlaneseq
        %v2687 = vshrl.u32 %v2686, 7
        %v2688 = vsub.s32 2, %v2687
        %v2689 = vrot.slane %v2553, %v2688
        %2691 = vbcast.lane.b32.xlu0 %v2689, 256
        %v2692 = vpop.permute.xlu0 %2691
        %v2693 = vlaneseq
        %v2694 = vshrl.u32 %v2693, 7
        %v2695 = vsub.s32 3, %v2694
        %v2696 = vrot.slane %v2553, %v2695
        %2698 = vbcast.lane.b32.xlu0 %v2696, 256
        %v2699 = vpop.permute.xlu0 %2698
        %v2700 = vlaneseq
        %v2701 = vshrl.u32 %v2700, 7
        %v2702 = vsub.s32 4, %v2701
        %v2703 = vrot.slane %v2553, %v2702
        %2705 = vbcast.lane.b32.xlu0 %v2703, 256
        %v2706 = vpop.permute.xlu0 %2705
        %v2707 = vlaneseq
        %v2708 = vshrl.u32 %v2707, 7
        %v2709 = vsub.s32 5, %v2708
        %v2710 = vrot.slane %v2553, %v2709
        %2712 = vbcast.lane.b32.xlu0 %v2710, 256
        %v2713 = vpop.permute.xlu0 %2712
        %v2714 = vlaneseq
        %v2715 = vshrl.u32 %v2714, 7
        %v2716 = vsub.s32 6, %v2715
        %v2717 = vrot.slane %v2553, %v2716
        %2719 = vbcast.lane.b32.xlu0 %v2717, 256
        %v2720 = vpop.permute.xlu0 %2719
        %v2721 = vlaneseq
        %v2722 = vshrl.u32 %v2721, 7
        %v2723 = vsub.s32 7, %v2722
        %v2724 = vrot.slane %v2553, %v2723
        %2726 = vbcast.lane.b32.xlu0 %v2724, 256
        %v2727 = vpop.permute.xlu0 %2726
        %v2728 = vlaneseq
        %v2729 = vshrl.u32 %v2728, 7
        %v2730 = vsub.s32 0, %v2729
        %v2731 = vrot.slane %v2554, %v2730
        %2733 = vbcast.lane.b32.xlu0 %v2731, 256
        %v2734 = vpop.permute.xlu0 %2733
        %v2735 = vlaneseq
        %v2736 = vshrl.u32 %v2735, 7
        %v2737 = vsub.s32 1, %v2736
        %v2738 = vrot.slane %v2554, %v2737
        %2740 = vbcast.lane.b32.xlu0 %v2738, 256
        %v2741 = vpop.permute.xlu0 %2740
        %v2742 = vlaneseq
        %v2743 = vshrl.u32 %v2742, 7
        %v2744 = vsub.s32 2, %v2743
        %v2745 = vrot.slane %v2554, %v2744
        %2747 = vbcast.lane.b32.xlu0 %v2745, 256
        %v2748 = vpop.permute.xlu0 %2747
        %v2749 = vlaneseq
        %v2750 = vshrl.u32 %v2749, 7
        %v2751 = vsub.s32 3, %v2750
        %v2752 = vrot.slane %v2554, %v2751
        %2754 = vbcast.lane.b32.xlu0 %v2752, 256
        %v2755 = vpop.permute.xlu0 %2754
        %v2756 = vlaneseq
        %v2757 = vshrl.u32 %v2756, 7
        %v2758 = vsub.s32 4, %v2757
        %v2759 = vrot.slane %v2554, %v2758
        %2761 = vbcast.lane.b32.xlu0 %v2759, 256
        %v2762 = vpop.permute.xlu0 %2761
        %v2763 = vlaneseq
        %v2764 = vshrl.u32 %v2763, 7
        %v2765 = vsub.s32 5, %v2764
        %v2766 = vrot.slane %v2554, %v2765
        %2768 = vbcast.lane.b32.xlu0 %v2766, 256
        %v2769 = vpop.permute.xlu0 %2768
        %v2770 = vlaneseq
        %v2771 = vshrl.u32 %v2770, 7
        %v2772 = vsub.s32 6, %v2771
        %v2773 = vrot.slane %v2554, %v2772
        %2775 = vbcast.lane.b32.xlu0 %v2773, 256
        %v2776 = vpop.permute.xlu0 %2775
        %v2777 = vlaneseq
        %v2778 = vshrl.u32 %v2777, 7
        %v2779 = vsub.s32 7, %v2778
        %v2780 = vrot.slane %v2554, %v2779
        %2782 = vbcast.lane.b32.xlu0 %v2780, 256
        %v2783 = vpop.permute.xlu0 %2782
        %v2784 = vlaneseq
        %v2785 = vshrl.u32 %v2784, 7
        %v2786 = vsub.s32 0, %v2785
        %v2787 = vrot.slane %v2556, %v2786
        %2789 = vbcast.lane.b32.xlu0 %v2787, 256
        %v2790 = vpop.permute.xlu0 %2789
        %v2791 = vlaneseq
        %v2792 = vshrl.u32 %v2791, 7
        %v2793 = vsub.s32 1, %v2792
        %v2794 = vrot.slane %v2556, %v2793
        %2796 = vbcast.lane.b32.xlu0 %v2794, 256
        %v2797 = vpop.permute.xlu0 %2796
        %v2798 = vlaneseq
        %v2799 = vshrl.u32 %v2798, 7
        %v2800 = vsub.s32 2, %v2799
        %v2801 = vrot.slane %v2556, %v2800
        %2803 = vbcast.lane.b32.xlu0 %v2801, 256
        %v2804 = vpop.permute.xlu0 %2803
        %v2805 = vlaneseq
        %v2806 = vshrl.u32 %v2805, 7
        %v2807 = vsub.s32 3, %v2806
        %v2808 = vrot.slane %v2556, %v2807
        %2810 = vbcast.lane.b32.xlu0 %v2808, 256
        %v2811 = vpop.permute.xlu0 %2810
        %v2812 = vlaneseq
        %v2813 = vshrl.u32 %v2812, 7
        %v2814 = vsub.s32 4, %v2813
        %v2815 = vrot.slane %v2556, %v2814
        %2817 = vbcast.lane.b32.xlu0 %v2815, 256
        %v2818 = vpop.permute.xlu0 %2817
        %v2819 = vlaneseq
        %v2820 = vshrl.u32 %v2819, 7
        %v2821 = vsub.s32 5, %v2820
        %v2822 = vrot.slane %v2556, %v2821
        %2824 = vbcast.lane.b32.xlu0 %v2822, 256
        %v2825 = vpop.permute.xlu0 %2824
        %v2826 = vlaneseq
        %v2827 = vshrl.u32 %v2826, 7
        %v2828 = vsub.s32 6, %v2827
        %v2829 = vrot.slane %v2556, %v2828
        %2831 = vbcast.lane.b32.xlu0 %v2829, 256
        %v2832 = vpop.permute.xlu0 %2831
        %v2833 = vlaneseq
        %v2834 = vshrl.u32 %v2833, 7
        %v2835 = vsub.s32 7, %v2834
        %v2836 = vrot.slane %v2556, %v2835
        %2838 = vbcast.lane.b32.xlu0 %v2836, 256
        %v2839 = vpop.permute.xlu0 %2838
        %v2840 = vlaneseq
        %v2841 = vshrl.u32 %v2840, 7
        %v2842 = vsub.s32 0, %v2841
        %v2843 = vrot.slane %v2557, %v2842
        %2845 = vbcast.lane.b32.xlu0 %v2843, 256
        %v2846 = vpop.permute.xlu0 %2845
        %v2847 = vlaneseq
        %v2848 = vshrl.u32 %v2847, 7
        %v2849 = vsub.s32 1, %v2848
        %v2850 = vrot.slane %v2557, %v2849
        %2852 = vbcast.lane.b32.xlu0 %v2850, 256
        %v2853 = vpop.permute.xlu0 %2852
        %v2854 = vlaneseq
        %v2855 = vshrl.u32 %v2854, 7
        %v2856 = vsub.s32 2, %v2855
        %v2857 = vrot.slane %v2557, %v2856
        %2859 = vbcast.lane.b32.xlu0 %v2857, 256
        %v2860 = vpop.permute.xlu0 %2859
        %v2861 = vlaneseq
        %v2862 = vshrl.u32 %v2861, 7
        %v2863 = vsub.s32 3, %v2862
        %v2864 = vrot.slane %v2557, %v2863
        %2866 = vbcast.lane.b32.xlu0 %v2864, 256
        %v2867 = vpop.permute.xlu0 %2866
        %v2868 = vlaneseq
        %v2869 = vshrl.u32 %v2868, 7
        %v2870 = vsub.s32 4, %v2869
        %v2871 = vrot.slane %v2557, %v2870
        %2873 = vbcast.lane.b32.xlu0 %v2871, 256
        %v2874 = vpop.permute.xlu0 %2873
        %v2875 = vlaneseq
        %v2876 = vshrl.u32 %v2875, 7
        %v2877 = vsub.s32 5, %v2876
        %v2878 = vrot.slane %v2557, %v2877
        %2880 = vbcast.lane.b32.xlu0 %v2878, 256
        %v2881 = vpop.permute.xlu0 %2880
        %v2882 = vlaneseq
        %v2883 = vshrl.u32 %v2882, 7
        %v2884 = vsub.s32 6, %v2883
        %v2885 = vrot.slane %v2557, %v2884
        %2887 = vbcast.lane.b32.xlu0 %v2885, 256
        %v2888 = vpop.permute.xlu0 %2887
        %v2889 = vlaneseq
        %v2890 = vshrl.u32 %v2889, 7
        %v2891 = vsub.s32 7, %v2890
        %v2892 = vrot.slane %v2557, %v2891
        %2894 = vbcast.lane.b32.xlu0 %v2892, 256
        %v2895 = vpop.permute.xlu0 %2894
        %v2896 = vlaneseq
        %v2897 = vshrl.u32 %v2896, 7
        %v2898 = vsub.s32 0, %v2897
        %v2899 = vrot.slane %v2558, %v2898
        %2901 = vbcast.lane.b32.xlu0 %v2899, 256
        %v2902 = vpop.permute.xlu0 %2901
        %v2903 = vlaneseq
        %v2904 = vshrl.u32 %v2903, 7
        %v2905 = vsub.s32 1, %v2904
        %v2906 = vrot.slane %v2558, %v2905
        %2908 = vbcast.lane.b32.xlu0 %v2906, 256
        %v2909 = vpop.permute.xlu0 %2908
        %v2910 = vlaneseq
        %v2911 = vshrl.u32 %v2910, 7
        %v2912 = vsub.s32 2, %v2911
        %v2913 = vrot.slane %v2558, %v2912
        %2915 = vbcast.lane.b32.xlu0 %v2913, 256
        %v2916 = vpop.permute.xlu0 %2915
        %v2917 = vlaneseq
        %v2918 = vshrl.u32 %v2917, 7
        %v2919 = vsub.s32 3, %v2918
        %v2920 = vrot.slane %v2558, %v2919
        %2922 = vbcast.lane.b32.xlu0 %v2920, 256
        %v2923 = vpop.permute.xlu0 %2922
        %v2924 = vlaneseq
        %v2925 = vshrl.u32 %v2924, 7
        %v2926 = vsub.s32 4, %v2925
        %v2927 = vrot.slane %v2558, %v2926
        %2929 = vbcast.lane.b32.xlu0 %v2927, 256
        %v2930 = vpop.permute.xlu0 %2929
        %v2931 = vlaneseq
        %v2932 = vshrl.u32 %v2931, 7
        %v2933 = vsub.s32 5, %v2932
        %v2934 = vrot.slane %v2558, %v2933
        %2936 = vbcast.lane.b32.xlu0 %v2934, 256
        %v2937 = vpop.permute.xlu0 %2936
        %v2938 = vlaneseq
        %v2939 = vshrl.u32 %v2938, 7
        %v2940 = vsub.s32 6, %v2939
        %v2941 = vrot.slane %v2558, %v2940
        %2943 = vbcast.lane.b32.xlu0 %v2941, 256
        %v2944 = vpop.permute.xlu0 %2943
        %v2945 = vlaneseq
        %v2946 = vshrl.u32 %v2945, 7
        %v2947 = vsub.s32 7, %v2946
        %v2948 = vrot.slane %v2558, %v2947
        %2950 = vbcast.lane.b32.xlu0 %v2948, 256
        %v2951 = vpop.permute.xlu0 %2950
        %v2952 = vlaneseq
        %v2953 = vshrl.u32 %v2952, 7
        %v2954 = vsub.s32 0, %v2953
        %v2955 = vrot.slane %v2559, %v2954
        %2957 = vbcast.lane.b32.xlu0 %v2955, 256
        %v2958 = vpop.permute.xlu0 %2957
        %v2959 = vlaneseq
        %v2960 = vshrl.u32 %v2959, 7
        %v2961 = vsub.s32 1, %v2960
        %v2962 = vrot.slane %v2559, %v2961
        %2964 = vbcast.lane.b32.xlu0 %v2962, 256
        %v2965 = vpop.permute.xlu0 %2964
        %v2966 = vlaneseq
        %v2967 = vshrl.u32 %v2966, 7
        %v2968 = vsub.s32 2, %v2967
        %v2969 = vrot.slane %v2559, %v2968
        %2971 = vbcast.lane.b32.xlu0 %v2969, 256
        %v2972 = vpop.permute.xlu0 %2971
        %v2973 = vlaneseq
        %v2974 = vshrl.u32 %v2973, 7
        %v2975 = vsub.s32 3, %v2974
        %v2976 = vrot.slane %v2559, %v2975
        %2978 = vbcast.lane.b32.xlu0 %v2976, 256
        %v2979 = vpop.permute.xlu0 %2978
        %v2980 = vlaneseq
        %v2981 = vshrl.u32 %v2980, 7
        %v2982 = vsub.s32 4, %v2981
        %v2983 = vrot.slane %v2559, %v2982
        %2985 = vbcast.lane.b32.xlu0 %v2983, 256
        %v2986 = vpop.permute.xlu0 %2985
        %v2987 = vlaneseq
        %v2988 = vshrl.u32 %v2987, 7
        %v2989 = vsub.s32 5, %v2988
        %v2990 = vrot.slane %v2559, %v2989
        %2992 = vbcast.lane.b32.xlu0 %v2990, 256
        %v2993 = vpop.permute.xlu0 %2992
        %v2994 = vlaneseq
        %v2995 = vshrl.u32 %v2994, 7
        %v2996 = vsub.s32 6, %v2995
        %v2997 = vrot.slane %v2559, %v2996
        %2999 = vbcast.lane.b32.xlu0 %v2997, 256
        %v3000 = vpop.permute.xlu0 %2999
        %v3001 = vlaneseq
        %v3002 = vshrl.u32 %v3001, 7
        %v3003 = vsub.s32 7, %v3002
        %v3004 = vrot.slane %v2559, %v3003
        %3006 = vbcast.lane.b32.xlu0 %v3004, 256
        %v3007 = vpop.permute.xlu0 %3006
        %v3008 = vsel %vm631, %v2566, %v2790
        %v3009 = vsel %vm631, %v2573, %v2797
        %v3010 = vsel %vm631, %v2580, %v2804
        %v3011 = vsel %vm631, %v2587, %v2811
        %v3012 = vsel %vm631, %v2594, %v2818
        %v3013 = vsel %vm631, %v2601, %v2825
        %v3014 = vsel %vm631, %v2608, %v2832
        %v3015 = vsel %vm631, %v2615, %v2839
        %v3016 = vsel %vm631, %v2622, %v2846
        %v3017 = vsel %vm631, %v2629, %v2853
        %v3018 = vsel %vm631, %v2636, %v2860
        %v3019 = vsel %vm631, %v2643, %v2867
        %v3020 = vsel %vm631, %v2650, %v2874
        %v3021 = vsel %vm631, %v2657, %v2881
        %v3022 = vsel %vm631, %v2664, %v2888
        %v3023 = vsel %vm631, %v2671, %v2895
        %v3024 = vsel %vm631, %v2678, %v2902
        %v3025 = vsel %vm631, %v2685, %v2909
        %v3026 = vsel %vm631, %v2692, %v2916
        %v3027 = vsel %vm631, %v2699, %v2923
        %v3028 = vsel %vm631, %v2706, %v2930
        %v3029 = vsel %vm631, %v2713, %v2937
        %v3030 = vsel %vm631, %v2720, %v2944
        %v3031 = vsel %vm631, %v2727, %v2951
        %v3032 = vsel %vm631, %v2734, %v2958
        %v3033 = vsel %vm631, %v2741, %v2965
        %v3034 = vsel %vm631, %v2748, %v2972
        %v3035 = vsel %vm631, %v2755, %v2979
        %v3036 = vsel %vm631, %v2762, %v2986
        %v3037 = vsel %vm631, %v2769, %v2993
        %v3038 = vsel %vm631, %v2776, %v3000
        %v3039 = vsel %vm631, %v2783, %v3007
        %v3040 = vcombine.low %v3008, %v3010
        %v3041 = vcombine.high %v3008, %v3010
        %v3043 = vunpack.c.l.s4 1983009808
        %v3044 = vunpack.c.0.s8 %v3043
        %v3045 = vlaneseq
        %v3046 = vshrl.u32 %v3045, 7
        %v3047 = vsub.s32 %v3044, %v3046
        %v3048 = vrot.slane %v3040, %v3047
        %v3050 = vunpack.c.l.s4 1983009808
        %v3051 = vunpack.c.0.s8 %v3050
        %v3052 = vlaneseq
        %v3053 = vshrl.u32 %v3052, 7
        %v3054 = vsub.s32 %v3051, %v3053
        %v3055 = vrot.slane %v3041, %v3054
        %v3056 = vcombine.low %v3009, %v3011
        %v3057 = vcombine.high %v3009, %v3011
        %v3059 = vunpack.c.l.s4 1983009808
        %v3060 = vunpack.c.0.s8 %v3059
        %v3061 = vlaneseq
        %v3062 = vshrl.u32 %v3061, 7
        %v3063 = vsub.s32 %v3060, %v3062
        %v3064 = vrot.slane %v3056, %v3063
        %v3066 = vunpack.c.l.s4 1983009808
        %v3067 = vunpack.c.0.s8 %v3066
        %v3068 = vlaneseq
        %v3069 = vshrl.u32 %v3068, 7
        %v3070 = vsub.s32 %v3067, %v3069
        %v3071 = vrot.slane %v3057, %v3070
        %v3072 = vcombine.low %v3012, %v3014
        %v3073 = vcombine.high %v3012, %v3014
        %v3075 = vunpack.c.l.s4 1983009808
        %v3076 = vunpack.c.0.s8 %v3075
        %v3077 = vlaneseq
        %v3078 = vshrl.u32 %v3077, 7
        %v3079 = vsub.s32 %v3076, %v3078
        %v3080 = vrot.slane %v3072, %v3079
        %v3082 = vunpack.c.l.s4 1983009808
        %v3083 = vunpack.c.0.s8 %v3082
        %v3084 = vlaneseq
        %v3085 = vshrl.u32 %v3084, 7
        %v3086 = vsub.s32 %v3083, %v3085
        %v3087 = vrot.slane %v3073, %v3086
        %v3088 = vcombine.low %v3013, %v3015
        %v3089 = vcombine.high %v3013, %v3015
        %v3091 = vunpack.c.l.s4 1983009808
        %v3092 = vunpack.c.0.s8 %v3091
        %v3093 = vlaneseq
        %v3094 = vshrl.u32 %v3093, 7
        %v3095 = vsub.s32 %v3092, %v3094
        %v3096 = vrot.slane %v3088, %v3095
        %v3098 = vunpack.c.l.s4 1983009808
        %v3099 = vunpack.c.0.s8 %v3098
        %v3100 = vlaneseq
        %v3101 = vshrl.u32 %v3100, 7
        %v3102 = vsub.s32 %v3099, %v3101
        %v3103 = vrot.slane %v3089, %v3102
        %v3104 = vcombine.low %v3048, %v3064
        %v3105 = vcombine.high %v3048, %v3064
        %v3107 = vunpack.c.l.s4 1934713408
        %v3108 = vunpack.c.0.s8 %v3107
        %v3109 = vlaneseq
        %v3110 = vshrl.u32 %v3109, 7
        %v3111 = vsub.s32 %v3108, %v3110
        %v3112 = vrot.slane %v3104, %v3111
        %v3114 = vunpack.c.l.s4 1934713408
        %v3115 = vunpack.c.0.s8 %v3114
        %v3116 = vlaneseq
        %v3117 = vshrl.u32 %v3116, 7
        %v3118 = vsub.s32 %v3115, %v3117
        %v3119 = vrot.slane %v3105, %v3118
        %v3120 = vcombine.low %v3055, %v3071
        %v3121 = vcombine.high %v3055, %v3071
        %v3123 = vunpack.c.l.s4 1934713408
        %v3124 = vunpack.c.0.s8 %v3123
        %v3125 = vlaneseq
        %v3126 = vshrl.u32 %v3125, 7
        %v3127 = vsub.s32 %v3124, %v3126
        %v3128 = vrot.slane %v3120, %v3127
        %v3130 = vunpack.c.l.s4 1934713408
        %v3131 = vunpack.c.0.s8 %v3130
        %v3132 = vlaneseq
        %v3133 = vshrl.u32 %v3132, 7
        %v3134 = vsub.s32 %v3131, %v3133
        %v3135 = vrot.slane %v3121, %v3134
        %v3136 = vcombine.low %v3080, %v3096
        %v3137 = vcombine.high %v3080, %v3096
        %v3139 = vunpack.c.l.s4 1934713408
        %v3140 = vunpack.c.0.s8 %v3139
        %v3141 = vlaneseq
        %v3142 = vshrl.u32 %v3141, 7
        %v3143 = vsub.s32 %v3140, %v3142
        %v3144 = vrot.slane %v3136, %v3143
        %v3146 = vunpack.c.l.s4 1934713408
        %v3147 = vunpack.c.0.s8 %v3146
        %v3148 = vlaneseq
        %v3149 = vshrl.u32 %v3148, 7
        %v3150 = vsub.s32 %v3147, %v3149
        %v3151 = vrot.slane %v3137, %v3150
        %v3152 = vcombine.low %v3087, %v3103
        %v3153 = vcombine.high %v3087, %v3103
        %v3155 = vunpack.c.l.s4 1934713408
        %v3156 = vunpack.c.0.s8 %v3155
        %v3157 = vlaneseq
        %v3158 = vshrl.u32 %v3157, 7
        %v3159 = vsub.s32 %v3156, %v3158
        %v3160 = vrot.slane %v3152, %v3159
        %v3162 = vunpack.c.l.s4 1934713408
        %v3163 = vunpack.c.0.s8 %v3162
        %v3164 = vlaneseq
        %v3165 = vshrl.u32 %v3164, 7
        %v3166 = vsub.s32 %v3163, %v3165
        %v3167 = vrot.slane %v3153, %v3166
        %v3168 = vcombine.low %v3112, %v3144
        %v3169 = vcombine.high %v3112, %v3144
        %v3170 = vcombine.low %v3119, %v3151
        %v3171 = vcombine.high %v3119, %v3151
        %v3172 = vcombine.low %v3128, %v3160
        %v3173 = vcombine.high %v3128, %v3160
        %v3174 = vcombine.low %v3135, %v3167
        %v3175 = vcombine.high %v3135, %v3167
        %v3176 = vcombine.low %v3016, %v3018
        %v3177 = vcombine.high %v3016, %v3018
        %v3179 = vunpack.c.l.s4 1983009808
        %v3180 = vunpack.c.0.s8 %v3179
        %v3181 = vlaneseq
        %v3182 = vshrl.u32 %v3181, 7
        %v3183 = vsub.s32 %v3180, %v3182
        %v3184 = vrot.slane %v3176, %v3183
        %v3186 = vunpack.c.l.s4 1983009808
        %v3187 = vunpack.c.0.s8 %v3186
        %v3188 = vlaneseq
        %v3189 = vshrl.u32 %v3188, 7
        %v3190 = vsub.s32 %v3187, %v3189
        %v3191 = vrot.slane %v3177, %v3190
        %v3192 = vcombine.low %v3017, %v3019
        %v3193 = vcombine.high %v3017, %v3019
        %v3195 = vunpack.c.l.s4 1983009808
        %v3196 = vunpack.c.0.s8 %v3195
        %v3197 = vlaneseq
        %v3198 = vshrl.u32 %v3197, 7
        %v3199 = vsub.s32 %v3196, %v3198
        %v3200 = vrot.slane %v3192, %v3199
        %v3202 = vunpack.c.l.s4 1983009808
        %v3203 = vunpack.c.0.s8 %v3202
        %v3204 = vlaneseq
        %v3205 = vshrl.u32 %v3204, 7
        %v3206 = vsub.s32 %v3203, %v3205
        %v3207 = vrot.slane %v3193, %v3206
        %v3208 = vcombine.low %v3020, %v3022
        %v3209 = vcombine.high %v3020, %v3022
        %v3211 = vunpack.c.l.s4 1983009808
        %v3212 = vunpack.c.0.s8 %v3211
        %v3213 = vlaneseq
        %v3214 = vshrl.u32 %v3213, 7
        %v3215 = vsub.s32 %v3212, %v3214
        %v3216 = vrot.slane %v3208, %v3215
        %v3218 = vunpack.c.l.s4 1983009808
        %v3219 = vunpack.c.0.s8 %v3218
        %v3220 = vlaneseq
        %v3221 = vshrl.u32 %v3220, 7
        %v3222 = vsub.s32 %v3219, %v3221
        %v3223 = vrot.slane %v3209, %v3222
        %v3224 = vcombine.low %v3021, %v3023
        %v3225 = vcombine.high %v3021, %v3023
        %v3227 = vunpack.c.l.s4 1983009808
        %v3228 = vunpack.c.0.s8 %v3227
        %v3229 = vlaneseq
        %v3230 = vshrl.u32 %v3229, 7
        %v3231 = vsub.s32 %v3228, %v3230
        %v3232 = vrot.slane %v3224, %v3231
        %v3234 = vunpack.c.l.s4 1983009808
        %v3235 = vunpack.c.0.s8 %v3234
        %v3236 = vlaneseq
        %v3237 = vshrl.u32 %v3236, 7
        %v3238 = vsub.s32 %v3235, %v3237
        %v3239 = vrot.slane %v3225, %v3238
        %v3240 = vcombine.low %v3184, %v3200
        %v3241 = vcombine.high %v3184, %v3200
        %v3243 = vunpack.c.l.s4 1934713408
        %v3244 = vunpack.c.0.s8 %v3243
        %v3245 = vlaneseq
        %v3246 = vshrl.u32 %v3245, 7
        %v3247 = vsub.s32 %v3244, %v3246
        %v3248 = vrot.slane %v3240, %v3247
        %v3250 = vunpack.c.l.s4 1934713408
        %v3251 = vunpack.c.0.s8 %v3250
        %v3252 = vlaneseq
        %v3253 = vshrl.u32 %v3252, 7
        %v3254 = vsub.s32 %v3251, %v3253
        %v3255 = vrot.slane %v3241, %v3254
        %v3256 = vcombine.low %v3191, %v3207
        %v3257 = vcombine.high %v3191, %v3207
        %v3259 = vunpack.c.l.s4 1934713408
        %v3260 = vunpack.c.0.s8 %v3259
        %v3261 = vlaneseq
        %v3262 = vshrl.u32 %v3261, 7
        %v3263 = vsub.s32 %v3260, %v3262
        %v3264 = vrot.slane %v3256, %v3263
        %v3266 = vunpack.c.l.s4 1934713408
        %v3267 = vunpack.c.0.s8 %v3266
        %v3268 = vlaneseq
        %v3269 = vshrl.u32 %v3268, 7
        %v3270 = vsub.s32 %v3267, %v3269
        %v3271 = vrot.slane %v3257, %v3270
        %v3272 = vcombine.low %v3216, %v3232
        %v3273 = vcombine.high %v3216, %v3232
        %v3275 = vunpack.c.l.s4 1934713408
        %v3276 = vunpack.c.0.s8 %v3275
        %v3277 = vlaneseq
        %v3278 = vshrl.u32 %v3277, 7
        %v3279 = vsub.s32 %v3276, %v3278
        %v3280 = vrot.slane %v3272, %v3279
        %v3282 = vunpack.c.l.s4 1934713408
        %v3283 = vunpack.c.0.s8 %v3282
        %v3284 = vlaneseq
        %v3285 = vshrl.u32 %v3284, 7
        %v3286 = vsub.s32 %v3283, %v3285
        %v3287 = vrot.slane %v3273, %v3286
        %v3288 = vcombine.low %v3223, %v3239
        %v3289 = vcombine.high %v3223, %v3239
        %v3291 = vunpack.c.l.s4 1934713408
        %v3292 = vunpack.c.0.s8 %v3291
        %v3293 = vlaneseq
        %v3294 = vshrl.u32 %v3293, 7
        %v3295 = vsub.s32 %v3292, %v3294
        %v3296 = vrot.slane %v3288, %v3295
        %v3298 = vunpack.c.l.s4 1934713408
        %v3299 = vunpack.c.0.s8 %v3298
        %v3300 = vlaneseq
        %v3301 = vshrl.u32 %v3300, 7
        %v3302 = vsub.s32 %v3299, %v3301
        %v3303 = vrot.slane %v3289, %v3302
        %v3304 = vcombine.low %v3248, %v3280
        %v3305 = vcombine.high %v3248, %v3280
        %v3306 = vcombine.low %v3255, %v3287
        %v3307 = vcombine.high %v3255, %v3287
        %v3308 = vcombine.low %v3264, %v3296
        %v3309 = vcombine.high %v3264, %v3296
        %v3310 = vcombine.low %v3271, %v3303
        %v3311 = vcombine.high %v3271, %v3303
        %v3312 = vcombine.low %v3024, %v3026
        %v3313 = vcombine.high %v3024, %v3026
        %v3315 = vunpack.c.l.s4 1983009808
        %v3316 = vunpack.c.0.s8 %v3315
        %v3317 = vlaneseq
        %v3318 = vshrl.u32 %v3317, 7
        %v3319 = vsub.s32 %v3316, %v3318
        %v3320 = vrot.slane %v3312, %v3319
        %v3322 = vunpack.c.l.s4 1983009808
        %v3323 = vunpack.c.0.s8 %v3322
        %v3324 = vlaneseq
        %v3325 = vshrl.u32 %v3324, 7
        %v3326 = vsub.s32 %v3323, %v3325
        %v3327 = vrot.slane %v3313, %v3326
        %v3328 = vcombine.low %v3025, %v3027
        %v3329 = vcombine.high %v3025, %v3027
        %v3331 = vunpack.c.l.s4 1983009808
        %v3332 = vunpack.c.0.s8 %v3331
        %v3333 = vlaneseq
        %v3334 = vshrl.u32 %v3333, 7
        %v3335 = vsub.s32 %v3332, %v3334
        %v3336 = vrot.slane %v3328, %v3335
        %v3338 = vunpack.c.l.s4 1983009808
        %v3339 = vunpack.c.0.s8 %v3338
        %v3340 = vlaneseq
        %v3341 = vshrl.u32 %v3340, 7
        %v3342 = vsub.s32 %v3339, %v3341
        %v3343 = vrot.slane %v3329, %v3342
        %v3344 = vcombine.low %v3028, %v3030
        %v3345 = vcombine.high %v3028, %v3030
        %v3347 = vunpack.c.l.s4 1983009808
        %v3348 = vunpack.c.0.s8 %v3347
        %v3349 = vlaneseq
        %v3350 = vshrl.u32 %v3349, 7
        %v3351 = vsub.s32 %v3348, %v3350
        %v3352 = vrot.slane %v3344, %v3351
        %v3354 = vunpack.c.l.s4 1983009808
        %v3355 = vunpack.c.0.s8 %v3354
        %v3356 = vlaneseq
        %v3357 = vshrl.u32 %v3356, 7
        %v3358 = vsub.s32 %v3355, %v3357
        %v3359 = vrot.slane %v3345, %v3358
        %v3360 = vcombine.low %v3029, %v3031
        %v3361 = vcombine.high %v3029, %v3031
        %v3363 = vunpack.c.l.s4 1983009808
        %v3364 = vunpack.c.0.s8 %v3363
        %v3365 = vlaneseq
        %v3366 = vshrl.u32 %v3365, 7
        %v3367 = vsub.s32 %v3364, %v3366
        %v3368 = vrot.slane %v3360, %v3367
        %v3370 = vunpack.c.l.s4 1983009808
        %v3371 = vunpack.c.0.s8 %v3370
        %v3372 = vlaneseq
        %v3373 = vshrl.u32 %v3372, 7
        %v3374 = vsub.s32 %v3371, %v3373
        %v3375 = vrot.slane %v3361, %v3374
        %v3376 = vcombine.low %v3320, %v3336
        %v3377 = vcombine.high %v3320, %v3336
        %v3379 = vunpack.c.l.s4 1934713408
        %v3380 = vunpack.c.0.s8 %v3379
        %v3381 = vlaneseq
        %v3382 = vshrl.u32 %v3381, 7
        %v3383 = vsub.s32 %v3380, %v3382
        %v3384 = vrot.slane %v3376, %v3383
        %v3386 = vunpack.c.l.s4 1934713408
        %v3387 = vunpack.c.0.s8 %v3386
        %v3388 = vlaneseq
        %v3389 = vshrl.u32 %v3388, 7
        %v3390 = vsub.s32 %v3387, %v3389
        %v3391 = vrot.slane %v3377, %v3390
        %v3392 = vcombine.low %v3327, %v3343
        %v3393 = vcombine.high %v3327, %v3343
        %v3395 = vunpack.c.l.s4 1934713408
        %v3396 = vunpack.c.0.s8 %v3395
        %v3397 = vlaneseq
        %v3398 = vshrl.u32 %v3397, 7
        %v3399 = vsub.s32 %v3396, %v3398
        %v3400 = vrot.slane %v3392, %v3399
        %v3402 = vunpack.c.l.s4 1934713408
        %v3403 = vunpack.c.0.s8 %v3402
        %v3404 = vlaneseq
        %v3405 = vshrl.u32 %v3404, 7
        %v3406 = vsub.s32 %v3403, %v3405
        %v3407 = vrot.slane %v3393, %v3406
        %v3408 = vcombine.low %v3352, %v3368
        %v3409 = vcombine.high %v3352, %v3368
        %v3411 = vunpack.c.l.s4 1934713408
        %v3412 = vunpack.c.0.s8 %v3411
        %v3413 = vlaneseq
        %v3414 = vshrl.u32 %v3413, 7
        %v3415 = vsub.s32 %v3412, %v3414
        %v3416 = vrot.slane %v3408, %v3415
        %v3418 = vunpack.c.l.s4 1934713408
        %v3419 = vunpack.c.0.s8 %v3418
        %v3420 = vlaneseq
        %v3421 = vshrl.u32 %v3420, 7
        %v3422 = vsub.s32 %v3419, %v3421
        %v3423 = vrot.slane %v3409, %v3422
        %v3424 = vcombine.low %v3359, %v3375
        %v3425 = vcombine.high %v3359, %v3375
        %v3427 = vunpack.c.l.s4 1934713408
        %v3428 = vunpack.c.0.s8 %v3427
        %v3429 = vlaneseq
        %v3430 = vshrl.u32 %v3429, 7
        %v3431 = vsub.s32 %v3428, %v3430
        %v3432 = vrot.slane %v3424, %v3431
        %v3434 = vunpack.c.l.s4 1934713408
        %v3435 = vunpack.c.0.s8 %v3434
        %v3436 = vlaneseq
        %v3437 = vshrl.u32 %v3436, 7
        %v3438 = vsub.s32 %v3435, %v3437
        %v3439 = vrot.slane %v3425, %v3438
        %v3440 = vcombine.low %v3384, %v3416
        %v3441 = vcombine.high %v3384, %v3416
        %v3442 = vcombine.low %v3391, %v3423
        %v3443 = vcombine.high %v3391, %v3423
        %v3444 = vcombine.low %v3400, %v3432
        %v3445 = vcombine.high %v3400, %v3432
        %v3446 = vcombine.low %v3407, %v3439
        %v3447 = vcombine.high %v3407, %v3439
        %v3448 = vcombine.low %v3032, %v3034
        %v3449 = vcombine.high %v3032, %v3034
        %v3451 = vunpack.c.l.s4 1983009808
        %v3452 = vunpack.c.0.s8 %v3451
        %v3453 = vlaneseq
        %v3454 = vshrl.u32 %v3453, 7
        %v3455 = vsub.s32 %v3452, %v3454
        %v3456 = vrot.slane %v3448, %v3455
        %v3458 = vunpack.c.l.s4 1983009808
        %v3459 = vunpack.c.0.s8 %v3458
        %v3460 = vlaneseq
        %v3461 = vshrl.u32 %v3460, 7
        %v3462 = vsub.s32 %v3459, %v3461
        %v3463 = vrot.slane %v3449, %v3462
        %v3464 = vcombine.low %v3033, %v3035
        %v3465 = vcombine.high %v3033, %v3035
        %v3467 = vunpack.c.l.s4 1983009808
        %v3468 = vunpack.c.0.s8 %v3467
        %v3469 = vlaneseq
        %v3470 = vshrl.u32 %v3469, 7
        %v3471 = vsub.s32 %v3468, %v3470
        %v3472 = vrot.slane %v3464, %v3471
        %v3474 = vunpack.c.l.s4 1983009808
        %v3475 = vunpack.c.0.s8 %v3474
        %v3476 = vlaneseq
        %v3477 = vshrl.u32 %v3476, 7
        %v3478 = vsub.s32 %v3475, %v3477
        %v3479 = vrot.slane %v3465, %v3478
        %v3480 = vcombine.low %v3036, %v3038
        %v3481 = vcombine.high %v3036, %v3038
        %v3483 = vunpack.c.l.s4 1983009808
        %v3484 = vunpack.c.0.s8 %v3483
        %v3485 = vlaneseq
        %v3486 = vshrl.u32 %v3485, 7
        %v3487 = vsub.s32 %v3484, %v3486
        %v3488 = vrot.slane %v3480, %v3487
        %v3490 = vunpack.c.l.s4 1983009808
        %v3491 = vunpack.c.0.s8 %v3490
        %v3492 = vlaneseq
        %v3493 = vshrl.u32 %v3492, 7
        %v3494 = vsub.s32 %v3491, %v3493
        %v3495 = vrot.slane %v3481, %v3494
        %v3496 = vcombine.low %v3037, %v3039
        %v3497 = vcombine.high %v3037, %v3039
        %v3499 = vunpack.c.l.s4 1983009808
        %v3500 = vunpack.c.0.s8 %v3499
        %v3501 = vlaneseq
        %v3502 = vshrl.u32 %v3501, 7
        %v3503 = vsub.s32 %v3500, %v3502
        %v3504 = vrot.slane %v3496, %v3503
        %v3506 = vunpack.c.l.s4 1983009808
        %v3507 = vunpack.c.0.s8 %v3506
        %v3508 = vlaneseq
        %v3509 = vshrl.u32 %v3508, 7
        %v3510 = vsub.s32 %v3507, %v3509
        %v3511 = vrot.slane %v3497, %v3510
        %v3512 = vcombine.low %v3456, %v3472
        %v3513 = vcombine.high %v3456, %v3472
        %v3515 = vunpack.c.l.s4 1934713408
        %v3516 = vunpack.c.0.s8 %v3515
        %v3517 = vlaneseq
        %v3518 = vshrl.u32 %v3517, 7
        %v3519 = vsub.s32 %v3516, %v3518
        %v3520 = vrot.slane %v3512, %v3519
        %v3522 = vunpack.c.l.s4 1934713408
        %v3523 = vunpack.c.0.s8 %v3522
        %v3524 = vlaneseq
        %v3525 = vshrl.u32 %v3524, 7
        %v3526 = vsub.s32 %v3523, %v3525
        %v3527 = vrot.slane %v3513, %v3526
        %v3528 = vcombine.low %v3463, %v3479
        %v3529 = vcombine.high %v3463, %v3479
        %v3531 = vunpack.c.l.s4 1934713408
        %v3532 = vunpack.c.0.s8 %v3531
        %v3533 = vlaneseq
        %v3534 = vshrl.u32 %v3533, 7
        %v3535 = vsub.s32 %v3532, %v3534
        %v3536 = vrot.slane %v3528, %v3535
        %v3538 = vunpack.c.l.s4 1934713408
        %v3539 = vunpack.c.0.s8 %v3538
        %v3540 = vlaneseq
        %v3541 = vshrl.u32 %v3540, 7
        %v3542 = vsub.s32 %v3539, %v3541
        %v3543 = vrot.slane %v3529, %v3542
        %v3544 = vcombine.low %v3488, %v3504
        %v3545 = vcombine.high %v3488, %v3504
        %v3547 = vunpack.c.l.s4 1934713408
        %v3548 = vunpack.c.0.s8 %v3547
        %v3549 = vlaneseq
        %v3550 = vshrl.u32 %v3549, 7
        %v3551 = vsub.s32 %v3548, %v3550
        %v3552 = vrot.slane %v3544, %v3551
        %v3554 = vunpack.c.l.s4 1934713408
        %v3555 = vunpack.c.0.s8 %v3554
        %v3556 = vlaneseq
        %v3557 = vshrl.u32 %v3556, 7
        %v3558 = vsub.s32 %v3555, %v3557
        %v3559 = vrot.slane %v3545, %v3558
        %v3560 = vcombine.low %v3495, %v3511
        %v3561 = vcombine.high %v3495, %v3511
        %v3563 = vunpack.c.l.s4 1934713408
        %v3564 = vunpack.c.0.s8 %v3563
        %v3565 = vlaneseq
        %v3566 = vshrl.u32 %v3565, 7
        %v3567 = vsub.s32 %v3564, %v3566
        %v3568 = vrot.slane %v3560, %v3567
        %v3570 = vunpack.c.l.s4 1934713408
        %v3571 = vunpack.c.0.s8 %v3570
        %v3572 = vlaneseq
        %v3573 = vshrl.u32 %v3572, 7
        %v3574 = vsub.s32 %v3571, %v3573
        %v3575 = vrot.slane %v3561, %v3574
        %v3576 = vcombine.low %v3520, %v3552
        %v3577 = vcombine.high %v3520, %v3552
        %v3578 = vcombine.low %v3527, %v3559
        %v3579 = vcombine.high %v3527, %v3559
        %v3580 = vcombine.low %v3536, %v3568
        %v3581 = vcombine.high %v3536, %v3568
        %v3582 = vcombine.low %v3543, %v3575
        %v3583 = vcombine.high %v3543, %v3575
        %3588 = vrot.lane.b32.xlu0 %v3169, 2
        %v3589 = vpop.permute.xlu0 %3588
        %3590 = vrot.lane.b32.xlu0 %v3305, 2
        %v3591 = vpop.permute.xlu0 %3590
        %3592 = vrot.lane.b32.xlu0 %v3441, 2
        %v3593 = vpop.permute.xlu0 %3592
        %3594 = vrot.lane.b32.xlu0 %v3577, 2
        %v3595 = vpop.permute.xlu0 %3594
        %3604 = vrot.lane.b32.xlu0 %v3170, 4
        %v3605 = vpop.permute.xlu0 %3604
        %3606 = vrot.lane.b32.xlu0 %v3306, 4
        %v3607 = vpop.permute.xlu0 %3606
        %3608 = vrot.lane.b32.xlu0 %v3442, 4
        %v3609 = vpop.permute.xlu0 %3608
        %3610 = vrot.lane.b32.xlu0 %v3578, 4
        %v3611 = vpop.permute.xlu0 %3610
        %3620 = vrot.lane.b32.xlu0 %v3171, 6
        %v3621 = vpop.permute.xlu0 %3620
        %3622 = vrot.lane.b32.xlu0 %v3307, 6
        %v3623 = vpop.permute.xlu0 %3622
        %3624 = vrot.lane.b32.xlu0 %v3443, 6
        %v3625 = vpop.permute.xlu0 %3624
        %3626 = vrot.lane.b32.xlu0 %v3579, 6
        %v3627 = vpop.permute.xlu0 %3626
        %3636 = vrot.lane.b32.xlu0 %v3172, 8
        %v3637 = vpop.permute.xlu0 %3636
        %3638 = vrot.lane.b32.xlu0 %v3308, 8
        %v3639 = vpop.permute.xlu0 %3638
        %3640 = vrot.lane.b32.xlu0 %v3444, 8
        %v3641 = vpop.permute.xlu0 %3640
        %3642 = vrot.lane.b32.xlu0 %v3580, 8
        %v3643 = vpop.permute.xlu0 %3642
        %3652 = vrot.lane.b32.xlu0 %v3173, 10
        %v3653 = vpop.permute.xlu0 %3652
        %3654 = vrot.lane.b32.xlu0 %v3309, 10
        %v3655 = vpop.permute.xlu0 %3654
        %3656 = vrot.lane.b32.xlu0 %v3445, 10
        %v3657 = vpop.permute.xlu0 %3656
        %3658 = vrot.lane.b32.xlu0 %v3581, 10
        %v3659 = vpop.permute.xlu0 %3658
        %3668 = vrot.lane.b32.xlu0 %v3174, 12
        %v3669 = vpop.permute.xlu0 %3668
        %3670 = vrot.lane.b32.xlu0 %v3310, 12
        %v3671 = vpop.permute.xlu0 %3670
        %3672 = vrot.lane.b32.xlu0 %v3446, 12
        %v3673 = vpop.permute.xlu0 %3672
        %3674 = vrot.lane.b32.xlu0 %v3582, 12
        %v3675 = vpop.permute.xlu0 %3674
        %3684 = vrot.lane.b32.xlu0 %v3175, 14
        %v3685 = vpop.permute.xlu0 %3684
        %3686 = vrot.lane.b32.xlu0 %v3311, 14
        %v3687 = vpop.permute.xlu0 %3686
        %3688 = vrot.lane.b32.xlu0 %v3447, 14
        %v3689 = vpop.permute.xlu0 %3688
        %3690 = vrot.lane.b32.xlu0 %v3583, 14
        %v3691 = vpop.permute.xlu0 %3690
        %v3696 = vsel %vm1320, %v3168, %v3589
        %v3697 = vsel %vm1320, %v3304, %v3591
        %v3698 = vsel %vm1320, %v3440, %v3593
        %v3699 = vsel %vm1320, %v3576, %v3595
        %v3700 = vsel %vm1325, %v3696, %v3605
        %v3701 = vsel %vm1325, %v3697, %v3607
        %v3702 = vsel %vm1325, %v3698, %v3609
        %v3703 = vsel %vm1325, %v3699, %v3611
        %v3704 = vsel %vm1330, %v3700, %v3621
        %v3705 = vsel %vm1330, %v3701, %v3623
        %v3706 = vsel %vm1330, %v3702, %v3625
        %v3707 = vsel %vm1330, %v3703, %v3627
        %v3708 = vsel %vm1335, %v3704, %v3637
        %v3709 = vsel %vm1335, %v3705, %v3639
        %v3710 = vsel %vm1335, %v3706, %v3641
        %v3711 = vsel %vm1335, %v3707, %v3643
        %v3712 = vsel %vm1340, %v3708, %v3653
        %v3713 = vsel %vm1340, %v3709, %v3655
        %v3714 = vsel %vm1340, %v3710, %v3657
        %v3715 = vsel %vm1340, %v3711, %v3659
        %v3716 = vsel %vm1345, %v3712, %v3669
        %v3717 = vsel %vm1345, %v3713, %v3671
        %v3718 = vsel %vm1345, %v3714, %v3673
        %v3719 = vsel %vm1345, %v3715, %v3675
        %v3720 = vsel %vm1350, %v3716, %v3685
        %v3721 = vsel %vm1350, %v3717, %v3687
        %v3722 = vsel %vm1350, %v3718, %v3689
        %v3723 = vsel %vm1350, %v3719, %v3691
        %s3724 = scalar_lea.vmem %s170, 192
        %v3725 = vld [vmem:[%s3724] sm:$0xff]
        %v3726 = vld [vmem:[%s3724 + $0x8] sm:$0xff]
        %v3727 = vld [vmem:[%s3724 + $0x10] sm:$0xff]
        %v3728 = vld [vmem:[%s3724 + $0x18] sm:$0xff]
        %s3729 = scalar_lea.vmem %s170, 224
        %v3730 = vld [vmem:[%s3729] sm:$0xff]
        %v3731 = vld [vmem:[%s3729 + $0x8] sm:$0xff]
        %v3732 = vld [vmem:[%s3729 + $0x10] sm:$0xff]
        %v3733 = vld [vmem:[%s3729 + $0x18] sm:$0xff]
        %v3734 = vlaneseq
        %v3735 = vshrl.u32 %v3734, 7
        %v3736 = vsub.s32 0, %v3735
        %v3737 = vrot.slane %v3725, %v3736
        %3739 = vbcast.lane.b32.xlu0 %v3737, 256
        %v3740 = vpop.permute.xlu0 %3739
        %v3741 = vlaneseq
        %v3742 = vshrl.u32 %v3741, 7
        %v3743 = vsub.s32 1, %v3742
        %v3744 = vrot.slane %v3725, %v3743
        %3746 = vbcast.lane.b32.xlu0 %v3744, 256
        %v3747 = vpop.permute.xlu0 %3746
        %v3748 = vlaneseq
        %v3749 = vshrl.u32 %v3748, 7
        %v3750 = vsub.s32 2, %v3749
        %v3751 = vrot.slane %v3725, %v3750
        %3753 = vbcast.lane.b32.xlu0 %v3751, 256
        %v3754 = vpop.permute.xlu0 %3753
        %v3755 = vlaneseq
        %v3756 = vshrl.u32 %v3755, 7
        %v3757 = vsub.s32 3, %v3756
        %v3758 = vrot.slane %v3725, %v3757
        %3760 = vbcast.lane.b32.xlu0 %v3758, 256
        %v3761 = vpop.permute.xlu0 %3760
        %v3762 = vlaneseq
        %v3763 = vshrl.u32 %v3762, 7
        %v3764 = vsub.s32 4, %v3763
        %v3765 = vrot.slane %v3725, %v3764
        %3767 = vbcast.lane.b32.xlu0 %v3765, 256
        %v3768 = vpop.permute.xlu0 %3767
        %v3769 = vlaneseq
        %v3770 = vshrl.u32 %v3769, 7
        %v3771 = vsub.s32 5, %v3770
        %v3772 = vrot.slane %v3725, %v3771
        %3774 = vbcast.lane.b32.xlu0 %v3772, 256
        %v3775 = vpop.permute.xlu0 %3774
        %v3776 = vlaneseq
        %v3777 = vshrl.u32 %v3776, 7
        %v3778 = vsub.s32 6, %v3777
        %v3779 = vrot.slane %v3725, %v3778
        %3781 = vbcast.lane.b32.xlu0 %v3779, 256
        %v3782 = vpop.permute.xlu0 %3781
        %v3783 = vlaneseq
        %v3784 = vshrl.u32 %v3783, 7
        %v3785 = vsub.s32 7, %v3784
        %v3786 = vrot.slane %v3725, %v3785
        %3788 = vbcast.lane.b32.xlu0 %v3786, 256
        %v3789 = vpop.permute.xlu0 %3788
        %v3790 = vlaneseq
        %v3791 = vshrl.u32 %v3790, 7
        %v3792 = vsub.s32 0, %v3791
        %v3793 = vrot.slane %v3726, %v3792
        %3795 = vbcast.lane.b32.xlu0 %v3793, 256
        %v3796 = vpop.permute.xlu0 %3795
        %v3797 = vlaneseq
        %v3798 = vshrl.u32 %v3797, 7
        %v3799 = vsub.s32 1, %v3798
        %v3800 = vrot.slane %v3726, %v3799
        %3802 = vbcast.lane.b32.xlu0 %v3800, 256
        %v3803 = vpop.permute.xlu0 %3802
        %v3804 = vlaneseq
        %v3805 = vshrl.u32 %v3804, 7
        %v3806 = vsub.s32 2, %v3805
        %v3807 = vrot.slane %v3726, %v3806
        %3809 = vbcast.lane.b32.xlu0 %v3807, 256
        %v3810 = vpop.permute.xlu0 %3809
        %v3811 = vlaneseq
        %v3812 = vshrl.u32 %v3811, 7
        %v3813 = vsub.s32 3, %v3812
        %v3814 = vrot.slane %v3726, %v3813
        %3816 = vbcast.lane.b32.xlu0 %v3814, 256
        %v3817 = vpop.permute.xlu0 %3816
        %v3818 = vlaneseq
        %v3819 = vshrl.u32 %v3818, 7
        %v3820 = vsub.s32 4, %v3819
        %v3821 = vrot.slane %v3726, %v3820
        %3823 = vbcast.lane.b32.xlu0 %v3821, 256
        %v3824 = vpop.permute.xlu0 %3823
        %v3825 = vlaneseq
        %v3826 = vshrl.u32 %v3825, 7
        %v3827 = vsub.s32 5, %v3826
        %v3828 = vrot.slane %v3726, %v3827
        %3830 = vbcast.lane.b32.xlu0 %v3828, 256
        %v3831 = vpop.permute.xlu0 %3830
        %v3832 = vlaneseq
        %v3833 = vshrl.u32 %v3832, 7
        %v3834 = vsub.s32 6, %v3833
        %v3835 = vrot.slane %v3726, %v3834
        %3837 = vbcast.lane.b32.xlu0 %v3835, 256
        %v3838 = vpop.permute.xlu0 %3837
        %v3839 = vlaneseq
        %v3840 = vshrl.u32 %v3839, 7
        %v3841 = vsub.s32 7, %v3840
        %v3842 = vrot.slane %v3726, %v3841
        %3844 = vbcast.lane.b32.xlu0 %v3842, 256
        %v3845 = vpop.permute.xlu0 %3844
        %v3846 = vlaneseq
        %v3847 = vshrl.u32 %v3846, 7
        %v3848 = vsub.s32 0, %v3847
        %v3849 = vrot.slane %v3727, %v3848
        %3851 = vbcast.lane.b32.xlu0 %v3849, 256
        %v3852 = vpop.permute.xlu0 %3851
        %v3853 = vlaneseq
        %v3854 = vshrl.u32 %v3853, 7
        %v3855 = vsub.s32 1, %v3854
        %v3856 = vrot.slane %v3727, %v3855
        %3858 = vbcast.lane.b32.xlu0 %v3856, 256
        %v3859 = vpop.permute.xlu0 %3858
        %v3860 = vlaneseq
        %v3861 = vshrl.u32 %v3860, 7
        %v3862 = vsub.s32 2, %v3861
        %v3863 = vrot.slane %v3727, %v3862
        %3865 = vbcast.lane.b32.xlu0 %v3863, 256
        %v3866 = vpop.permute.xlu0 %3865
        %v3867 = vlaneseq
        %v3868 = vshrl.u32 %v3867, 7
        %v3869 = vsub.s32 3, %v3868
        %v3870 = vrot.slane %v3727, %v3869
        %3872 = vbcast.lane.b32.xlu0 %v3870, 256
        %v3873 = vpop.permute.xlu0 %3872
        %v3874 = vlaneseq
        %v3875 = vshrl.u32 %v3874, 7
        %v3876 = vsub.s32 4, %v3875
        %v3877 = vrot.slane %v3727, %v3876
        %3879 = vbcast.lane.b32.xlu0 %v3877, 256
        %v3880 = vpop.permute.xlu0 %3879
        %v3881 = vlaneseq
        %v3882 = vshrl.u32 %v3881, 7
        %v3883 = vsub.s32 5, %v3882
        %v3884 = vrot.slane %v3727, %v3883
        %3886 = vbcast.lane.b32.xlu0 %v3884, 256
        %v3887 = vpop.permute.xlu0 %3886
        %v3888 = vlaneseq
        %v3889 = vshrl.u32 %v3888, 7
        %v3890 = vsub.s32 6, %v3889
        %v3891 = vrot.slane %v3727, %v3890
        %3893 = vbcast.lane.b32.xlu0 %v3891, 256
        %v3894 = vpop.permute.xlu0 %3893
        %v3895 = vlaneseq
        %v3896 = vshrl.u32 %v3895, 7
        %v3897 = vsub.s32 7, %v3896
        %v3898 = vrot.slane %v3727, %v3897
        %3900 = vbcast.lane.b32.xlu0 %v3898, 256
        %v3901 = vpop.permute.xlu0 %3900
        %v3902 = vlaneseq
        %v3903 = vshrl.u32 %v3902, 7
        %v3904 = vsub.s32 0, %v3903
        %v3905 = vrot.slane %v3728, %v3904
        %3907 = vbcast.lane.b32.xlu0 %v3905, 256
        %v3908 = vpop.permute.xlu0 %3907
        %v3909 = vlaneseq
        %v3910 = vshrl.u32 %v3909, 7
        %v3911 = vsub.s32 1, %v3910
        %v3912 = vrot.slane %v3728, %v3911
        %3914 = vbcast.lane.b32.xlu0 %v3912, 256
        %v3915 = vpop.permute.xlu0 %3914
        %v3916 = vlaneseq
        %v3917 = vshrl.u32 %v3916, 7
        %v3918 = vsub.s32 2, %v3917
        %v3919 = vrot.slane %v3728, %v3918
        %3921 = vbcast.lane.b32.xlu0 %v3919, 256
        %v3922 = vpop.permute.xlu0 %3921
        %v3923 = vlaneseq
        %v3924 = vshrl.u32 %v3923, 7
        %v3925 = vsub.s32 3, %v3924
        %v3926 = vrot.slane %v3728, %v3925
        %3928 = vbcast.lane.b32.xlu0 %v3926, 256
        %v3929 = vpop.permute.xlu0 %3928
        %v3930 = vlaneseq
        %v3931 = vshrl.u32 %v3930, 7
        %v3932 = vsub.s32 4, %v3931
        %v3933 = vrot.slane %v3728, %v3932
        %3935 = vbcast.lane.b32.xlu0 %v3933, 256
        %v3936 = vpop.permute.xlu0 %3935
        %v3937 = vlaneseq
        %v3938 = vshrl.u32 %v3937, 7
        %v3939 = vsub.s32 5, %v3938
        %v3940 = vrot.slane %v3728, %v3939
        %3942 = vbcast.lane.b32.xlu0 %v3940, 256
        %v3943 = vpop.permute.xlu0 %3942
        %v3944 = vlaneseq
        %v3945 = vshrl.u32 %v3944, 7
        %v3946 = vsub.s32 6, %v3945
        %v3947 = vrot.slane %v3728, %v3946
        %3949 = vbcast.lane.b32.xlu0 %v3947, 256
        %v3950 = vpop.permute.xlu0 %3949
        %v3951 = vlaneseq
        %v3952 = vshrl.u32 %v3951, 7
        %v3953 = vsub.s32 7, %v3952
        %v3954 = vrot.slane %v3728, %v3953
        %3956 = vbcast.lane.b32.xlu0 %v3954, 256
        %v3957 = vpop.permute.xlu0 %3956
        %v3958 = vlaneseq
        %v3959 = vshrl.u32 %v3958, 7
        %v3960 = vsub.s32 0, %v3959
        %v3961 = vrot.slane %v3730, %v3960
        %3963 = vbcast.lane.b32.xlu0 %v3961, 256
        %v3964 = vpop.permute.xlu0 %3963
        %v3965 = vlaneseq
        %v3966 = vshrl.u32 %v3965, 7
        %v3967 = vsub.s32 1, %v3966
        %v3968 = vrot.slane %v3730, %v3967
        %3970 = vbcast.lane.b32.xlu0 %v3968, 256
        %v3971 = vpop.permute.xlu0 %3970
        %v3972 = vlaneseq
        %v3973 = vshrl.u32 %v3972, 7
        %v3974 = vsub.s32 2, %v3973
        %v3975 = vrot.slane %v3730, %v3974
        %3977 = vbcast.lane.b32.xlu0 %v3975, 256
        %v3978 = vpop.permute.xlu0 %3977
        %v3979 = vlaneseq
        %v3980 = vshrl.u32 %v3979, 7
        %v3981 = vsub.s32 3, %v3980
        %v3982 = vrot.slane %v3730, %v3981
        %3984 = vbcast.lane.b32.xlu0 %v3982, 256
        %v3985 = vpop.permute.xlu0 %3984
        %v3986 = vlaneseq
        %v3987 = vshrl.u32 %v3986, 7
        %v3988 = vsub.s32 4, %v3987
        %v3989 = vrot.slane %v3730, %v3988
        %3991 = vbcast.lane.b32.xlu0 %v3989, 256
        %v3992 = vpop.permute.xlu0 %3991
        %v3993 = vlaneseq
        %v3994 = vshrl.u32 %v3993, 7
        %v3995 = vsub.s32 5, %v3994
        %v3996 = vrot.slane %v3730, %v3995
        %3998 = vbcast.lane.b32.xlu0 %v3996, 256
        %v3999 = vpop.permute.xlu0 %3998
        %v4000 = vlaneseq
        %v4001 = vshrl.u32 %v4000, 7
        %v4002 = vsub.s32 6, %v4001
        %v4003 = vrot.slane %v3730, %v4002
        %4005 = vbcast.lane.b32.xlu0 %v4003, 256
        %v4006 = vpop.permute.xlu0 %4005
        %v4007 = vlaneseq
        %v4008 = vshrl.u32 %v4007, 7
        %v4009 = vsub.s32 7, %v4008
        %v4010 = vrot.slane %v3730, %v4009
        %4012 = vbcast.lane.b32.xlu0 %v4010, 256
        %v4013 = vpop.permute.xlu0 %4012
        %v4014 = vlaneseq
        %v4015 = vshrl.u32 %v4014, 7
        %v4016 = vsub.s32 0, %v4015
        %v4017 = vrot.slane %v3731, %v4016
        %4019 = vbcast.lane.b32.xlu0 %v4017, 256
        %v4020 = vpop.permute.xlu0 %4019
        %v4021 = vlaneseq
        %v4022 = vshrl.u32 %v4021, 7
        %v4023 = vsub.s32 1, %v4022
        %v4024 = vrot.slane %v3731, %v4023
        %4026 = vbcast.lane.b32.xlu0 %v4024, 256
        %v4027 = vpop.permute.xlu0 %4026
        %v4028 = vlaneseq
        %v4029 = vshrl.u32 %v4028, 7
        %v4030 = vsub.s32 2, %v4029
        %v4031 = vrot.slane %v3731, %v4030
        %4033 = vbcast.lane.b32.xlu0 %v4031, 256
        %v4034 = vpop.permute.xlu0 %4033
        %v4035 = vlaneseq
        %v4036 = vshrl.u32 %v4035, 7
        %v4037 = vsub.s32 3, %v4036
        %v4038 = vrot.slane %v3731, %v4037
        %4040 = vbcast.lane.b32.xlu0 %v4038, 256
        %v4041 = vpop.permute.xlu0 %4040
        %v4042 = vlaneseq
        %v4043 = vshrl.u32 %v4042, 7
        %v4044 = vsub.s32 4, %v4043
        %v4045 = vrot.slane %v3731, %v4044
        %4047 = vbcast.lane.b32.xlu0 %v4045, 256
        %v4048 = vpop.permute.xlu0 %4047
        %v4049 = vlaneseq
        %v4050 = vshrl.u32 %v4049, 7
        %v4051 = vsub.s32 5, %v4050
        %v4052 = vrot.slane %v3731, %v4051
        %4054 = vbcast.lane.b32.xlu0 %v4052, 256
        %v4055 = vpop.permute.xlu0 %4054
        %v4056 = vlaneseq
        %v4057 = vshrl.u32 %v4056, 7
        %v4058 = vsub.s32 6, %v4057
        %v4059 = vrot.slane %v3731, %v4058
        %4061 = vbcast.lane.b32.xlu0 %v4059, 256
        %v4062 = vpop.permute.xlu0 %4061
        %v4063 = vlaneseq
        %v4064 = vshrl.u32 %v4063, 7
        %v4065 = vsub.s32 7, %v4064
        %v4066 = vrot.slane %v3731, %v4065
        %4068 = vbcast.lane.b32.xlu0 %v4066, 256
        %v4069 = vpop.permute.xlu0 %4068
        %v4070 = vlaneseq
        %v4071 = vshrl.u32 %v4070, 7
        %v4072 = vsub.s32 0, %v4071
        %v4073 = vrot.slane %v3732, %v4072
        %4075 = vbcast.lane.b32.xlu0 %v4073, 256
        %v4076 = vpop.permute.xlu0 %4075
        %v4077 = vlaneseq
        %v4078 = vshrl.u32 %v4077, 7
        %v4079 = vsub.s32 1, %v4078
        %v4080 = vrot.slane %v3732, %v4079
        %4082 = vbcast.lane.b32.xlu0 %v4080, 256
        %v4083 = vpop.permute.xlu0 %4082
        %v4084 = vlaneseq
        %v4085 = vshrl.u32 %v4084, 7
        %v4086 = vsub.s32 2, %v4085
        %v4087 = vrot.slane %v3732, %v4086
        %4089 = vbcast.lane.b32.xlu0 %v4087, 256
        %v4090 = vpop.permute.xlu0 %4089
        %v4091 = vlaneseq
        %v4092 = vshrl.u32 %v4091, 7
        %v4093 = vsub.s32 3, %v4092
        %v4094 = vrot.slane %v3732, %v4093
        %4096 = vbcast.lane.b32.xlu0 %v4094, 256
        %v4097 = vpop.permute.xlu0 %4096
        %v4098 = vlaneseq
        %v4099 = vshrl.u32 %v4098, 7
        %v4100 = vsub.s32 4, %v4099
        %v4101 = vrot.slane %v3732, %v4100
        %4103 = vbcast.lane.b32.xlu0 %v4101, 256
        %v4104 = vpop.permute.xlu0 %4103
        %v4105 = vlaneseq
        %v4106 = vshrl.u32 %v4105, 7
        %v4107 = vsub.s32 5, %v4106
        %v4108 = vrot.slane %v3732, %v4107
        %4110 = vbcast.lane.b32.xlu0 %v4108, 256
        %v4111 = vpop.permute.xlu0 %4110
        %v4112 = vlaneseq
        %v4113 = vshrl.u32 %v4112, 7
        %v4114 = vsub.s32 6, %v4113
        %v4115 = vrot.slane %v3732, %v4114
        %4117 = vbcast.lane.b32.xlu0 %v4115, 256
        %v4118 = vpop.permute.xlu0 %4117
        %v4119 = vlaneseq
        %v4120 = vshrl.u32 %v4119, 7
        %v4121 = vsub.s32 7, %v4120
        %v4122 = vrot.slane %v3732, %v4121
        %4124 = vbcast.lane.b32.xlu0 %v4122, 256
        %v4125 = vpop.permute.xlu0 %4124
        %v4126 = vlaneseq
        %v4127 = vshrl.u32 %v4126, 7
        %v4128 = vsub.s32 0, %v4127
        %v4129 = vrot.slane %v3733, %v4128
        %4131 = vbcast.lane.b32.xlu0 %v4129, 256
        %v4132 = vpop.permute.xlu0 %4131
        %v4133 = vlaneseq
        %v4134 = vshrl.u32 %v4133, 7
        %v4135 = vsub.s32 1, %v4134
        %v4136 = vrot.slane %v3733, %v4135
        %4138 = vbcast.lane.b32.xlu0 %v4136, 256
        %v4139 = vpop.permute.xlu0 %4138
        %v4140 = vlaneseq
        %v4141 = vshrl.u32 %v4140, 7
        %v4142 = vsub.s32 2, %v4141
        %v4143 = vrot.slane %v3733, %v4142
        %4145 = vbcast.lane.b32.xlu0 %v4143, 256
        %v4146 = vpop.permute.xlu0 %4145
        %v4147 = vlaneseq
        %v4148 = vshrl.u32 %v4147, 7
        %v4149 = vsub.s32 3, %v4148
        %v4150 = vrot.slane %v3733, %v4149
        %4152 = vbcast.lane.b32.xlu0 %v4150, 256
        %v4153 = vpop.permute.xlu0 %4152
        %v4154 = vlaneseq
        %v4155 = vshrl.u32 %v4154, 7
        %v4156 = vsub.s32 4, %v4155
        %v4157 = vrot.slane %v3733, %v4156
        %4159 = vbcast.lane.b32.xlu0 %v4157, 256
        %v4160 = vpop.permute.xlu0 %4159
        %v4161 = vlaneseq
        %v4162 = vshrl.u32 %v4161, 7
        %v4163 = vsub.s32 5, %v4162
        %v4164 = vrot.slane %v3733, %v4163
        %4166 = vbcast.lane.b32.xlu0 %v4164, 256
        %v4167 = vpop.permute.xlu0 %4166
        %v4168 = vlaneseq
        %v4169 = vshrl.u32 %v4168, 7
        %v4170 = vsub.s32 6, %v4169
        %v4171 = vrot.slane %v3733, %v4170
        %4173 = vbcast.lane.b32.xlu0 %v4171, 256
        %v4174 = vpop.permute.xlu0 %4173
        %v4175 = vlaneseq
        %v4176 = vshrl.u32 %v4175, 7
        %v4177 = vsub.s32 7, %v4176
        %v4178 = vrot.slane %v3733, %v4177
        %4180 = vbcast.lane.b32.xlu0 %v4178, 256
        %v4181 = vpop.permute.xlu0 %4180
        %v4182 = vsel %vm631, %v3740, %v3964
        %v4183 = vsel %vm631, %v3747, %v3971
        %v4184 = vsel %vm631, %v3754, %v3978
        %v4185 = vsel %vm631, %v3761, %v3985
        %v4186 = vsel %vm631, %v3768, %v3992
        %v4187 = vsel %vm631, %v3775, %v3999
        %v4188 = vsel %vm631, %v3782, %v4006
        %v4189 = vsel %vm631, %v3789, %v4013
        %v4190 = vsel %vm631, %v3796, %v4020
        %v4191 = vsel %vm631, %v3803, %v4027
        %v4192 = vsel %vm631, %v3810, %v4034
        %v4193 = vsel %vm631, %v3817, %v4041
        %v4194 = vsel %vm631, %v3824, %v4048
        %v4195 = vsel %vm631, %v3831, %v4055
        %v4196 = vsel %vm631, %v3838, %v4062
        %v4197 = vsel %vm631, %v3845, %v4069
        %v4198 = vsel %vm631, %v3852, %v4076
        %v4199 = vsel %vm631, %v3859, %v4083
        %v4200 = vsel %vm631, %v3866, %v4090
        %v4201 = vsel %vm631, %v3873, %v4097
        %v4202 = vsel %vm631, %v3880, %v4104
        %v4203 = vsel %vm631, %v3887, %v4111
        %v4204 = vsel %vm631, %v3894, %v4118
        %v4205 = vsel %vm631, %v3901, %v4125
        %v4206 = vsel %vm631, %v3908, %v4132
        %v4207 = vsel %vm631, %v3915, %v4139
        %v4208 = vsel %vm631, %v3922, %v4146
        %v4209 = vsel %vm631, %v3929, %v4153
        %v4210 = vsel %vm631, %v3936, %v4160
        %v4211 = vsel %vm631, %v3943, %v4167
        %v4212 = vsel %vm631, %v3950, %v4174
        %v4213 = vsel %vm631, %v3957, %v4181
        %v4214 = vcombine.low %v4182, %v4184
        %v4215 = vcombine.high %v4182, %v4184
        %v4217 = vunpack.c.l.s4 1983009808
        %v4218 = vunpack.c.0.s8 %v4217
        %v4219 = vlaneseq
        %v4220 = vshrl.u32 %v4219, 7
        %v4221 = vsub.s32 %v4218, %v4220
        %v4222 = vrot.slane %v4214, %v4221
        %v4224 = vunpack.c.l.s4 1983009808
        %v4225 = vunpack.c.0.s8 %v4224
        %v4226 = vlaneseq
        %v4227 = vshrl.u32 %v4226, 7
        %v4228 = vsub.s32 %v4225, %v4227
        %v4229 = vrot.slane %v4215, %v4228
        %v4230 = vcombine.low %v4183, %v4185
        %v4231 = vcombine.high %v4183, %v4185
        %v4233 = vunpack.c.l.s4 1983009808
        %v4234 = vunpack.c.0.s8 %v4233
        %v4235 = vlaneseq
        %v4236 = vshrl.u32 %v4235, 7
        %v4237 = vsub.s32 %v4234, %v4236
        %v4238 = vrot.slane %v4230, %v4237
        %v4240 = vunpack.c.l.s4 1983009808
        %v4241 = vunpack.c.0.s8 %v4240
        %v4242 = vlaneseq
        %v4243 = vshrl.u32 %v4242, 7
        %v4244 = vsub.s32 %v4241, %v4243
        %v4245 = vrot.slane %v4231, %v4244
        %v4246 = vcombine.low %v4186, %v4188
        %v4247 = vcombine.high %v4186, %v4188
        %v4249 = vunpack.c.l.s4 1983009808
        %v4250 = vunpack.c.0.s8 %v4249
        %v4251 = vlaneseq
        %v4252 = vshrl.u32 %v4251, 7
        %v4253 = vsub.s32 %v4250, %v4252
        %v4254 = vrot.slane %v4246, %v4253
        %v4256 = vunpack.c.l.s4 1983009808
        %v4257 = vunpack.c.0.s8 %v4256
        %v4258 = vlaneseq
        %v4259 = vshrl.u32 %v4258, 7
        %v4260 = vsub.s32 %v4257, %v4259
        %v4261 = vrot.slane %v4247, %v4260
        %v4262 = vcombine.low %v4187, %v4189
        %v4263 = vcombine.high %v4187, %v4189
        %v4265 = vunpack.c.l.s4 1983009808
        %v4266 = vunpack.c.0.s8 %v4265
        %v4267 = vlaneseq
        %v4268 = vshrl.u32 %v4267, 7
        %v4269 = vsub.s32 %v4266, %v4268
        %v4270 = vrot.slane %v4262, %v4269
        %v4272 = vunpack.c.l.s4 1983009808
        %v4273 = vunpack.c.0.s8 %v4272
        %v4274 = vlaneseq
        %v4275 = vshrl.u32 %v4274, 7
        %v4276 = vsub.s32 %v4273, %v4275
        %v4277 = vrot.slane %v4263, %v4276
        %v4278 = vcombine.low %v4222, %v4238
        %v4279 = vcombine.high %v4222, %v4238
        %v4281 = vunpack.c.l.s4 1934713408
        %v4282 = vunpack.c.0.s8 %v4281
        %v4283 = vlaneseq
        %v4284 = vshrl.u32 %v4283, 7
        %v4285 = vsub.s32 %v4282, %v4284
        %v4286 = vrot.slane %v4278, %v4285
        %v4288 = vunpack.c.l.s4 1934713408
        %v4289 = vunpack.c.0.s8 %v4288
        %v4290 = vlaneseq
        %v4291 = vshrl.u32 %v4290, 7
        %v4292 = vsub.s32 %v4289, %v4291
        %v4293 = vrot.slane %v4279, %v4292
        %v4294 = vcombine.low %v4229, %v4245
        %v4295 = vcombine.high %v4229, %v4245
        %v4297 = vunpack.c.l.s4 1934713408
        %v4298 = vunpack.c.0.s8 %v4297
        %v4299 = vlaneseq
        %v4300 = vshrl.u32 %v4299, 7
        %v4301 = vsub.s32 %v4298, %v4300
        %v4302 = vrot.slane %v4294, %v4301
        %v4304 = vunpack.c.l.s4 1934713408
        %v4305 = vunpack.c.0.s8 %v4304
        %v4306 = vlaneseq
        %v4307 = vshrl.u32 %v4306, 7
        %v4308 = vsub.s32 %v4305, %v4307
        %v4309 = vrot.slane %v4295, %v4308
        %v4310 = vcombine.low %v4254, %v4270
        %v4311 = vcombine.high %v4254, %v4270
        %v4313 = vunpack.c.l.s4 1934713408
        %v4314 = vunpack.c.0.s8 %v4313
        %v4315 = vlaneseq
        %v4316 = vshrl.u32 %v4315, 7
        %v4317 = vsub.s32 %v4314, %v4316
        %v4318 = vrot.slane %v4310, %v4317
        %v4320 = vunpack.c.l.s4 1934713408
        %v4321 = vunpack.c.0.s8 %v4320
        %v4322 = vlaneseq
        %v4323 = vshrl.u32 %v4322, 7
        %v4324 = vsub.s32 %v4321, %v4323
        %v4325 = vrot.slane %v4311, %v4324
        %v4326 = vcombine.low %v4261, %v4277
        %v4327 = vcombine.high %v4261, %v4277
        %v4329 = vunpack.c.l.s4 1934713408
        %v4330 = vunpack.c.0.s8 %v4329
        %v4331 = vlaneseq
        %v4332 = vshrl.u32 %v4331, 7
        %v4333 = vsub.s32 %v4330, %v4332
        %v4334 = vrot.slane %v4326, %v4333
        %v4336 = vunpack.c.l.s4 1934713408
        %v4337 = vunpack.c.0.s8 %v4336
        %v4338 = vlaneseq
        %v4339 = vshrl.u32 %v4338, 7
        %v4340 = vsub.s32 %v4337, %v4339
        %v4341 = vrot.slane %v4327, %v4340
        %v4342 = vcombine.low %v4286, %v4318
        %v4343 = vcombine.high %v4286, %v4318
        %v4344 = vcombine.low %v4293, %v4325
        %v4345 = vcombine.high %v4293, %v4325
        %v4346 = vcombine.low %v4302, %v4334
        %v4347 = vcombine.high %v4302, %v4334
        %v4348 = vcombine.low %v4309, %v4341
        %v4349 = vcombine.high %v4309, %v4341
        %v4350 = vcombine.low %v4190, %v4192
        %v4351 = vcombine.high %v4190, %v4192
        %v4353 = vunpack.c.l.s4 1983009808
        %v4354 = vunpack.c.0.s8 %v4353
        %v4355 = vlaneseq
        %v4356 = vshrl.u32 %v4355, 7
        %v4357 = vsub.s32 %v4354, %v4356
        %v4358 = vrot.slane %v4350, %v4357
        %v4360 = vunpack.c.l.s4 1983009808
        %v4361 = vunpack.c.0.s8 %v4360
        %v4362 = vlaneseq
        %v4363 = vshrl.u32 %v4362, 7
        %v4364 = vsub.s32 %v4361, %v4363
        %v4365 = vrot.slane %v4351, %v4364
        %v4366 = vcombine.low %v4191, %v4193
        %v4367 = vcombine.high %v4191, %v4193
        %v4369 = vunpack.c.l.s4 1983009808
        %v4370 = vunpack.c.0.s8 %v4369
        %v4371 = vlaneseq
        %v4372 = vshrl.u32 %v4371, 7
        %v4373 = vsub.s32 %v4370, %v4372
        %v4374 = vrot.slane %v4366, %v4373
        %v4376 = vunpack.c.l.s4 1983009808
        %v4377 = vunpack.c.0.s8 %v4376
        %v4378 = vlaneseq
        %v4379 = vshrl.u32 %v4378, 7
        %v4380 = vsub.s32 %v4377, %v4379
        %v4381 = vrot.slane %v4367, %v4380
        %v4382 = vcombine.low %v4194, %v4196
        %v4383 = vcombine.high %v4194, %v4196
        %v4385 = vunpack.c.l.s4 1983009808
        %v4386 = vunpack.c.0.s8 %v4385
        %v4387 = vlaneseq
        %v4388 = vshrl.u32 %v4387, 7
        %v4389 = vsub.s32 %v4386, %v4388
        %v4390 = vrot.slane %v4382, %v4389
        %v4392 = vunpack.c.l.s4 1983009808
        %v4393 = vunpack.c.0.s8 %v4392
        %v4394 = vlaneseq
        %v4395 = vshrl.u32 %v4394, 7
        %v4396 = vsub.s32 %v4393, %v4395
        %v4397 = vrot.slane %v4383, %v4396
        %v4398 = vcombine.low %v4195, %v4197
        %v4399 = vcombine.high %v4195, %v4197
        %v4401 = vunpack.c.l.s4 1983009808
        %v4402 = vunpack.c.0.s8 %v4401
        %v4403 = vlaneseq
        %v4404 = vshrl.u32 %v4403, 7
        %v4405 = vsub.s32 %v4402, %v4404
        %v4406 = vrot.slane %v4398, %v4405
        %v4408 = vunpack.c.l.s4 1983009808
        %v4409 = vunpack.c.0.s8 %v4408
        %v4410 = vlaneseq
        %v4411 = vshrl.u32 %v4410, 7
        %v4412 = vsub.s32 %v4409, %v4411
        %v4413 = vrot.slane %v4399, %v4412
        %v4414 = vcombine.low %v4358, %v4374
        %v4415 = vcombine.high %v4358, %v4374
        %v4417 = vunpack.c.l.s4 1934713408
        %v4418 = vunpack.c.0.s8 %v4417
        %v4419 = vlaneseq
        %v4420 = vshrl.u32 %v4419, 7
        %v4421 = vsub.s32 %v4418, %v4420
        %v4422 = vrot.slane %v4414, %v4421
        %v4424 = vunpack.c.l.s4 1934713408
        %v4425 = vunpack.c.0.s8 %v4424
        %v4426 = vlaneseq
        %v4427 = vshrl.u32 %v4426, 7
        %v4428 = vsub.s32 %v4425, %v4427
        %v4429 = vrot.slane %v4415, %v4428
        %v4430 = vcombine.low %v4365, %v4381
        %v4431 = vcombine.high %v4365, %v4381
        %v4433 = vunpack.c.l.s4 1934713408
        %v4434 = vunpack.c.0.s8 %v4433
        %v4435 = vlaneseq
        %v4436 = vshrl.u32 %v4435, 7
        %v4437 = vsub.s32 %v4434, %v4436
        %v4438 = vrot.slane %v4430, %v4437
        %v4440 = vunpack.c.l.s4 1934713408
        %v4441 = vunpack.c.0.s8 %v4440
        %v4442 = vlaneseq
        %v4443 = vshrl.u32 %v4442, 7
        %v4444 = vsub.s32 %v4441, %v4443
        %v4445 = vrot.slane %v4431, %v4444
        %v4446 = vcombine.low %v4390, %v4406
        %v4447 = vcombine.high %v4390, %v4406
        %v4449 = vunpack.c.l.s4 1934713408
        %v4450 = vunpack.c.0.s8 %v4449
        %v4451 = vlaneseq
        %v4452 = vshrl.u32 %v4451, 7
        %v4453 = vsub.s32 %v4450, %v4452
        %v4454 = vrot.slane %v4446, %v4453
        %v4456 = vunpack.c.l.s4 1934713408
        %v4457 = vunpack.c.0.s8 %v4456
        %v4458 = vlaneseq
        %v4459 = vshrl.u32 %v4458, 7
        %v4460 = vsub.s32 %v4457, %v4459
        %v4461 = vrot.slane %v4447, %v4460
        %v4462 = vcombine.low %v4397, %v4413
        %v4463 = vcombine.high %v4397, %v4413
        %v4465 = vunpack.c.l.s4 1934713408
        %v4466 = vunpack.c.0.s8 %v4465
        %v4467 = vlaneseq
        %v4468 = vshrl.u32 %v4467, 7
        %v4469 = vsub.s32 %v4466, %v4468
        %v4470 = vrot.slane %v4462, %v4469
        %v4472 = vunpack.c.l.s4 1934713408
        %v4473 = vunpack.c.0.s8 %v4472
        %v4474 = vlaneseq
        %v4475 = vshrl.u32 %v4474, 7
        %v4476 = vsub.s32 %v4473, %v4475
        %v4477 = vrot.slane %v4463, %v4476
        %v4478 = vcombine.low %v4422, %v4454
        %v4479 = vcombine.high %v4422, %v4454
        %v4480 = vcombine.low %v4429, %v4461
        %v4481 = vcombine.high %v4429, %v4461
        %v4482 = vcombine.low %v4438, %v4470
        %v4483 = vcombine.high %v4438, %v4470
        %v4484 = vcombine.low %v4445, %v4477
        %v4485 = vcombine.high %v4445, %v4477
        %v4486 = vcombine.low %v4198, %v4200
        %v4487 = vcombine.high %v4198, %v4200
        %v4489 = vunpack.c.l.s4 1983009808
        %v4490 = vunpack.c.0.s8 %v4489
        %v4491 = vlaneseq
        %v4492 = vshrl.u32 %v4491, 7
        %v4493 = vsub.s32 %v4490, %v4492
        %v4494 = vrot.slane %v4486, %v4493
        %v4496 = vunpack.c.l.s4 1983009808
        %v4497 = vunpack.c.0.s8 %v4496
        %v4498 = vlaneseq
        %v4499 = vshrl.u32 %v4498, 7
        %v4500 = vsub.s32 %v4497, %v4499
        %v4501 = vrot.slane %v4487, %v4500
        %v4502 = vcombine.low %v4199, %v4201
        %v4503 = vcombine.high %v4199, %v4201
        %v4505 = vunpack.c.l.s4 1983009808
        %v4506 = vunpack.c.0.s8 %v4505
        %v4507 = vlaneseq
        %v4508 = vshrl.u32 %v4507, 7
        %v4509 = vsub.s32 %v4506, %v4508
        %v4510 = vrot.slane %v4502, %v4509
        %v4512 = vunpack.c.l.s4 1983009808
        %v4513 = vunpack.c.0.s8 %v4512
        %v4514 = vlaneseq
        %v4515 = vshrl.u32 %v4514, 7
        %v4516 = vsub.s32 %v4513, %v4515
        %v4517 = vrot.slane %v4503, %v4516
        %v4518 = vcombine.low %v4202, %v4204
        %v4519 = vcombine.high %v4202, %v4204
        %v4521 = vunpack.c.l.s4 1983009808
        %v4522 = vunpack.c.0.s8 %v4521
        %v4523 = vlaneseq
        %v4524 = vshrl.u32 %v4523, 7
        %v4525 = vsub.s32 %v4522, %v4524
        %v4526 = vrot.slane %v4518, %v4525
        %v4528 = vunpack.c.l.s4 1983009808
        %v4529 = vunpack.c.0.s8 %v4528
        %v4530 = vlaneseq
        %v4531 = vshrl.u32 %v4530, 7
        %v4532 = vsub.s32 %v4529, %v4531
        %v4533 = vrot.slane %v4519, %v4532
        %v4534 = vcombine.low %v4203, %v4205
        %v4535 = vcombine.high %v4203, %v4205
        %v4537 = vunpack.c.l.s4 1983009808
        %v4538 = vunpack.c.0.s8 %v4537
        %v4539 = vlaneseq
        %v4540 = vshrl.u32 %v4539, 7
        %v4541 = vsub.s32 %v4538, %v4540
        %v4542 = vrot.slane %v4534, %v4541
        %v4544 = vunpack.c.l.s4 1983009808
        %v4545 = vunpack.c.0.s8 %v4544
        %v4546 = vlaneseq
        %v4547 = vshrl.u32 %v4546, 7
        %v4548 = vsub.s32 %v4545, %v4547
        %v4549 = vrot.slane %v4535, %v4548
        %v4550 = vcombine.low %v4494, %v4510
        %v4551 = vcombine.high %v4494, %v4510
        %v4553 = vunpack.c.l.s4 1934713408
        %v4554 = vunpack.c.0.s8 %v4553
        %v4555 = vlaneseq
        %v4556 = vshrl.u32 %v4555, 7
        %v4557 = vsub.s32 %v4554, %v4556
        %v4558 = vrot.slane %v4550, %v4557
        %v4560 = vunpack.c.l.s4 1934713408
        %v4561 = vunpack.c.0.s8 %v4560
        %v4562 = vlaneseq
        %v4563 = vshrl.u32 %v4562, 7
        %v4564 = vsub.s32 %v4561, %v4563
        %v4565 = vrot.slane %v4551, %v4564
        %v4566 = vcombine.low %v4501, %v4517
        %v4567 = vcombine.high %v4501, %v4517
        %v4569 = vunpack.c.l.s4 1934713408
        %v4570 = vunpack.c.0.s8 %v4569
        %v4571 = vlaneseq
        %v4572 = vshrl.u32 %v4571, 7
        %v4573 = vsub.s32 %v4570, %v4572
        %v4574 = vrot.slane %v4566, %v4573
        %v4576 = vunpack.c.l.s4 1934713408
        %v4577 = vunpack.c.0.s8 %v4576
        %v4578 = vlaneseq
        %v4579 = vshrl.u32 %v4578, 7
        %v4580 = vsub.s32 %v4577, %v4579
        %v4581 = vrot.slane %v4567, %v4580
        %v4582 = vcombine.low %v4526, %v4542
        %v4583 = vcombine.high %v4526, %v4542
        %v4585 = vunpack.c.l.s4 1934713408
        %v4586 = vunpack.c.0.s8 %v4585
        %v4587 = vlaneseq
        %v4588 = vshrl.u32 %v4587, 7
        %v4589 = vsub.s32 %v4586, %v4588
        %v4590 = vrot.slane %v4582, %v4589
        %v4592 = vunpack.c.l.s4 1934713408
        %v4593 = vunpack.c.0.s8 %v4592
        %v4594 = vlaneseq
        %v4595 = vshrl.u32 %v4594, 7
        %v4596 = vsub.s32 %v4593, %v4595
        %v4597 = vrot.slane %v4583, %v4596
        %v4598 = vcombine.low %v4533, %v4549
        %v4599 = vcombine.high %v4533, %v4549
        %v4601 = vunpack.c.l.s4 1934713408
        %v4602 = vunpack.c.0.s8 %v4601
        %v4603 = vlaneseq
        %v4604 = vshrl.u32 %v4603, 7
        %v4605 = vsub.s32 %v4602, %v4604
        %v4606 = vrot.slane %v4598, %v4605
        %v4608 = vunpack.c.l.s4 1934713408
        %v4609 = vunpack.c.0.s8 %v4608
        %v4610 = vlaneseq
        %v4611 = vshrl.u32 %v4610, 7
        %v4612 = vsub.s32 %v4609, %v4611
        %v4613 = vrot.slane %v4599, %v4612
        %v4614 = vcombine.low %v4558, %v4590
        %v4615 = vcombine.high %v4558, %v4590
        %v4616 = vcombine.low %v4565, %v4597
        %v4617 = vcombine.high %v4565, %v4597
        %v4618 = vcombine.low %v4574, %v4606
        %v4619 = vcombine.high %v4574, %v4606
        %v4620 = vcombine.low %v4581, %v4613
        %v4621 = vcombine.high %v4581, %v4613
        %v4622 = vcombine.low %v4206, %v4208
        %v4623 = vcombine.high %v4206, %v4208
        %v4625 = vunpack.c.l.s4 1983009808
        %v4626 = vunpack.c.0.s8 %v4625
        %v4627 = vlaneseq
        %v4628 = vshrl.u32 %v4627, 7
        %v4629 = vsub.s32 %v4626, %v4628
        %v4630 = vrot.slane %v4622, %v4629
        %v4632 = vunpack.c.l.s4 1983009808
        %v4633 = vunpack.c.0.s8 %v4632
        %v4634 = vlaneseq
        %v4635 = vshrl.u32 %v4634, 7
        %v4636 = vsub.s32 %v4633, %v4635
        %v4637 = vrot.slane %v4623, %v4636
        %v4638 = vcombine.low %v4207, %v4209
        %v4639 = vcombine.high %v4207, %v4209
        %v4641 = vunpack.c.l.s4 1983009808
        %v4642 = vunpack.c.0.s8 %v4641
        %v4643 = vlaneseq
        %v4644 = vshrl.u32 %v4643, 7
        %v4645 = vsub.s32 %v4642, %v4644
        %v4646 = vrot.slane %v4638, %v4645
        %v4648 = vunpack.c.l.s4 1983009808
        %v4649 = vunpack.c.0.s8 %v4648
        %v4650 = vlaneseq
        %v4651 = vshrl.u32 %v4650, 7
        %v4652 = vsub.s32 %v4649, %v4651
        %v4653 = vrot.slane %v4639, %v4652
        %v4654 = vcombine.low %v4210, %v4212
        %v4655 = vcombine.high %v4210, %v4212
        %v4657 = vunpack.c.l.s4 1983009808
        %v4658 = vunpack.c.0.s8 %v4657
        %v4659 = vlaneseq
        %v4660 = vshrl.u32 %v4659, 7
        %v4661 = vsub.s32 %v4658, %v4660
        %v4662 = vrot.slane %v4654, %v4661
        %v4664 = vunpack.c.l.s4 1983009808
        %v4665 = vunpack.c.0.s8 %v4664
        %v4666 = vlaneseq
        %v4667 = vshrl.u32 %v4666, 7
        %v4668 = vsub.s32 %v4665, %v4667
        %v4669 = vrot.slane %v4655, %v4668
        %v4670 = vcombine.low %v4211, %v4213
        %v4671 = vcombine.high %v4211, %v4213
        %v4673 = vunpack.c.l.s4 1983009808
        %v4674 = vunpack.c.0.s8 %v4673
        %v4675 = vlaneseq
        %v4676 = vshrl.u32 %v4675, 7
        %v4677 = vsub.s32 %v4674, %v4676
        %v4678 = vrot.slane %v4670, %v4677
        %v4680 = vunpack.c.l.s4 1983009808
        %v4681 = vunpack.c.0.s8 %v4680
        %v4682 = vlaneseq
        %v4683 = vshrl.u32 %v4682, 7
        %v4684 = vsub.s32 %v4681, %v4683
        %v4685 = vrot.slane %v4671, %v4684
        %v4686 = vcombine.low %v4630, %v4646
        %v4687 = vcombine.high %v4630, %v4646
        %v4689 = vunpack.c.l.s4 1934713408
        %v4690 = vunpack.c.0.s8 %v4689
        %v4691 = vlaneseq
        %v4692 = vshrl.u32 %v4691, 7
        %v4693 = vsub.s32 %v4690, %v4692
        %v4694 = vrot.slane %v4686, %v4693
        %v4696 = vunpack.c.l.s4 1934713408
        %v4697 = vunpack.c.0.s8 %v4696
        %v4698 = vlaneseq
        %v4699 = vshrl.u32 %v4698, 7
        %v4700 = vsub.s32 %v4697, %v4699
        %v4701 = vrot.slane %v4687, %v4700
        %v4702 = vcombine.low %v4637, %v4653
        %v4703 = vcombine.high %v4637, %v4653
        %v4705 = vunpack.c.l.s4 1934713408
        %v4706 = vunpack.c.0.s8 %v4705
        %v4707 = vlaneseq
        %v4708 = vshrl.u32 %v4707, 7
        %v4709 = vsub.s32 %v4706, %v4708
        %v4710 = vrot.slane %v4702, %v4709
        %v4712 = vunpack.c.l.s4 1934713408
        %v4713 = vunpack.c.0.s8 %v4712
        %v4714 = vlaneseq
        %v4715 = vshrl.u32 %v4714, 7
        %v4716 = vsub.s32 %v4713, %v4715
        %v4717 = vrot.slane %v4703, %v4716
        %v4718 = vcombine.low %v4662, %v4678
        %v4719 = vcombine.high %v4662, %v4678
        %v4721 = vunpack.c.l.s4 1934713408
        %v4722 = vunpack.c.0.s8 %v4721
        %v4723 = vlaneseq
        %v4724 = vshrl.u32 %v4723, 7
        %v4725 = vsub.s32 %v4722, %v4724
        %v4726 = vrot.slane %v4718, %v4725
        %v4728 = vunpack.c.l.s4 1934713408
        %v4729 = vunpack.c.0.s8 %v4728
        %v4730 = vlaneseq
        %v4731 = vshrl.u32 %v4730, 7
        %v4732 = vsub.s32 %v4729, %v4731
        %v4733 = vrot.slane %v4719, %v4732
        %v4734 = vcombine.low %v4669, %v4685
        %v4735 = vcombine.high %v4669, %v4685
        %v4737 = vunpack.c.l.s4 1934713408
        %v4738 = vunpack.c.0.s8 %v4737
        %v4739 = vlaneseq
        %v4740 = vshrl.u32 %v4739, 7
        %v4741 = vsub.s32 %v4738, %v4740
        %v4742 = vrot.slane %v4734, %v4741
        %v4744 = vunpack.c.l.s4 1934713408
        %v4745 = vunpack.c.0.s8 %v4744
        %v4746 = vlaneseq
        %v4747 = vshrl.u32 %v4746, 7
        %v4748 = vsub.s32 %v4745, %v4747
        %v4749 = vrot.slane %v4735, %v4748
        %v4750 = vcombine.low %v4694, %v4726
        %v4751 = vcombine.high %v4694, %v4726
        %v4752 = vcombine.low %v4701, %v4733
        %v4753 = vcombine.high %v4701, %v4733
        %v4754 = vcombine.low %v4710, %v4742
        %v4755 = vcombine.high %v4710, %v4742
        %v4756 = vcombine.low %v4717, %v4749
        %v4757 = vcombine.high %v4717, %v4749
        %4762 = vrot.lane.b32.xlu0 %v4343, 2
        %v4763 = vpop.permute.xlu0 %4762
        %4764 = vrot.lane.b32.xlu0 %v4479, 2
        %v4765 = vpop.permute.xlu0 %4764
        %4766 = vrot.lane.b32.xlu0 %v4615, 2
        %v4767 = vpop.permute.xlu0 %4766
        %4768 = vrot.lane.b32.xlu0 %v4751, 2
        %v4769 = vpop.permute.xlu0 %4768
        %4778 = vrot.lane.b32.xlu0 %v4344, 4
        %v4779 = vpop.permute.xlu0 %4778
        %4780 = vrot.lane.b32.xlu0 %v4480, 4
        %v4781 = vpop.permute.xlu0 %4780
        %4782 = vrot.lane.b32.xlu0 %v4616, 4
        %v4783 = vpop.permute.xlu0 %4782
        %4784 = vrot.lane.b32.xlu0 %v4752, 4
        %v4785 = vpop.permute.xlu0 %4784
        %4794 = vrot.lane.b32.xlu0 %v4345, 6
        %v4795 = vpop.permute.xlu0 %4794
        %4796 = vrot.lane.b32.xlu0 %v4481, 6
        %v4797 = vpop.permute.xlu0 %4796
        %4798 = vrot.lane.b32.xlu0 %v4617, 6
        %v4799 = vpop.permute.xlu0 %4798
        %4800 = vrot.lane.b32.xlu0 %v4753, 6
        %v4801 = vpop.permute.xlu0 %4800
        %4810 = vrot.lane.b32.xlu0 %v4346, 8
        %v4811 = vpop.permute.xlu0 %4810
        %4812 = vrot.lane.b32.xlu0 %v4482, 8
        %v4813 = vpop.permute.xlu0 %4812
        %4814 = vrot.lane.b32.xlu0 %v4618, 8
        %v4815 = vpop.permute.xlu0 %4814
        %4816 = vrot.lane.b32.xlu0 %v4754, 8
        %v4817 = vpop.permute.xlu0 %4816
        %4826 = vrot.lane.b32.xlu0 %v4347, 10
        %v4827 = vpop.permute.xlu0 %4826
        %4828 = vrot.lane.b32.xlu0 %v4483, 10
        %v4829 = vpop.permute.xlu0 %4828
        %4830 = vrot.lane.b32.xlu0 %v4619, 10
        %v4831 = vpop.permute.xlu0 %4830
        %4832 = vrot.lane.b32.xlu0 %v4755, 10
        %v4833 = vpop.permute.xlu0 %4832
        %4842 = vrot.lane.b32.xlu0 %v4348, 12
        %v4843 = vpop.permute.xlu0 %4842
        %4844 = vrot.lane.b32.xlu0 %v4484, 12
        %v4845 = vpop.permute.xlu0 %4844
        %4846 = vrot.lane.b32.xlu0 %v4620, 12
        %v4847 = vpop.permute.xlu0 %4846
        %4848 = vrot.lane.b32.xlu0 %v4756, 12
        %v4849 = vpop.permute.xlu0 %4848
        %4858 = vrot.lane.b32.xlu0 %v4349, 14
        %v4859 = vpop.permute.xlu0 %4858
        %4860 = vrot.lane.b32.xlu0 %v4485, 14
        %v4861 = vpop.permute.xlu0 %4860
        %4862 = vrot.lane.b32.xlu0 %v4621, 14
        %v4863 = vpop.permute.xlu0 %4862
        %4864 = vrot.lane.b32.xlu0 %v4757, 14
        %v4865 = vpop.permute.xlu0 %4864
        %v4870 = vsel %vm1320, %v4342, %v4763
        %v4871 = vsel %vm1320, %v4478, %v4765
        %v4872 = vsel %vm1320, %v4614, %v4767
        %v4873 = vsel %vm1320, %v4750, %v4769
        %v4874 = vsel %vm1325, %v4870, %v4779
        %v4875 = vsel %vm1325, %v4871, %v4781
        %v4876 = vsel %vm1325, %v4872, %v4783
        %v4877 = vsel %vm1325, %v4873, %v4785
        %v4878 = vsel %vm1330, %v4874, %v4795
        %v4879 = vsel %vm1330, %v4875, %v4797
        %v4880 = vsel %vm1330, %v4876, %v4799
        %v4881 = vsel %vm1330, %v4877, %v4801
        %v4882 = vsel %vm1335, %v4878, %v4811
        %v4883 = vsel %vm1335, %v4879, %v4813
        %v4884 = vsel %vm1335, %v4880, %v4815
        %v4885 = vsel %vm1335, %v4881, %v4817
        %v4886 = vsel %vm1340, %v4882, %v4827
        %v4887 = vsel %vm1340, %v4883, %v4829
        %v4888 = vsel %vm1340, %v4884, %v4831
        %v4889 = vsel %vm1340, %v4885, %v4833
        %v4890 = vsel %vm1345, %v4886, %v4843
        %v4891 = vsel %vm1345, %v4887, %v4845
        %v4892 = vsel %vm1345, %v4888, %v4847
        %v4893 = vsel %vm1345, %v4889, %v4849
        %v4894 = vsel %vm1350, %v4890, %v4859
        %v4895 = vsel %vm1350, %v4891, %v4861
        %v4896 = vsel %vm1350, %v4892, %v4863
        %v4897 = vsel %vm1350, %v4893, %v4865
        %4902 = vrot.lane.b32.xlu0 %v4894, 16
        %v4903 = vpop.permute.xlu0 %4902
        %4904 = vrot.lane.b32.xlu0 %v4895, 16
        %v4905 = vpop.permute.xlu0 %4904
        %4906 = vrot.lane.b32.xlu0 %v4896, 16
        %v4907 = vpop.permute.xlu0 %4906
        %4908 = vrot.lane.b32.xlu0 %v4897, 16
        %v4909 = vpop.permute.xlu0 %4908
        %v4914 = vsel %vm2545, %v3720, %v4903
        %v4915 = vsel %vm2545, %v3721, %v4905
        %v4916 = vsel %vm2545, %v3722, %v4907
        %v4917 = vsel %vm2545, %v3723, %v4909
        %vm4918 = vcmask 261120
        %4919 = vst.msk [vmem:[%s156] sm:$0xff] %vm4918, %v2546
        %4920 = vst.msk [vmem:[%s156 + $0x8] sm:$0xff] %vm4918, %v4914
        %4921 = vst.msk [vmem:[%s156 + $0x10] sm:$0xff] %vm4918, %v2547
        %4922 = vst.msk [vmem:[%s156 + $0x18] sm:$0xff] %vm4918, %v4915
        %4923 = vst.msk [vmem:[%s156 + $0x20] sm:$0xff] %vm4918, %v2548
        %4924 = vst.msk [vmem:[%s156 + $0x28] sm:$0xff] %vm4918, %v4916
        %4925 = vst.msk [vmem:[%s156 + $0x30] sm:$0xff] %vm4918, %v2549
        %4926 = vst.msk [vmem:[%s156 + $0x38] sm:$0xff] %vm4918, %v4917
        %s4927 = sand.u32 %s76, 1
        %s4928 = scalar_lea.sflag [#allocation3], %s4927
        %s4929 = sand.u32 %s76, 1
        %s4930 = smul.addr %s4929, 64
        %s4931 = scalar_lea.vmem [#allocation2], %s4930
        // Predicated region
        $region25: #{tpu_custom_call.1} parent=23 // pred_check
          %p4932 = pneg %p86
        $region26: #{tpu_custom_call.1} parent=23 // pred_check_branch
          %4934 = sbr.rel (%p4932) target = $region28
        $region27: #{tpu_custom_call.1} parent=23 // pred_region
          %s4935 = smul.u32 8, %s22
          %s4937 = ssub.s32 1024, 1024
          %4938 = vsyncadd %s4928, %s4937
          %s4939 = smul.addr %s21, 8
          %s4940 = sadd.s32 %s4935, %s4939
          %s4941 = smul.addr %s20, 32
          %s4942 = sadd.s32 %s4940, %s4941
          %s4943 = smul.addr %s4942, 128
          %s4944 = scalar_lea.hbm %s1, %s4943
          %s4945 = sshll.u32 %s4931, 4
          %s4946 = int_to_ptr.vmem [resolvable:$true] %s4945
          %4951 = dma.vmem_to_hbm [thread:$0]  %s4946, 1024, %s4944, %s4928, 128, 128, 8
        $region28: #{tpu_custom_call.1} parent=23 // pred_fallthru
          _
      $region24: #{tpu_custom_call.1} parent=5 // pred_fallthru
        _
      %p4952 = scmp.le.s32.totalorder 2, %s10
      // Predicated region
      $region29: #{tpu_custom_call.1} parent=5 // pred_check
        %p4953 = pneg %p4952
      $region30: #{tpu_custom_call.1} parent=5 // pred_check_branch
        %4955 = sbr.rel (%p4953) target = $region32
      $region31: #{tpu_custom_call.1} parent=5 // pred_region
        %s4956 = ssub.s32 %s10, 2
        // Predicated region
        $region33: #{tpu_custom_call.1} parent=31 // pred_check
          %p4957 = pneg %p92
        $region34: #{tpu_custom_call.1} parent=31 // pred_check_branch
          %4959 = sbr.rel (%p4957) target = $region36
        $region35: #{tpu_custom_call.1} parent=31 // pred_region
          %s4960 = sand.u32 %s77, 1
          %s4961 = scalar_lea.sflag [#allocation3], %s4960
          %s4962 = sand.u32 %s77, 1
          %s4963 = smul.addr %s4962, 64
          %s4964 = scalar_lea.vmem [#allocation2], %s4963
          %4965 = dma.done %s4961, 1024
        $region36: #{tpu_custom_call.1} parent=31 // pred_fallthru
          _
      $region32: #{tpu_custom_call.1} parent=5 // pred_fallthru
        _
    $region6: #{tpu_custom_call.1} parent=1 // loop_footer
      %s14 = sadd.s32 1, %s10
    $region7: #{tpu_custom_call.1} parent=1 // loop_footer_branch
      %9 = sbr.rel target = $region3
    $region8: #{tpu_custom_call.1} parent=1 // loop_exit
      _
    %4966 = vsyncpa [#allocation3], 1
    %s4967 = scalar_lea.sflag [#allocation3], 1
    %4968 = vsyncpa %s4967, 1

</llo_original>
